<compile_context>
chip_gen: v7x
topology: tpu7x:2x2x1
jax: 0.10.0
libtpu: 0.0.40
codegen_flags: <defaults>
</compile_context>

<pallas_src>
import functools

import jax
import jax.numpy as jnp
from jax.experimental import pallas as pl
from jax.experimental.pallas import tpu as pltpu

LN_EPS = 1e-5                 # PyTorch nn.LayerNorm default eps
DEFAULT_ROW_TILE = 512        # rows per grid step (multiple of 16)
MAX_COL_TILE = 512            # output-column tile cap for fused_linear


def _round_up(x, m):
    return ((x + m - 1) // m) * m


def _default_vmem_limit():
    try:
        return int(pltpu.get_tpu_info().vmem_capacity_bytes * 3 // 4)
    except Exception:
        return 64 * 1024 * 1024


_VMEM_LIMIT = _default_vmem_limit()

# Whether pl.Buffered(1) single-buffering of constant operands is accepted by
# the installed jax/Mosaic.  Probed once, eagerly, before any jitted trace.
_SINGLE_BUFFER_OK = [None]


def _probe_single_buffer():
    if _SINGLE_BUFFER_OK[0] is None:
        try:
            def k(c_ref, x_ref, o_ref):
                o_ref[...] = x_ref[...] + c_ref[...]

            z = jnp.zeros((8, 128), jnp.float32)
            out = pl.pallas_call(
                k,
                out_shape=jax.ShapeDtypeStruct((8, 128), jnp.float32),
                grid_spec=pltpu.PrefetchScalarGridSpec(
                    num_scalar_prefetch=0,
                    grid=(1,),
                    in_specs=[pl.BlockSpec((8, 128), lambda i: (0, 0),
                                           pipeline_mode=pl.Buffered(1)),
                              pl.BlockSpec((8, 128), lambda i: (i, 0))],
                    out_specs=pl.BlockSpec((8, 128), lambda i: (i, 0)),
                ),
            )(z, z)
            jax.block_until_ready(out)
            _SINGLE_BUFFER_OK[0] = True
        except Exception:
            _SINGLE_BUFFER_OK[0] = False
    return _SINGLE_BUFFER_OK[0]


def _pick_col_tile(d_out, max_tn=MAX_COL_TILE):
    """Largest lane-dense output-column tile (multiple of 128) dividing d_out."""
    if d_out <= max_tn:
        return d_out
    for tn in range(max_tn, 127, -128):
        if d_out % tn == 0:
            return tn
    return d_out


# ----------------------------------------------------------------------------
# Kernel 1: fused LayerNorm (optional) + Linear (+GELU) (+residual)
# ----------------------------------------------------------------------------
@functools.lru_cache(maxsize=None)
def _make_linear_kernel(do_ln, do_gelu, has_bias, has_residual):
    """[LN](x) @ W^T (+bias) (+GELU) (+residual) on one (rt, tn) output tile."""

    def kernel(*refs):
        it = iter(refs)
        x_ref = next(it)
        ln_ref = next(it) if do_ln else None
        w_ref = next(it)
        b_ref = next(it) if has_bias else None
        r_ref = next(it) if has_residual else None
        o_ref = next(it)

        if do_ln:
            x = x_ref[...].astype(jnp.float32)                   # (rt, Din)
            mean = jnp.mean(x, axis=-1, keepdims=True)
            cen = x - mean
            var = jnp.mean(cen * cen, axis=-1, keepdims=True)
            x = cen * jax.lax.rsqrt(var + LN_EPS)
            ln = ln_ref[...]
            x = x * ln[0:1, :] + ln[1:2, :]                      # gamma, beta
            xin = x.astype(jnp.bfloat16)
        else:
            xin = x_ref[...].astype(jnp.bfloat16)                # no-op if bf16

        # bf16 MXU operands, f32 accumulation; epilogue in f32.
        y = jnp.dot(xin, w_ref[...], preferred_element_type=jnp.float32)
        if has_bias:
            y = y + b_ref[...]
        if do_gelu:
            # tanh-approx GELU (PyTorch nn.GELU default is exact erf; the
            # difference is < 1e-3 and the reference uses the same form).
            y = jax.nn.gelu(y, approximate=True)
        if has_residual:
            y = y + r_ref[...].astype(jnp.float32)
        o_ref[...] = y.astype(o_ref.dtype)

    return kernel


def fused_linear(x2d, w_t, *, ln=None, bias=None, gelu=False, residual=None,
                 out_dtype=jnp.float32, row_tile=DEFAULT_ROW_TILE,
                 single_buffer=True):
    """out = [LN](x2d) @ w_t (+bias) (+GELU) (+residual).

    x2d: (rows, Din) f32 or bf16.    w_t: (Din, Dout) bf16 (pre-transposed).
    ln:  (2, Din) f32 stacked [gamma; beta].    bias: (1, Dout) f32.
    residual: (rows, Dout) f32.
    """
    rows, d_in = x2d.shape
    d_out = w_t.shape[1]

    # Row tiling (16-sublane aligned, safe for bf16 inputs). Padding here is a
    # fallback only -- the caller pads the token count once before the loop.
    rt = min(row_tile, _round_up(rows, 16))
    rows_p = _round_up(rows, rt)
    pad = rows_p - rows
    if pad:
        x2d = jnp.pad(x2d, ((0, pad), (0, 0)))
        if residual is not None:
            residual = jnp.pad(residual, ((0, pad), (0, 0)))

    # Output-column tiling so the weight block stays small on v7x VMEM.
    tn = _pick_col_tile(d_out)
    n_tiles = d_out // tn
    grid = (rows_p // rt, n_tiles)

    kernel = _make_linear_kernel(ln is not None, gelu, bias is not None,
                                 residual is not None)

    def const_spec(shape, index_map, is_constant):
        if single_buffer and is_constant:
            # Constant index_map -> fetched once; keep a single VMEM buffer.
            return pl.BlockSpec(shape, index_map, pipeline_mode=pl.Buffered(1))
        return pl.BlockSpec(shape, index_map)

    in_specs = [pl.BlockSpec((rt, d_in), lambda i, j: (i, 0))]
    args = [x2d]
    if ln is not None:
        in_specs.append(const_spec((2, d_in), lambda i, j: (0, 0), True))
        args.append(ln)
    in_specs.append(const_spec((d_in, tn), lambda i, j: (0, j), n_tiles == 1))
    args.append(w_t)
    if bias is not None:
        in_specs.append(const_spec((1, tn), lambda i, j: (0, j), n_tiles == 1))
        args.append(bias)
    if residual is not None:
        in_specs.append(pl.BlockSpec((rt, tn), lambda i, j: (i, j)))
        args.append(residual)

    out = pl.pallas_call(
        kernel,
        out_shape=jax.ShapeDtypeStruct((rows_p, d_out), out_dtype),
        grid_spec=pltpu.PrefetchScalarGridSpec(
            num_scalar_prefetch=0,
            grid=grid,
            in_specs=in_specs,
            out_specs=pl.BlockSpec((rt, tn), lambda i, j: (i, j)),
        ),
        compiler_params=pltpu.CompilerParams(
            dimension_semantics=("parallel", "parallel"),
            vmem_limit_bytes=_VMEM_LIMIT,
        ),
    )(*args)

    return out[:rows] if pad else out


# ----------------------------------------------------------------------------
# Kernel 2: multi-head softmax attention core, one batch per grid step.
#   Consumes the (n_p, 3*D) QKV slab directly (no transposes) and writes a
#   lane-dense (n_p, D) output in 'b n (h d)' layout.
# ----------------------------------------------------------------------------
@functools.lru_cache(maxsize=None)
def _make_attention_kernel(heads, hd, n_p, n_valid, scale):
    D = heads * hd
    need_mask = n_valid < n_p

    def kernel(qkv_ref, o_ref):
        qkv = qkv_ref[0]                                       # (n_p, 3D) bf16
        if need_mask:
            key_pad = (jax.lax.broadcasted_iota(jnp.int32, (n_p, n_p), 1)
                       >= n_valid)
        outs = []
        for h in range(heads):                                 # unrolled
            q = qkv[:, h * hd:(h + 1) * hd].astype(jnp.float32)
            k = qkv[:, D + h * hd:D + (h + 1) * hd]
            v = qkv[:, 2 * D + h * hd:2 * D + (h + 1) * hd]
            # Fold the softmax scale into q (n*hd muls instead of n*n).
            q = (q * scale).astype(jnp.bfloat16)
            s = jax.lax.dot_general(q, k, (((1,), (1,)), ((), ())),
                                    preferred_element_type=jnp.float32)
            if need_mask:
                s = jnp.where(key_pad, -1e30, s)               # mask padded keys
            m = jnp.max(s, axis=-1, keepdims=True)
            p = jnp.exp(s - m)
            l = jnp.sum(p, axis=-1, keepdims=True)
            out = jnp.dot(p.astype(jnp.bfloat16), v,
                          preferred_element_type=jnp.float32)
            outs.append(out * pl.reciprocal(l, approx=True))
        # One lane-dense (n_p, D) store in 'b n (h d)' layout.
        o_ref[0] = jnp.concatenate(outs, axis=-1).astype(o_ref.dtype)

    return kernel


def attention_core(qkv, *, heads, scale, n_valid, out_dtype=jnp.bfloat16):
    """softmax((q k^T) * scale) v for all heads. qkv: (bsz, n_p, 3*D)."""
    bsz, n_p, d3 = qkv.shape
    D = d3 // 3
    hd = D // heads
    kernel = _make_attention_kernel(heads, hd, n_p, int(n_valid), float(scale))
    return pl.pallas_call(
        kernel,
        out_shape=jax.ShapeDtypeStruct((bsz, n_p, D), out_dtype),
        grid_spec=pltpu.PrefetchScalarGridSpec(
            num_scalar_prefetch=0,
            grid=(bsz,),
            in_specs=[pl.BlockSpec((1, n_p, 3 * D), lambda b: (b, 0, 0))],
            out_specs=pl.BlockSpec((1, n_p, D), lambda b: (b, 0, 0)),
        ),
        compiler_params=pltpu.CompilerParams(
            dimension_semantics=("parallel",),
            vmem_limit_bytes=_VMEM_LIMIT,
        ),
    )(qkv)


# ----------------------------------------------------------------------------
# Parameters + full forward
# ----------------------------------------------------------------------------
def init_transformer_params(key, *, dim, depth, heads, mlp_dim):
    assert dim % heads == 0
    key, kc = jax.random.split(key)
    params = {"cls_token": jax.random.normal(kc, (1, 1, dim), jnp.float32),
              "layers": []}

    def linear(k, fan_in, fan_out, with_bias=True):
        kw, kb = jax.random.split(k)
        lim = 1.0 / float(fan_in) ** 0.5
        w = jax.random.uniform(kw, (fan_out, fan_in), jnp.float32, -lim, lim)
        b = (jax.random.uniform(kb, (fan_out,), jnp.float32, -lim, lim)
             if with_bias else None)
        return w, b

    ln_init = jnp.stack([jnp.ones((dim,), jnp.float32),
                         jnp.zeros((dim,), jnp.float32)])        # [gamma; beta]

    for _ in range(depth):
        key, k1, k2, k3, k4 = jax.random.split(key, 5)
        wqkv, _ = linear(k1, dim, 3 * dim, with_bias=False)
        wo, bo = linear(k2, dim, dim)
        w1, b1 = linear(k3, dim, mlp_dim)
        w2, b2 = linear(k4, mlp_dim, dim)
        params["layers"].append({
            # f32 torch-layout weights (used by the pure-JAX reference)
            "wqkv": wqkv, "wo": wo, "bo": bo.reshape(1, -1),
            "w1": w1, "b1": b1.reshape(1, -1),
            "w2": w2, "b2": b2.reshape(1, -1),
            "ln1": ln_init, "ln2": ln_init,
            # pre-transposed bf16 weights for the MXU kernels
            "wqkv_t": wqkv.T.astype(jnp.bfloat16),
            "wo_t": wo.T.astype(jnp.bfloat16),
            "w1_t": w1.T.astype(jnp.bfloat16),
            "w2_t": w2.T.astype(jnp.bfloat16),
        })
    return params


@functools.partial(jax.jit, static_argnames=("heads", "group", "single_buffer"))
def _forward_jit(x, params, *, heads, group, single_buffer):
    bs_gp, dim, wid, hei = x.shape
    if bs_gp // group == 0:
        bs, gp = 1, bs_gp
    else:
        bs, gp = bs_gp // group, group
    assert dim % heads == 0

    t = x.reshape(bs, gp, dim, wid, hei)
    t = jnp.transpose(t, (0, 1, 3, 4, 2)).reshape(bs, gp * wid * hei, dim)
    cls = jnp.broadcast_to(params["cls_token"], (bs, 1, dim))
    t = jnp.concatenate([cls, t], axis=1)                        # (bs, n, dim)

    bsz, n, D = t.shape
    scale = float(D) ** -0.5   # NB: the module scales by full dim, not head dim

    # Pad the token count once (16-sublane aligned); padded key columns are
    # masked inside the attention kernel and padded rows sliced off at the end.
    n_p = _round_up(n, 16)
    if n_p != n:
        t = jnp.pad(t, ((0, 0), (0, n_p - n), (0, 0)))

    for lp in params["layers"]:
        rows = t.reshape(bsz * n_p, D)                           # f32 residual
        # ---- Residual(PreNorm(Attention)) ----
        qkv = fused_linear(rows, lp["wqkv_t"], ln=lp["ln1"],
                           out_dtype=jnp.bfloat16,
                           single_buffer=single_buffer)          # (rows, 3D) bf16
        att = attention_core(qkv.reshape(bsz, n_p, 3 * D), heads=heads,
                             scale=scale, n_valid=n)             # (bsz, n_p, D) bf16
        t = fused_linear(att.reshape(bsz * n_p, D), lp["wo_t"], bias=lp["bo"],
                         residual=rows, out_dtype=jnp.float32,
                         single_buffer=single_buffer).reshape(bsz, n_p, D)
        # ---- Residual(PreNorm(FeedForward)) ----
        rows = t.reshape(bsz * n_p, D)
        h = fused_linear(rows, lp["w1_t"], ln=lp["ln2"], bias=lp["b1"],
                         gelu=True, out_dtype=jnp.bfloat16,
                         single_buffer=single_buffer)            # (rows, mlp) bf16
        t = fused_linear(h, lp["w2_t"], bias=lp["b2"], residual=rows,
                         out_dtype=jnp.float32,
                         single_buffer=single_buffer).reshape(bsz, n_p, D)

    cls_x = t[:, 0, :]
    body = t[:, 1:n, :].reshape(bs, gp, wid, hei, dim)
    body = jnp.transpose(body, (0, 1, 4, 2, 3)).reshape(bs_gp, dim, wid, hei)
    return body, cls_x


def transformer_forward(x, params, *, heads, group):
    """Pallas-accelerated Transformer.forward (mask=None, dropout p=0)."""
    single_buffer = _probe_single_buffer()   # eager probe, outside jit
    return _forward_jit(x, params, heads=heads, group=group,
                        single_buffer=single_buffer)


def transformer_ref(x, params, *, heads, group):
    """Pure-JAX (f32) reference matching the PyTorch module."""
    bs_gp, dim, wid, hei = x.shape
    if bs_gp // group == 0:
        bs, gp = 1, bs_gp
    else:
        bs, gp = bs_gp // group, group
    t = x.reshape(bs, gp, dim, wid, hei)
    t = jnp.transpose(t, (0, 1, 3, 4, 2)).reshape(bs, gp * wid * hei, dim)
    cls = jnp.broadcast_to(params["cls_token"], (bs, 1, dim))
    t = jnp.concatenate([cls, t], axis=1)
    bsz, n, D = t.shape
    hd = D // heads
    scale = float(D) ** -0.5

    def layernorm(z, ln):
        m = jnp.mean(z, -1, keepdims=True)
        v = jnp.mean((z - m) ** 2, -1, keepdims=True)
        return (z - m) / jnp.sqrt(v + LN_EPS) * ln[0] + ln[1]

    for lp in params["layers"]:
        y = layernorm(t, lp["ln1"])
        qkv = y @ lp["wqkv"].T
        q, k, v = jnp.split(qkv, 3, axis=-1)
        split = lambda z: jnp.transpose(z.reshape(bsz, n, heads, hd), (0, 2, 1, 3))
        q, k, v = split(q), split(k), split(v)
        dots = jnp.einsum('bhid,bhjd->bhij', q, k) * scale
        attn = jax.nn.softmax(dots, axis=-1)
        out = jnp.einsum('bhij,bhjd->bhid', attn, v)
        out = jnp.transpose(out, (0, 2, 1, 3)).reshape(bsz, n, D)
        t = t + out @ lp["wo"].T + lp["bo"]
        y = layernorm(t, lp["ln2"])
        h = jax.nn.gelu(y @ lp["w1"].T + lp["b1"], approximate=True)
        t = t + h @ lp["w2"].T + lp["b2"]

    cls_x = t[:, 0, :]
    body = t[:, 1:, :].reshape(bs, gp, wid, hei, dim)
    body = jnp.transpose(body, (0, 1, 4, 2, 3)).reshape(bs_gp, dim, wid, hei)
    return body, cls_x


if __name__ == "__main__":
    # Small shapes consistent with the module; dim is a multiple of 128 so
    # every linear output and the attention output block are lane-dense.
    bs_gp, dim, wid, hei = 2, 128, 4, 4
    depth, heads, mlp_dim, group = 2, 4, 256, 5

    key = jax.random.PRNGKey(0)
    kx, kp = jax.random.split(key)
    x = jax.random.normal(kx, (bs_gp, dim, wid, hei), dtype=jnp.float32)
    params = init_transformer_params(kp, dim=dim, depth=depth, heads=heads,
                                     mlp_dim=mlp_dim)

    out, cls_x = transformer_forward(x, params, heads=heads, group=group)
    out = jax.block_until_ready(out)
    cls_x = jax.block_until_ready(cls_x)

    ref_out, ref_cls = transformer_ref(x, params, heads=heads, group=group)

    assert out.shape == (bs_gp, dim, wid, hei)
    assert cls_x.shape == ref_cls.shape
    # bf16 MXU operands + bf16 intermediates vs f32 reference -> loose tol.
    assert jnp.allclose(out, ref_out, atol=5e-2, rtol=5e-2), "body mismatch vs reference"
    assert jnp.allclose(cls_x, ref_cls, atol=5e-2, rtol=5e-2), "cls mismatch vs reference"

    print("KERNEL_OK")
</pallas_src>

<mosaic_0001>
module attributes {stable_mosaic.version = 11 : i64} {
  func.func @k(%arg0: i32, %arg1: memref<8x128xf32, #tpu.memory_space<vmem>>, %arg2: memref<8x128xf32, #tpu.memory_space<vmem>>, %arg3: memref<8x128xf32, #tpu.memory_space<vmem>>) attributes {dimension_semantics = [#tpu.dimension_semantics<arbitrary>], iteration_bounds = array<i64: 1>, scalar_prefetch = 0 : i64, scratch_operands = 0 : i64, tpu.core_type = #tpu.core_type<tc>, window_params = [{pipeline_mode = #tpu.pipeline_mode<synchronous>, transform_indices = @transform_0, window_bounds = array<i64: 8, 128>}, {transform_indices = @transform_1, window_bounds = array<i64: 8, 128>}, {transform_indices = @transform_2, window_bounds = array<i64: 8, 128>}]} {
    %c0 = arith.constant 0 : index
    %c0_0 = arith.constant 0 : index
    %0 = vector.load %arg2[%c0, %c0_0] : memref<8x128xf32, #tpu.memory_space<vmem>>, vector<8x128xf32>
    %c0_1 = arith.constant 0 : index
    %c0_2 = arith.constant 0 : index
    %1 = vector.load %arg1[%c0_1, %c0_2] : memref<8x128xf32, #tpu.memory_space<vmem>>, vector<8x128xf32>
    %2 = arith.addf %0, %1 : vector<8x128xf32>
    %c0_3 = arith.constant 0 : index
    %c0_4 = arith.constant 0 : index
    %3 = vector.load %arg3[%c0_3, %c0_4] : memref<8x128xf32, #tpu.memory_space<vmem>>, vector<8x128xf32>
    tpu.vector_store %arg3[%c0_3, %c0_4], %2 {strides = array<i32>} : memref<8x128xf32, #tpu.memory_space<vmem>>, vector<8x128xf32>,
    return
  }
  func.func @transform_0(%arg0: i32) -> (i32, i32) {
    %c0_i32 = arith.constant 0 : i32
    %c0_i32_0 = arith.constant 0 : i32
    %c0_i32_1 = arith.constant 0 : i32
    return %c0_i32, %c0_i32_0 : i32, i32
  }
  func.func @transform_1(%arg0: i32) -> (i32, i32) {
    %c0_i32 = arith.constant 0 : i32
    %c0_i32_0 = arith.constant 0 : i32
    return %arg0, %c0_i32 : i32, i32
  }
  func.func @transform_2(%arg0: i32) -> (i32, i32) {
    %c0_i32 = arith.constant 0 : i32
    %c0_i32_0 = arith.constant 0 : i32
    return %arg0, %c0_i32 : i32, i32
  }
}

module attributes {stable_mosaic.version = 11 : i64} {
  func.func @kernel(%arg0: i32, %arg1: memref<1x48x384xbf16, #tpu.memory_space<vmem>>, %arg2: memref<1x48x128xbf16, #tpu.memory_space<vmem>>) attributes {dimension_semantics = [#tpu.dimension_semantics<parallel>], iteration_bounds = array<i64: 1>, scalar_prefetch = 0 : i64, scratch_operands = 0 : i64, tpu.core_type = #tpu.core_type<tc>, window_params = [{transform_indices = @transform_0, window_bounds = array<i64: 1, 48, 384>}, {transform_indices = @transform_1, window_bounds = array<i64: 1, 48, 128>}]} {
    %c0 = arith.constant 0 : index
    %c0_0 = arith.constant 0 : index
    %c0_1 = arith.constant 0 : index
    %0 = vector.load %arg1[%c0, %c0_0, %c0_1] : memref<1x48x384xbf16, #tpu.memory_space<vmem>>, vector<1x48x384xbf16>
    %1 = vector.shape_cast %0 : vector<1x48x384xbf16> to vector<48x384xbf16>
    %2 = tpu.iota {dimensions = array<i32: 1>} : vector<48x48xi32>
    %c33_i32 = arith.constant 33 : i32
    %3 = vector.broadcast %c33_i32 : i32 to vector<48x48xi32>
    %4 = arith.cmpi sge, %2, %3 : vector<48x48xi32>
    %5 = vector.extract_strided_slice %1 {offsets = [0, 0], sizes = [48, 32], strides = [1, 1]} : vector<48x384xbf16> to vector<48x32xbf16>
    %6 = arith.extf %5 : vector<48x32xbf16> to vector<48x32xf32>
    %7 = vector.extract_strided_slice %1 {offsets = [0, 128], sizes = [48, 32], strides = [1, 1]} : vector<48x384xbf16> to vector<48x32xbf16>
    %8 = vector.extract_strided_slice %1 {offsets = [0, 256], sizes = [48, 32], strides = [1, 1]} : vector<48x384xbf16> to vector<48x32xbf16>
    %cst = arith.constant 0.0883883461 : f32
    %9 = vector.broadcast %cst : f32 to vector<48x32xf32>
    %10 = arith.mulf %6, %9 : vector<48x32xf32>
    %11 = arith.truncf %10 : vector<48x32xf32> to vector<48x32xbf16>
    %cst_2 = arith.constant dense<0.000000e+00> : vector<48x48xf32>
    %12 = tpu.matmul %11, %7, %cst_2 {dimension_numbers = #tpu.dot_dimension_numbers<[1], [1], [0], [0], [0, 0, 1, 0], [], []>} : vector<48x32xbf16>, vector<48x32xbf16>, vector<48x48xf32> -> vector<48x48xf32>
    %cst_3 = arith.constant -1.000000e+30 : f32
    %13 = vector.broadcast %cst_3 : f32 to vector<48x48xf32>
    %14 = arith.select %4, %13, %12 : vector<48x48xi1>, vector<48x48xf32>
    %cst_4 = arith.constant dense<0xFF800000> : vector<48xf32>
    %15 = vector.multi_reduction <maximumf>, %14, %cst_4 [1] : vector<48x48xf32> to vector<48xf32>
    %16 = vector.shape_cast %15 : vector<48xf32> to vector<48x1xf32>
    %17 = vector.broadcast %16 : vector<48x1xf32> to vector<48x48xf32>
    %18 = arith.subf %14, %17 : vector<48x48xf32>
    %19 = math.exp %18 : vector<48x48xf32>
    %cst_5 = arith.constant dense<0.000000e+00> : vector<48xf32>
    %20 = vector.multi_reduction <add>, %19, %cst_5 [1] : vector<48x48xf32> to vector<48xf32>
    %21 = vector.shape_cast %20 : vector<48xf32> to vector<48x1xf32>
    %22 = arith.truncf %19 : vector<48x48xf32> to vector<48x48xbf16>
    %cst_6 = arith.constant dense<0.000000e+00> : vector<48x32xf32>
    %23 = tpu.matmul %22, %8, %cst_6 {dimension_numbers = #tpu.dot_dimension_numbers<[1], [0], [0], [1], [0, 0, 1, 1], [], []>} : vector<48x48xbf16>, vector<48x32xbf16>, vector<48x32xf32> -> vector<48x32xf32>
    %24 = tpu.reciprocal %21 {approx = true} : vector<48x1xf32> -> vector<48x1xf32>
    %25 = vector.broadcast %24 : vector<48x1xf32> to vector<48x32xf32>
    %26 = arith.mulf %23, %25 : vector<48x32xf32>
    %27 = vector.extract_strided_slice %1 {offsets = [0, 32], sizes = [48, 32], strides = [1, 1]} : vector<48x384xbf16> to vector<48x32xbf16>
    %28 = arith.extf %27 : vector<48x32xbf16> to vector<48x32xf32>
    %29 = vector.extract_strided_slice %1 {offsets = [0, 160], sizes = [48, 32], strides = [1, 1]} : vector<48x384xbf16> to vector<48x32xbf16>
    %30 = vector.extract_strided_slice %1 {offsets = [0, 288], sizes = [48, 32], strides = [1, 1]} : vector<48x384xbf16> to vector<48x32xbf16>
    %cst_7 = arith.constant 0.0883883461 : f32
    %31 = vector.broadcast %cst_7 : f32 to vector<48x32xf32>
    %32 = arith.mulf %28, %31 : vector<48x32xf32>
    %33 = arith.truncf %32 : vector<48x32xf32> to vector<48x32xbf16>
    %cst_8 = arith.constant dense<0.000000e+00> : vector<48x48xf32>
    %34 = tpu.matmul %33, %29, %cst_8 {dimension_numbers = #tpu.dot_dimension_numbers<[1], [1], [0], [0], [0, 0, 1, 0], [], []>} : vector<48x32xbf16>, vector<48x32xbf16>, vector<48x48xf32> -> vector<48x48xf32>
    %cst_9 = arith.constant -1.000000e+30 : f32
    %35 = vector.broadcast %cst_9 : f32 to vector<48x48xf32>
    %36 = arith.select %4, %35, %34 : vector<48x48xi1>, vector<48x48xf32>
    %cst_10 = arith.constant dense<0xFF800000> : vector<48xf32>
    %37 = vector.multi_reduction <maximumf>, %36, %cst_10 [1] : vector<48x48xf32> to vector<48xf32>
    %38 = vector.shape_cast %37 : vector<48xf32> to vector<48x1xf32>
    %39 = vector.broadcast %38 : vector<48x1xf32> to vector<48x48xf32>
    %40 = arith.subf %36, %39 : vector<48x48xf32>
    %41 = math.exp %40 : vector<48x48xf32>
    %cst_11 = arith.constant dense<0.000000e+00> : vector<48xf32>
    %42 = vector.multi_reduction <add>, %41, %cst_11 [1] : vector<48x48xf32> to vector<48xf32>
    %43 = vector.shape_cast %42 : vector<48xf32> to vector<48x1xf32>
    %44 = arith.truncf %41 : vector<48x48xf32> to vector<48x48xbf16>
    %cst_12 = arith.constant dense<0.000000e+00> : vector<48x32xf32>
    %45 = tpu.matmul %44, %30, %cst_12 {dimension_numbers = #tpu.dot_dimension_numbers<[1], [0], [0], [1], [0, 0, 1, 1], [], []>} : vector<48x48xbf16>, vector<48x32xbf16>, vector<48x32xf32> -> vector<48x32xf32>
    %46 = tpu.reciprocal %43 {approx = true} : vector<48x1xf32> -> vector<48x1xf32>
    %47 = vector.broadcast %46 : vector<48x1xf32> to vector<48x32xf32>
    %48 = arith.mulf %45, %47 : vector<48x32xf32>
    %49 = vector.extract_strided_slice %1 {offsets = [0, 64], sizes = [48, 32], strides = [1, 1]} : vector<48x384xbf16> to vector<48x32xbf16>
    %50 = arith.extf %49 : vector<48x32xbf16> to vector<48x32xf32>
    %51 = vector.extract_strided_slice %1 {offsets = [0, 192], sizes = [48, 32], strides = [1, 1]} : vector<48x384xbf16> to vector<48x32xbf16>
    %52 = vector.extract_strided_slice %1 {offsets = [0, 320], sizes = [48, 32], strides = [1, 1]} : vector<48x384xbf16> to vector<48x32xbf16>
    %cst_13 = arith.constant 0.0883883461 : f32
    %53 = vector.broadcast %cst_13 : f32 to vector<48x32xf32>
    %54 = arith.mulf %50, %53 : vector<48x32xf32>
    %55 = arith.truncf %54 : vector<48x32xf32> to vector<48x32xbf16>
    %cst_14 = arith.constant dense<0.000000e+00> : vector<48x48xf32>
    %56 = tpu.matmul %55, %51, %cst_14 {dimension_numbers = #tpu.dot_dimension_numbers<[1], [1], [0], [0], [0, 0, 1, 0], [], []>} : vector<48x32xbf16>, vector<48x32xbf16>, vector<48x48xf32> -> vector<48x48xf32>
    %cst_15 = arith.constant -1.000000e+30 : f32
    %57 = vector.broadcast %cst_15 : f32 to vector<48x48xf32>
    %58 = arith.select %4, %57, %56 : vector<48x48xi1>, vector<48x48xf32>
    %cst_16 = arith.constant dense<0xFF800000> : vector<48xf32>
    %59 = vector.multi_reduction <maximumf>, %58, %cst_16 [1] : vector<48x48xf32> to vector<48xf32>
    %60 = vector.shape_cast %59 : vector<48xf32> to vector<48x1xf32>
    %61 = vector.broadcast %60 : vector<48x1xf32> to vector<48x48xf32>
    %62 = arith.subf %58, %61 : vector<48x48xf32>
    %63 = math.exp %62 : vector<48x48xf32>
    %cst_17 = arith.constant dense<0.000000e+00> : vector<48xf32>
    %64 = vector.multi_reduction <add>, %63, %cst_17 [1] : vector<48x48xf32> to vector<48xf32>
    %65 = vector.shape_cast %64 : vector<48xf32> to vector<48x1xf32>
    %66 = arith.truncf %63 : vector<48x48xf32> to vector<48x48xbf16>
    %cst_18 = arith.constant dense<0.000000e+00> : vector<48x32xf32>
    %67 = tpu.matmul %66, %52, %cst_18 {dimension_numbers = #tpu.dot_dimension_numbers<[1], [0], [0], [1], [0, 0, 1, 1], [], []>} : vector<48x48xbf16>, vector<48x32xbf16>, vector<48x32xf32> -> vector<48x32xf32>
    %68 = tpu.reciprocal %65 {approx = true} : vector<48x1xf32> -> vector<48x1xf32>
    %69 = vector.broadcast %68 : vector<48x1xf32> to vector<48x32xf32>
    %70 = arith.mulf %67, %69 : vector<48x32xf32>
    %71 = vector.extract_strided_slice %1 {offsets = [0, 96], sizes = [48, 32], strides = [1, 1]} : vector<48x384xbf16> to vector<48x32xbf16>
    %72 = arith.extf %71 : vector<48x32xbf16> to vector<48x32xf32>
    %73 = vector.extract_strided_slice %1 {offsets = [0, 224], sizes = [48, 32], strides = [1, 1]} : vector<48x384xbf16> to vector<48x32xbf16>
    %74 = vector.extract_strided_slice %1 {offsets = [0, 352], sizes = [48, 32], strides = [1, 1]} : vector<48x384xbf16> to vector<48x32xbf16>
    %cst_19 = arith.constant 0.0883883461 : f32
    %75 = vector.broadcast %cst_19 : f32 to vector<48x32xf32>
    %76 = arith.mulf %72, %75 : vector<48x32xf32>
    %77 = arith.truncf %76 : vector<48x32xf32> to vector<48x32xbf16>
    %cst_20 = arith.constant dense<0.000000e+00> : vector<48x48xf32>
    %78 = tpu.matmul %77, %73, %cst_20 {dimension_numbers = #tpu.dot_dimension_numbers<[1], [1], [0], [0], [0, 0, 1, 0], [], []>} : vector<48x32xbf16>, vector<48x32xbf16>, vector<48x48xf32> -> vector<48x48xf32>
    %cst_21 = arith.constant -1.000000e+30 : f32
    %79 = vector.broadcast %cst_21 : f32 to vector<48x48xf32>
    %80 = arith.select %4, %79, %78 : vector<48x48xi1>, vector<48x48xf32>
    %cst_22 = arith.constant dense<0xFF800000> : vector<48xf32>
    %81 = vector.multi_reduction <maximumf>, %80, %cst_22 [1] : vector<48x48xf32> to vector<48xf32>
    %82 = vector.shape_cast %81 : vector<48xf32> to vector<48x1xf32>
    %83 = vector.broadcast %82 : vector<48x1xf32> to vector<48x48xf32>
    %84 = arith.subf %80, %83 : vector<48x48xf32>
    %85 = math.exp %84 : vector<48x48xf32>
    %cst_23 = arith.constant dense<0.000000e+00> : vector<48xf32>
    %86 = vector.multi_reduction <add>, %85, %cst_23 [1] : vector<48x48xf32> to vector<48xf32>
    %87 = vector.shape_cast %86 : vector<48xf32> to vector<48x1xf32>
    %88 = arith.truncf %85 : vector<48x48xf32> to vector<48x48xbf16>
    %cst_24 = arith.constant dense<0.000000e+00> : vector<48x32xf32>
    %89 = tpu.matmul %88, %74, %cst_24 {dimension_numbers = #tpu.dot_dimension_numbers<[1], [0], [0], [1], [0, 0, 1, 1], [], []>} : vector<48x48xbf16>, vector<48x32xbf16>, vector<48x32xf32> -> vector<48x32xf32>
    %90 = tpu.reciprocal %87 {approx = true} : vector<48x1xf32> -> vector<48x1xf32>
    %91 = vector.broadcast %90 : vector<48x1xf32> to vector<48x32xf32>
    %92 = arith.mulf %89, %91 : vector<48x32xf32>
    %93 = tpu.concatenate %26, %48, %70, %92 in 1 : vector<48x32xf32>, vector<48x32xf32>, vector<48x32xf32>, vector<48x32xf32> -> vector<48x128xf32>
    %94 = arith.truncf %93 : vector<48x128xf32> to vector<48x128xbf16>
    %c0_25 = arith.constant 0 : index
    %c0_26 = arith.constant 0 : index
    %c0_27 = arith.constant 0 : index
    %95 = vector.load %arg2[%c0_25, %c0_26, %c0_27] : memref<1x48x128xbf16, #tpu.memory_space<vmem>>, vector<1x48x128xbf16>
    %96 = vector.shape_cast %95 : vector<1x48x128xbf16> to vector<48x128xbf16>
    %97 = vector.shape_cast %94 : vector<48x128xbf16> to vector<1x48x128xbf16>
    tpu.vector_store %arg2[%c0_25, %c0_26, %c0_27], %97 {strides = array<i32>} : memref<1x48x128xbf16, #tpu.memory_space<vmem>>, vector<1x48x128xbf16>,
    return
  }
  func.func @transform_0(%arg0: i32) -> (i32, i32, i32) {
    %c0_i32 = arith.constant 0 : i32
    %c0_i32_0 = arith.constant 0 : i32
    %c0_i32_1 = arith.constant 0 : i32
    return %arg0, %c0_i32, %c0_i32_0 : i32, i32, i32
  }
  func.func @transform_1(%arg0: i32) -> (i32, i32, i32) {
    %c0_i32 = arith.constant 0 : i32
    %c0_i32_0 = arith.constant 0 : i32
    %c0_i32_1 = arith.constant 0 : i32
    return %arg0, %c0_i32, %c0_i32_0 : i32, i32, i32
  }
}

module attributes {stable_mosaic.version = 11 : i64} {
  func.func @kernel(%arg0: i32, %arg1: i32, %arg2: memref<48x128xbf16, #tpu.memory_space<vmem>>, %arg3: memref<128x128xbf16, #tpu.memory_space<vmem>>, %arg4: memref<1x128xf32, #tpu.memory_space<vmem>>, %arg5: memref<48x128xf32, #tpu.memory_space<vmem>>, %arg6: memref<48x128xf32, #tpu.memory_space<vmem>>) attributes {dimension_semantics = [#tpu.dimension_semantics<parallel>, #tpu.dimension_semantics<parallel>], iteration_bounds = array<i64: 1, 1>, scalar_prefetch = 0 : i64, scratch_operands = 0 : i64, tpu.core_type = #tpu.core_type<tc>, window_params = [{transform_indices = @transform_0, window_bounds = array<i64: 48, 128>}, {transform_indices = @transform_1, window_bounds = array<i64: 128, 128>}, {transform_indices = @transform_2, window_bounds = array<i64: 1, 128>}, {transform_indices = @transform_3, window_bounds = array<i64: 48, 128>}, {transform_indices = @transform_4, window_bounds = array<i64: 48, 128>}]} {
    %c0 = arith.constant 0 : index
    %c0_0 = arith.constant 0 : index
    %0 = vector.load %arg2[%c0, %c0_0] : memref<48x128xbf16, #tpu.memory_space<vmem>>, vector<48x128xbf16>
    %c0_1 = arith.constant 0 : index
    %c0_2 = arith.constant 0 : index
    %1 = vector.load %arg3[%c0_1, %c0_2] : memref<128x128xbf16, #tpu.memory_space<vmem>>, vector<128x128xbf16>
    %cst = arith.constant dense<0.000000e+00> : vector<48x128xf32>
    %2 = tpu.matmul %0, %1, %cst {dimension_numbers = #tpu.dot_dimension_numbers<[1], [0], [0], [1], [0, 0, 1, 1], [], []>} : vector<48x128xbf16>, vector<128x128xbf16>, vector<48x128xf32> -> vector<48x128xf32>
    %c0_3 = arith.constant 0 : index
    %c0_4 = arith.constant 0 : index
    %3 = vector.load %arg4[%c0_3, %c0_4] : memref<1x128xf32, #tpu.memory_space<vmem>>, vector<1x128xf32>
    %4 = vector.broadcast %3 : vector<1x128xf32> to vector<48x128xf32>
    %5 = arith.addf %2, %4 : vector<48x128xf32>
    %c0_5 = arith.constant 0 : index
    %c0_6 = arith.constant 0 : index
    %6 = vector.load %arg5[%c0_5, %c0_6] : memref<48x128xf32, #tpu.memory_space<vmem>>, vector<48x128xf32>
    %7 = arith.addf %5, %6 : vector<48x128xf32>
    %c0_7 = arith.constant 0 : index
    %c0_8 = arith.constant 0 : index
    %8 = vector.load %arg6[%c0_7, %c0_8] : memref<48x128xf32, #tpu.memory_space<vmem>>, vector<48x128xf32>
    tpu.vector_store %arg6[%c0_7, %c0_8], %7 {strides = array<i32>} : memref<48x128xf32, #tpu.memory_space<vmem>>, vector<48x128xf32>,
    return
  }
  func.func @transform_0(%arg0: i32, %arg1: i32) -> (i32, i32) {
    %c0_i32 = arith.constant 0 : i32
    %c0_i32_0 = arith.constant 0 : i32
    return %arg0, %c0_i32 : i32, i32
  }
  func.func @transform_1(%arg0: i32, %arg1: i32) -> (i32, i32) {
    %c0_i32 = arith.constant 0 : i32
    %c0_i32_0 = arith.constant 0 : i32
    return %c0_i32, %arg1 : i32, i32
  }
  func.func @transform_2(%arg0: i32, %arg1: i32) -> (i32, i32) {
    %c0_i32 = arith.constant 0 : i32
    %c0_i32_0 = arith.constant 0 : i32
    return %c0_i32, %arg1 : i32, i32
  }
  func.func @transform_3(%arg0: i32, %arg1: i32) -> (i32, i32) {
    %c0_i32 = arith.constant 0 : i32
    return %arg0, %arg1 : i32, i32
  }
  func.func @transform_4(%arg0: i32, %arg1: i32) -> (i32, i32) {
    %c0_i32 = arith.constant 0 : i32
    return %arg0, %arg1 : i32, i32
  }
}

module attributes {stable_mosaic.version = 11 : i64} {
  func.func @kernel(%arg0: i32, %arg1: i32, %arg2: memref<48x128xf32, #tpu.memory_space<vmem>>, %arg3: memref<2x128xf32, #tpu.memory_space<vmem>>, %arg4: memref<128x384xbf16, #tpu.memory_space<vmem>>, %arg5: memref<48x384xbf16, #tpu.memory_space<vmem>>) attributes {dimension_semantics = [#tpu.dimension_semantics<parallel>, #tpu.dimension_semantics<parallel>], iteration_bounds = array<i64: 1, 1>, scalar_prefetch = 0 : i64, scratch_operands = 0 : i64, tpu.core_type = #tpu.core_type<tc>, window_params = [{transform_indices = @transform_0, window_bounds = array<i64: 48, 128>}, {pipeline_mode = #tpu.pipeline_mode<synchronous>, transform_indices = @transform_1, window_bounds = array<i64: 2, 128>}, {transform_indices = @transform_2, window_bounds = array<i64: 128, 384>}, {transform_indices = @transform_3, window_bounds = array<i64: 48, 384>}]} {
    %c0 = arith.constant 0 : index
    %c0_0 = arith.constant 0 : index
    %0 = vector.load %arg2[%c0, %c0_0] : memref<48x128xf32, #tpu.memory_space<vmem>>, vector<48x128xf32>
    %cst = arith.constant dense<0.000000e+00> : vector<48xf32>
    %1 = vector.multi_reduction <add>, %0, %cst [1] : vector<48x128xf32> to vector<48xf32>
    %2 = vector.shape_cast %1 : vector<48xf32> to vector<48x1xf32>
    %cst_1 = arith.constant 1.280000e+02 : f32
    %3 = vector.broadcast %cst_1 : f32 to vector<48x1xf32>
    %4 = arith.divf %2, %3 : vector<48x1xf32>
    %5 = vector.broadcast %4 : vector<48x1xf32> to vector<48x128xf32>
    %6 = arith.subf %0, %5 : vector<48x128xf32>
    %7 = arith.mulf %6, %6 : vector<48x128xf32>
    %cst_2 = arith.constant dense<0.000000e+00> : vector<48xf32>
    %8 = vector.multi_reduction <add>, %7, %cst_2 [1] : vector<48x128xf32> to vector<48xf32>
    %9 = vector.shape_cast %8 : vector<48xf32> to vector<48x1xf32>
    %cst_3 = arith.constant 1.280000e+02 : f32
    %10 = vector.broadcast %cst_3 : f32 to vector<48x1xf32>
    %11 = arith.divf %9, %10 : vector<48x1xf32>
    %cst_4 = arith.constant 9.99999974E-6 : f32
    %12 = vector.broadcast %cst_4 : f32 to vector<48x1xf32>
    %13 = arith.addf %11, %12 : vector<48x1xf32>
    %14 = math.rsqrt %13 : vector<48x1xf32>
    %15 = vector.broadcast %14 : vector<48x1xf32> to vector<48x128xf32>
    %16 = arith.mulf %6, %15 : vector<48x128xf32>
    %c0_5 = arith.constant 0 : index
    %c0_6 = arith.constant 0 : index
    %17 = vector.load %arg3[%c0_5, %c0_6] : memref<2x128xf32, #tpu.memory_space<vmem>>, vector<2x128xf32>
    %18 = vector.extract_strided_slice %17 {offsets = [0, 0], sizes = [1, 128], strides = [1, 1]} : vector<2x128xf32> to vector<1x128xf32>
    %19 = vector.broadcast %18 : vector<1x128xf32> to vector<48x128xf32>
    %20 = arith.mulf %16, %19 : vector<48x128xf32>
    %21 = vector.extract_strided_slice %17 {offsets = [1, 0], sizes = [1, 128], strides = [1, 1]} : vector<2x128xf32> to vector<1x128xf32>
    %22 = vector.broadcast %21 : vector<1x128xf32> to vector<48x128xf32>
    %23 = arith.addf %20, %22 : vector<48x128xf32>
    %24 = arith.truncf %23 : vector<48x128xf32> to vector<48x128xbf16>
    %c0_7 = arith.constant 0 : index
    %c0_8 = arith.constant 0 : index
    %25 = vector.load %arg4[%c0_7, %c0_8] : memref<128x384xbf16, #tpu.memory_space<vmem>>, vector<128x384xbf16>
    %cst_9 = arith.constant dense<0.000000e+00> : vector<48x384xf32>
    %26 = tpu.matmul %24, %25, %cst_9 {dimension_numbers = #tpu.dot_dimension_numbers<[1], [0], [0], [1], [0, 0, 1, 1], [], []>} : vector<48x128xbf16>, vector<128x384xbf16>, vector<48x384xf32> -> vector<48x384xf32>
    %27 = arith.truncf %26 : vector<48x384xf32> to vector<48x384xbf16>
    %c0_10 = arith.constant 0 : index
    %c0_11 = arith.constant 0 : index
    %28 = vector.load %arg5[%c0_10, %c0_11] : memref<48x384xbf16, #tpu.memory_space<vmem>>, vector<48x384xbf16>
    tpu.vector_store %arg5[%c0_10, %c0_11], %27 {strides = array<i32>} : memref<48x384xbf16, #tpu.memory_space<vmem>>, vector<48x384xbf16>,
    return
  }
  func.func @transform_0(%arg0: i32, %arg1: i32) -> (i32, i32) {
    %c0_i32 = arith.constant 0 : i32
    %c0_i32_0 = arith.constant 0 : i32
    return %arg0, %c0_i32 : i32, i32
  }
  func.func @transform_1(%arg0: i32, %arg1: i32) -> (i32, i32) {
    %c0_i32 = arith.constant 0 : i32
    %c0_i32_0 = arith.constant 0 : i32
    %c0_i32_1 = arith.constant 0 : i32
    return %c0_i32, %c0_i32_0 : i32, i32
  }
  func.func @transform_2(%arg0: i32, %arg1: i32) -> (i32, i32) {
    %c0_i32 = arith.constant 0 : i32
    %c0_i32_0 = arith.constant 0 : i32
    return %c0_i32, %arg1 : i32, i32
  }
  func.func @transform_3(%arg0: i32, %arg1: i32) -> (i32, i32) {
    %c0_i32 = arith.constant 0 : i32
    return %arg0, %arg1 : i32, i32
  }
}

module attributes {stable_mosaic.version = 11 : i64} {
  func.func @kernel(%arg0: i32, %arg1: i32, %arg2: memref<48x128xf32, #tpu.memory_space<vmem>>, %arg3: memref<2x128xf32, #tpu.memory_space<vmem>>, %arg4: memref<128x256xbf16, #tpu.memory_space<vmem>>, %arg5: memref<1x256xf32, #tpu.memory_space<vmem>>, %arg6: memref<48x256xbf16, #tpu.memory_space<vmem>>) attributes {dimension_semantics = [#tpu.dimension_semantics<parallel>, #tpu.dimension_semantics<parallel>], iteration_bounds = array<i64: 1, 1>, scalar_prefetch = 0 : i64, scratch_operands = 0 : i64, tpu.core_type = #tpu.core_type<tc>, window_params = [{transform_indices = @transform_0, window_bounds = array<i64: 48, 128>}, {pipeline_mode = #tpu.pipeline_mode<synchronous>, transform_indices = @transform_1, window_bounds = array<i64: 2, 128>}, {transform_indices = @transform_2, window_bounds = array<i64: 128, 256>}, {transform_indices = @transform_3, window_bounds = array<i64: 1, 256>}, {transform_indices = @transform_4, window_bounds = array<i64: 48, 256>}]} {
    %c0 = arith.constant 0 : index
    %c0_0 = arith.constant 0 : index
    %0 = vector.load %arg2[%c0, %c0_0] : memref<48x128xf32, #tpu.memory_space<vmem>>, vector<48x128xf32>
    %cst = arith.constant dense<0.000000e+00> : vector<48xf32>
    %1 = vector.multi_reduction <add>, %0, %cst [1] : vector<48x128xf32> to vector<48xf32>
    %2 = vector.shape_cast %1 : vector<48xf32> to vector<48x1xf32>
    %cst_1 = arith.constant 1.280000e+02 : f32
    %3 = vector.broadcast %cst_1 : f32 to vector<48x1xf32>
    %4 = arith.divf %2, %3 : vector<48x1xf32>
    %5 = vector.broadcast %4 : vector<48x1xf32> to vector<48x128xf32>
    %6 = arith.subf %0, %5 : vector<48x128xf32>
    %7 = arith.mulf %6, %6 : vector<48x128xf32>
    %cst_2 = arith.constant dense<0.000000e+00> : vector<48xf32>
    %8 = vector.multi_reduction <add>, %7, %cst_2 [1] : vector<48x128xf32> to vector<48xf32>
    %9 = vector.shape_cast %8 : vector<48xf32> to vector<48x1xf32>
    %cst_3 = arith.constant 1.280000e+02 : f32
    %10 = vector.broadcast %cst_3 : f32 to vector<48x1xf32>
    %11 = arith.divf %9, %10 : vector<48x1xf32>
    %cst_4 = arith.constant 9.99999974E-6 : f32
    %12 = vector.broadcast %cst_4 : f32 to vector<48x1xf32>
    %13 = arith.addf %11, %12 : vector<48x1xf32>
    %14 = math.rsqrt %13 : vector<48x1xf32>
    %15 = vector.broadcast %14 : vector<48x1xf32> to vector<48x128xf32>
    %16 = arith.mulf %6, %15 : vector<48x128xf32>
    %c0_5 = arith.constant 0 : index
    %c0_6 = arith.constant 0 : index
    %17 = vector.load %arg3[%c0_5, %c0_6] : memref<2x128xf32, #tpu.memory_space<vmem>>, vector<2x128xf32>
    %18 = vector.extract_strided_slice %17 {offsets = [0, 0], sizes = [1, 128], strides = [1, 1]} : vector<2x128xf32> to vector<1x128xf32>
    %19 = vector.broadcast %18 : vector<1x128xf32> to vector<48x128xf32>
    %20 = arith.mulf %16, %19 : vector<48x128xf32>
    %21 = vector.extract_strided_slice %17 {offsets = [1, 0], sizes = [1, 128], strides = [1, 1]} : vector<2x128xf32> to vector<1x128xf32>
    %22 = vector.broadcast %21 : vector<1x128xf32> to vector<48x128xf32>
    %23 = arith.addf %20, %22 : vector<48x128xf32>
    %24 = arith.truncf %23 : vector<48x128xf32> to vector<48x128xbf16>
    %c0_7 = arith.constant 0 : index
    %c0_8 = arith.constant 0 : index
    %25 = vector.load %arg4[%c0_7, %c0_8] : memref<128x256xbf16, #tpu.memory_space<vmem>>, vector<128x256xbf16>
    %cst_9 = arith.constant dense<0.000000e+00> : vector<48x256xf32>
    %26 = tpu.matmul %24, %25, %cst_9 {dimension_numbers = #tpu.dot_dimension_numbers<[1], [0], [0], [1], [0, 0, 1, 1], [], []>} : vector<48x128xbf16>, vector<128x256xbf16>, vector<48x256xf32> -> vector<48x256xf32>
    %c0_10 = arith.constant 0 : index
    %c0_11 = arith.constant 0 : index
    %27 = vector.load %arg5[%c0_10, %c0_11] : memref<1x256xf32, #tpu.memory_space<vmem>>, vector<1x256xf32>
    %28 = vector.broadcast %27 : vector<1x256xf32> to vector<48x256xf32>
    %29 = arith.addf %26, %28 : vector<48x256xf32>
    %30 = arith.mulf %29, %29 : vector<48x256xf32>
    %31 = arith.mulf %29, %30 : vector<48x256xf32>
    %cst_12 = arith.constant 4.471500e-02 : f32
    %32 = vector.broadcast %cst_12 : f32 to vector<48x256xf32>
    %33 = arith.mulf %32, %31 : vector<48x256xf32>
    %34 = arith.addf %29, %33 : vector<48x256xf32>
    %cst_13 = arith.constant 0.797884583 : f32
    %35 = vector.broadcast %cst_13 : f32 to vector<48x256xf32>
    %36 = arith.mulf %35, %34 : vector<48x256xf32>
    %37 = math.tanh %36 : vector<48x256xf32>
    %cst_14 = arith.constant 1.000000e+00 : f32
    %38 = vector.broadcast %cst_14 : f32 to vector<48x256xf32>
    %39 = arith.addf %38, %37 : vector<48x256xf32>
    %cst_15 = arith.constant 5.000000e-01 : f32
    %40 = vector.broadcast %cst_15 : f32 to vector<48x256xf32>
    %41 = arith.mulf %40, %39 : vector<48x256xf32>
    %42 = arith.mulf %29, %41 : vector<48x256xf32>
    %43 = arith.truncf %42 : vector<48x256xf32> to vector<48x256xbf16>
    %c0_16 = arith.constant 0 : index
    %c0_17 = arith.constant 0 : index
    %44 = vector.load %arg6[%c0_16, %c0_17] : memref<48x256xbf16, #tpu.memory_space<vmem>>, vector<48x256xbf16>
    tpu.vector_store %arg6[%c0_16, %c0_17], %43 {strides = array<i32>} : memref<48x256xbf16, #tpu.memory_space<vmem>>, vector<48x256xbf16>,
    return
  }
  func.func @transform_0(%arg0: i32, %arg1: i32) -> (i32, i32) {
    %c0_i32 = arith.constant 0 : i32
    %c0_i32_0 = arith.constant 0 : i32
    return %arg0, %c0_i32 : i32, i32
  }
  func.func @transform_1(%arg0: i32, %arg1: i32) -> (i32, i32) {
    %c0_i32 = arith.constant 0 : i32
    %c0_i32_0 = arith.constant 0 : i32
    %c0_i32_1 = arith.constant 0 : i32
    return %c0_i32, %c0_i32_0 : i32, i32
  }
  func.func @transform_2(%arg0: i32, %arg1: i32) -> (i32, i32) {
    %c0_i32 = arith.constant 0 : i32
    %c0_i32_0 = arith.constant 0 : i32
    return %c0_i32, %arg1 : i32, i32
  }
  func.func @transform_3(%arg0: i32, %arg1: i32) -> (i32, i32) {
    %c0_i32 = arith.constant 0 : i32
    %c0_i32_0 = arith.constant 0 : i32
    return %c0_i32, %arg1 : i32, i32
  }
  func.func @transform_4(%arg0: i32, %arg1: i32) -> (i32, i32) {
    %c0_i32 = arith.constant 0 : i32
    return %arg0, %arg1 : i32, i32
  }
}

module attributes {stable_mosaic.version = 11 : i64} {
  func.func @kernel(%arg0: i32, %arg1: i32, %arg2: memref<48x256xbf16, #tpu.memory_space<vmem>>, %arg3: memref<256x128xbf16, #tpu.memory_space<vmem>>, %arg4: memref<1x128xf32, #tpu.memory_space<vmem>>, %arg5: memref<48x128xf32, #tpu.memory_space<vmem>>, %arg6: memref<48x128xf32, #tpu.memory_space<vmem>>) attributes {dimension_semantics = [#tpu.dimension_semantics<parallel>, #tpu.dimension_semantics<parallel>], iteration_bounds = array<i64: 1, 1>, scalar_prefetch = 0 : i64, scratch_operands = 0 : i64, tpu.core_type = #tpu.core_type<tc>, window_params = [{transform_indices = @transform_0, window_bounds = array<i64: 48, 256>}, {transform_indices = @transform_1, window_bounds = array<i64: 256, 128>}, {transform_indices = @transform_2, window_bounds = array<i64: 1, 128>}, {transform_indices = @transform_3, window_bounds = array<i64: 48, 128>}, {transform_indices = @transform_4, window_bounds = array<i64: 48, 128>}]} {
    %c0 = arith.constant 0 : index
    %c0_0 = arith.constant 0 : index
    %0 = vector.load %arg2[%c0, %c0_0] : memref<48x256xbf16, #tpu.memory_space<vmem>>, vector<48x256xbf16>
    %c0_1 = arith.constant 0 : index
    %c0_2 = arith.constant 0 : index
    %1 = vector.load %arg3[%c0_1, %c0_2] : memref<256x128xbf16, #tpu.memory_space<vmem>>, vector<256x128xbf16>
    %cst = arith.constant dense<0.000000e+00> : vector<48x128xf32>
    %2 = tpu.matmul %0, %1, %cst {dimension_numbers = #tpu.dot_dimension_numbers<[1], [0], [0], [1], [0, 0, 1, 1], [], []>} : vector<48x256xbf16>, vector<256x128xbf16>, vector<48x128xf32> -> vector<48x128xf32>
    %c0_3 = arith.constant 0 : index
    %c0_4 = arith.constant 0 : index
    %3 = vector.load %arg4[%c0_3, %c0_4] : memref<1x128xf32, #tpu.memory_space<vmem>>, vector<1x128xf32>
    %4 = vector.broadcast %3 : vector<1x128xf32> to vector<48x128xf32>
    %5 = arith.addf %2, %4 : vector<48x128xf32>
    %c0_5 = arith.constant 0 : index
    %c0_6 = arith.constant 0 : index
    %6 = vector.load %arg5[%c0_5, %c0_6] : memref<48x128xf32, #tpu.memory_space<vmem>>, vector<48x128xf32>
    %7 = arith.addf %5, %6 : vector<48x128xf32>
    %c0_7 = arith.constant 0 : index
    %c0_8 = arith.constant 0 : index
    %8 = vector.load %arg6[%c0_7, %c0_8] : memref<48x128xf32, #tpu.memory_space<vmem>>, vector<48x128xf32>
    tpu.vector_store %arg6[%c0_7, %c0_8], %7 {strides = array<i32>} : memref<48x128xf32, #tpu.memory_space<vmem>>, vector<48x128xf32>,
    return
  }
  func.func @transform_0(%arg0: i32, %arg1: i32) -> (i32, i32) {
    %c0_i32 = arith.constant 0 : i32
    %c0_i32_0 = arith.constant 0 : i32
    return %arg0, %c0_i32 : i32, i32
  }
  func.func @transform_1(%arg0: i32, %arg1: i32) -> (i32, i32) {
    %c0_i32 = arith.constant 0 : i32
    %c0_i32_0 = arith.constant 0 : i32
    return %c0_i32, %arg1 : i32, i32
  }
  func.func @transform_2(%arg0: i32, %arg1: i32) -> (i32, i32) {
    %c0_i32 = arith.constant 0 : i32
    %c0_i32_0 = arith.constant 0 : i32
    return %c0_i32, %arg1 : i32, i32
  }
  func.func @transform_3(%arg0: i32, %arg1: i32) -> (i32, i32) {
    %c0_i32 = arith.constant 0 : i32
    return %arg0, %arg1 : i32, i32
  }
  func.func @transform_4(%arg0: i32, %arg1: i32) -> (i32, i32) {
    %c0_i32 = arith.constant 0 : i32
    return %arg0, %arg1 : i32, i32
  }
}

</mosaic_0001>

<llo_original>
// kernel: tpu_custom_call.1
$region0: #{tpu_custom_call.1}
  #allocation0 [shape = 'u32[]', space=smem, size = 0x4, offset = 0x4, fixed_abs, tag = 'smem constant byte address 0x4 - core index']
  #allocation1 [shape = 'u32[144,128]{1,0:T(1,128)}', space=vmem, size = 0x12000, scoped, tag = 'internal scratch']
  %s0 = inlined_call_operand.hbm [shape: f32[8,128], index: 0, kind: input, shape index: {}]
  %s1 = inlined_call_operand.hbm [shape: f32[8,128], index: 1, kind: input, shape index: {}]
  %s2 = inlined_call_operand.hbm [shape: f32[8,128], index: 2, kind: output, shape index: {}]
  %s3 = sld [smem:[#allocation0]]
  $region26: #{tpu_custom_call.1} parent=0
    _
  %s5 = ssub.s32 1, %s3
  %s6 = scalar_select 0, %s5, %s3
  $region1: #{tpu_custom_call.1} parent=0
    #allocation2 [shape = 'u8[4096]{0}', space=vmem, size = 0x1000, scoped, tag = 'input window, operand 0, single buffered']
    #allocation3 [shape = 's32[1]{0}', space=sflag, size = 0x4, scoped, tag = 'scoped memory for tpu_custom_call.1']
    #allocation4 [shape = 's32[1]{0}', space=sflag, size = 0x4, scoped, tag = 'scoped memory for tpu_custom_call.1']
    #allocation5 [shape = 'u8[4096]{0}', space=vmem, size = 0x1000, scoped, tag = 'input window, operand 1, single buffered']
    #allocation6 [shape = 's32[1]{0}', space=sflag, size = 0x4, scoped, tag = 'scoped memory for tpu_custom_call.1']
    #allocation7 [shape = 'u8[4096]{0}', space=vmem, size = 0x1000, scoped, tag = 'output window, operand 0, single buffered']
    %7 = vsyncpa [#allocation3], 0
    %8 = vsyncpa [#allocation6], 0
    %9 = vsyncpa [#allocation4], 0
    // Predicated region
    $region2: #{tpu_custom_call.1} parent=1 // pred_check
      _
    $region3: #{tpu_custom_call.1} parent=1 // pred_check_branch
      %11 = sbr.rel (0) target = $region5
    $region4: #{tpu_custom_call.1} parent=1 // pred_region
      %s13 = ssub.s32 128, 128
      %14 = vsyncadd [#allocation3], %s13
      %s16 = sshll.u32 [#allocation2], 4
      %s17 = int_to_ptr.vmem [resolvable:$true] %s16
      %19 = dma.hbm_to_vmem [thread:$0]  %s0, 128, %s17, [#allocation3]
    $region5: #{tpu_custom_call.1} parent=1 // pred_fallthru
      _
    // Predicated region
    $region6: #{tpu_custom_call.1} parent=1 // pred_check
      _
    $region7: #{tpu_custom_call.1} parent=1 // pred_check_branch
      %21 = sbr.rel (0) target = $region9
    $region8: #{tpu_custom_call.1} parent=1 // pred_region
      %s23 = ssub.s32 128, 128
      %24 = vsyncadd [#allocation6], %s23
      %s26 = sshll.u32 [#allocation5], 4
      %s27 = int_to_ptr.vmem [resolvable:$true] %s26
      %29 = dma.hbm_to_vmem [thread:$0]  %s1, 128, %s27, [#allocation6]
    $region9: #{tpu_custom_call.1} parent=1 // pred_fallthru
      _
    // Predicated region
    $region10: #{tpu_custom_call.1} parent=1 // pred_check
      _
    $region11: #{tpu_custom_call.1} parent=1 // pred_check_branch
      %31 = sbr.rel (0) target = $region13
    $region12: #{tpu_custom_call.1} parent=1 // pred_region
      %32 = dma.done [#allocation3], 128
    $region13: #{tpu_custom_call.1} parent=1 // pred_fallthru
      _
    // Predicated region
    $region14: #{tpu_custom_call.1} parent=1 // pred_check
      _
    $region15: #{tpu_custom_call.1} parent=1 // pred_check_branch
      %34 = sbr.rel (0) target = $region17
    $region16: #{tpu_custom_call.1} parent=1 // pred_region
      %35 = dma.done [#allocation6], 128
    $region17: #{tpu_custom_call.1} parent=1 // pred_fallthru
      _
    %v36 = vld [vmem:[#allocation5] sm:$0xff]
    %v37 = vld [vmem:[#allocation2] sm:$0xff]
    %v38 = vadd.f32 %v36, %v37
    %39 = vst [vmem:[#allocation7] sm:$0xff] %v38
    // Predicated region
    $region18: #{tpu_custom_call.1} parent=1 // pred_check
      _
    $region19: #{tpu_custom_call.1} parent=1 // pred_check_branch
      %41 = sbr.rel (0) target = $region21
    $region20: #{tpu_custom_call.1} parent=1 // pred_region
      %s43 = ssub.s32 128, 128
      %44 = vsyncadd [#allocation4], %s43
      %s46 = sshll.u32 [#allocation7], 4
      %s47 = int_to_ptr.vmem [resolvable:$true] %s46
      %49 = dma.vmem_to_hbm [thread:$0]  %s47, 128, %s2, [#allocation4]
    $region21: #{tpu_custom_call.1} parent=1 // pred_fallthru
      _
    // Predicated region
    $region22: #{tpu_custom_call.1} parent=1 // pred_check
      _
    $region23: #{tpu_custom_call.1} parent=1 // pred_check_branch
      %51 = sbr.rel (0) target = $region25
    $region24: #{tpu_custom_call.1} parent=1 // pred_region
      %52 = dma.done [#allocation4], 128
    $region25: #{tpu_custom_call.1} parent=1 // pred_fallthru
      _
    %53 = vsyncpa [#allocation3], 1
    %54 = vsyncpa [#allocation6], 1
    %55 = vsyncpa [#allocation4], 1

// kernel: _forward_jit.12
$region0: #{_forward_jit.12}
  #allocation0 [shape = 'u32[]', space=smem, size = 0x4, offset = 0x4, fixed_abs, tag = 'smem constant byte address 0x4 - core index']
  #allocation1 [shape = 'u32[144,128]{1,0:T(1,128)}', space=vmem, size = 0x12000, scoped, tag = 'internal scratch']
  %s0 = inlined_call_operand.hbm [shape: bf16[48,128], index: 0, kind: input, shape index: {}]
  %s1 = inlined_call_operand.hbm [shape: bf16[128,128], index: 1, kind: input, shape index: {}]
  %s2 = inlined_call_operand.hbm [shape: f32[1,128], index: 2, kind: input, shape index: {}]
  %s3 = inlined_call_operand.hbm [shape: f32[48,128], index: 3, kind: input, shape index: {}]
  %s4 = inlined_call_operand.hbm [shape: f32[48,128], index: 4, kind: output, shape index: {}]
  %s5 = sld [smem:[#allocation0]]
  $region42: #{_forward_jit.12} parent=0
    _
  %s7 = ssub.s32 1, %s5
  %s8 = scalar_select 0, %s7, %s5
  $region1: #{_forward_jit.12} parent=0
    #allocation2 [shape = 'u8[12288]{0}', space=vmem, size = 0x3000, scoped, tag = 'input window, operand 0, single buffered']
    #allocation3 [shape = 's32[1]{0}', space=sflag, size = 0x4, scoped, tag = 'scoped memory for _forward_jit.12']
    #allocation4 [shape = 's32[1]{0}', space=sflag, size = 0x4, scoped, tag = 'scoped memory for _forward_jit.12']
    #allocation5 [shape = 'u8[32768]{0}', space=vmem, size = 0x8000, scoped, tag = 'input window, operand 1, single buffered']
    #allocation6 [shape = 's32[1]{0}', space=sflag, size = 0x4, scoped, tag = 'scoped memory for _forward_jit.12']
    #allocation7 [shape = 'u8[512]{0}', space=vmem, size = 0x400, scoped, tag = 'input window, operand 2, single buffered']
    #allocation8 [shape = 'u8[24576]{0}', space=vmem, size = 0x6000, scoped, tag = 'input window, operand 3, single buffered']
    #allocation9 [shape = 's32[1]{0}', space=sflag, size = 0x4, scoped, tag = 'scoped memory for _forward_jit.12']
    #allocation10 [shape = 'u8[24576]{0}', space=vmem, size = 0x6000, scoped, tag = 'output window, operand 0, single buffered']
    %9 = vsyncpa [#allocation3], 0
    %10 = vsyncpa [#allocation6], 0
    %11 = vsyncpa [#allocation9], 0
    %12 = vsyncpa [#allocation4], 0
    // Predicated region
    $region2: #{_forward_jit.12} parent=1 // pred_check
      _
    $region3: #{_forward_jit.12} parent=1 // pred_check_branch
      %14 = sbr.rel (0) target = $region5
    $region4: #{_forward_jit.12} parent=1 // pred_region
      %s16 = ssub.s32 384, 384
      %17 = vsyncadd [#allocation3], %s16
      %s18 = sshll.u32 [#allocation2], 4
      %s19 = int_to_ptr.vmem [resolvable:$true] %s18
      %24 = dma.hbm_to_vmem [thread:$0]  %s0, 384, %s19, [#allocation3], 64, 64, 4
    $region5: #{_forward_jit.12} parent=1 // pred_fallthru
      _
    // Predicated region
    $region6: #{_forward_jit.12} parent=1 // pred_check
      _
    $region7: #{_forward_jit.12} parent=1 // pred_check_branch
      %26 = sbr.rel (0) target = $region9
    $region8: #{_forward_jit.12} parent=1 // pred_region
      %s28 = ssub.s32 1024, 1024
      %29 = vsyncadd [#allocation6], %s28
      %s30 = sshll.u32 [#allocation5], 4
      %s31 = int_to_ptr.vmem [resolvable:$true] %s30
      %36 = dma.hbm_to_vmem [thread:$0]  %s1, 1024, %s31, [#allocation6], 64, 64, 4
    $region9: #{_forward_jit.12} parent=1 // pred_fallthru
      _
    // Predicated region
    $region10: #{_forward_jit.12} parent=1 // pred_check
      _
    $region11: #{_forward_jit.12} parent=1 // pred_check_branch
      %38 = sbr.rel (0) target = $region13
    $region12: #{_forward_jit.12} parent=1 // pred_region
      %s40 = ssub.s32 16, 16
      %41 = vsyncadd [#allocation6], %s40
      %s43 = sshll.u32 [#allocation7], 4
      %s44 = int_to_ptr.vmem [resolvable:$true] %s43
      %46 = dma.hbm_to_vmem [thread:$0]  %s2, 16, %s44, [#allocation6]
    $region13: #{_forward_jit.12} parent=1 // pred_fallthru
      _
    // Predicated region
    $region14: #{_forward_jit.12} parent=1 // pred_check
      _
    $region15: #{_forward_jit.12} parent=1 // pred_check_branch
      %48 = sbr.rel (0) target = $region17
    $region16: #{_forward_jit.12} parent=1 // pred_region
      %s50 = ssub.s32 768, 768
      %51 = vsyncadd [#allocation9], %s50
      %s52 = sshll.u32 [#allocation8], 4
      %s53 = int_to_ptr.vmem [resolvable:$true] %s52
      %58 = dma.hbm_to_vmem [thread:$0]  %s3, 768, %s53, [#allocation9], 128, 128, 8
    $region17: #{_forward_jit.12} parent=1 // pred_fallthru
      _
    // Predicated region
    $region18: #{_forward_jit.12} parent=1 // pred_check
      _
    $region19: #{_forward_jit.12} parent=1 // pred_check_branch
      %60 = sbr.rel (0) target = $region21
    $region20: #{_forward_jit.12} parent=1 // pred_region
      %61 = dma.done [#allocation3], 384
    $region21: #{_forward_jit.12} parent=1 // pred_fallthru
      _
    // Predicated region
    $region22: #{_forward_jit.12} parent=1 // pred_check
      _
    $region23: #{_forward_jit.12} parent=1 // pred_check_branch
      %63 = sbr.rel (0) target = $region25
    $region24: #{_forward_jit.12} parent=1 // pred_region
      %64 = dma.done [#allocation6], 1024
    $region25: #{_forward_jit.12} parent=1 // pred_fallthru
      _
    // Predicated region
    $region26: #{_forward_jit.12} parent=1 // pred_check
      _
    $region27: #{_forward_jit.12} parent=1 // pred_check_branch
      %66 = sbr.rel (0) target = $region29
    $region28: #{_forward_jit.12} parent=1 // pred_region
      %67 = dma.done [#allocation6], 16
    $region29: #{_forward_jit.12} parent=1 // pred_fallthru
      _
    // Predicated region
    $region30: #{_forward_jit.12} parent=1 // pred_check
      _
    $region31: #{_forward_jit.12} parent=1 // pred_check_branch
      %69 = sbr.rel (0) target = $region33
    $region32: #{_forward_jit.12} parent=1 // pred_region
      %70 = dma.done [#allocation9], 768
    $region33: #{_forward_jit.12} parent=1 // pred_fallthru
      _
    %v72 = vld [vmem:[#allocation2] sm:$0xf]
    %v73 = vld [vmem:[#allocation2 + $0x4] sm:$0xf]
    %v74 = vld [vmem:[#allocation2 + $0x8] sm:$0xf]
    %v75 = vld [vmem:[#allocation2 + $0xc] sm:$0xf]
    %v76 = vld [vmem:[#allocation2 + $0x10] sm:$0xf]
    %v77 = vld [vmem:[#allocation2 + $0x14] sm:$0xf]
    %v78 = vld [vmem:[#allocation5] sm:$0xf]
    %v79 = vld [vmem:[#allocation5 + $0x4] sm:$0xf]
    %v80 = vld [vmem:[#allocation5 + $0x8] sm:$0xf]
    %v81 = vld [vmem:[#allocation5 + $0xc] sm:$0xf]
    %v82 = vld [vmem:[#allocation5 + $0x10] sm:$0xf]
    %v83 = vld [vmem:[#allocation5 + $0x14] sm:$0xf]
    %v84 = vld [vmem:[#allocation5 + $0x18] sm:$0xf]
    %v85 = vld [vmem:[#allocation5 + $0x1c] sm:$0xf]
    %v86 = vld [vmem:[#allocation5 + $0x20] sm:$0xf]
    %v87 = vld [vmem:[#allocation5 + $0x24] sm:$0xf]
    %v88 = vld [vmem:[#allocation5 + $0x28] sm:$0xf]
    %v89 = vld [vmem:[#allocation5 + $0x2c] sm:$0xf]
    %v90 = vld [vmem:[#allocation5 + $0x30] sm:$0xf]
    %v91 = vld [vmem:[#allocation5 + $0x34] sm:$0xf]
    %v92 = vld [vmem:[#allocation5 + $0x38] sm:$0xf]
    %v93 = vld [vmem:[#allocation5 + $0x3c] sm:$0xf]
    %v94 = vld [vmem:[#allocation7] sm:$0x1]
    %v96 = vlaneseq
    %v97 = vshrl.u32 %v96, 7
    %v98 = vsub.s32 0, %v97
    %v99 = vrot.slane %v94, %v98
    %v107 = vunpack.c.l.b16 %v72
    %v108 = vunpack.c.l.b16 %v73
    %v109 = vunpack.c.l.b16 %v74
    %v110 = vunpack.c.l.b16 %v75
    %v111 = vunpack.c.l.b16 %v76
    %v112 = vunpack.c.l.b16 %v77
    %v113 = vpack.c.b16 %v108, %v107
    %v114 = vpack.c.b16 %v110, %v109
    %v115 = vpack.c.b16 %v112, %v111
    %v135 = vunpack.c.l.b16 %v78
    %v136 = vunpack.c.l.b16 %v79
    %v137 = vunpack.c.l.b16 %v80
    %v138 = vunpack.c.l.b16 %v81
    %v139 = vunpack.c.l.b16 %v82
    %v140 = vunpack.c.l.b16 %v83
    %v141 = vunpack.c.l.b16 %v84
    %v142 = vunpack.c.l.b16 %v85
    %v143 = vunpack.c.l.b16 %v86
    %v144 = vunpack.c.l.b16 %v87
    %v145 = vunpack.c.l.b16 %v88
    %v146 = vunpack.c.l.b16 %v89
    %v147 = vunpack.c.l.b16 %v90
    %v148 = vunpack.c.l.b16 %v91
    %v149 = vunpack.c.l.b16 %v92
    %v150 = vunpack.c.l.b16 %v93
    %v151 = vpack.c.b16 %v136, %v135
    %v152 = vpack.c.b16 %v138, %v137
    %v153 = vpack.c.b16 %v140, %v139
    %v154 = vpack.c.b16 %v142, %v141
    %v155 = vpack.c.b16 %v144, %v143
    %v156 = vpack.c.b16 %v146, %v145
    %v157 = vpack.c.b16 %v148, %v147
    %v158 = vpack.c.b16 %v150, %v149
    %167 = vmatprep.subr.bf16.mxu0 0
    %168 = vmatpush1.bf16.msra.mxu0 %v151
    %169 = vmatprep.subr.bf16.mxu0 0
    %170 = vmatpush1.bf16.msra.mxu0 %v152
    %171 = vmatprep.subr.bf16.mxu0 0
    %172 = vmatpush1.bf16.msra.mxu0 %v153
    %173 = vmatprep.subr.bf16.mxu0 0
    %174 = vmatpush1.bf16.msra.mxu0 %v154
    %175 = vmatprep.subr.bf16.mxu0 0
    %176 = vmatpush1.bf16.msra.mxu0 %v155
    %177 = vmatprep.subr.bf16.mxu0 0
    %178 = vmatpush1.bf16.msra.mxu0 %v156
    %179 = vmatprep.subr.bf16.mxu0 0
    %180 = vmatpush1.bf16.msra.mxu0 %v157
    %181 = vmatprep.subr.bf16.mxu0 0
    %182 = vmatpush1.bf16.msra.mxu0 %v158
    %183 = vmatprep.subr.bf16.mxu0 0
    %184 = vmatpush1.bf16.msra.mxu0 0
    %185 = vmatprep.subr.bf16.mxu0 0
    %186 = vmatpush1.bf16.msra.mxu0 0
    %187 = vmatprep.subr.bf16.mxu0 0
    %188 = vmatpush1.bf16.msra.mxu0 0
    %189 = vmatprep.subr.bf16.mxu0 0
    %190 = vmatpush1.bf16.msra.mxu0 0
    %191 = vmatprep.subr.bf16.mxu0 0
    %192 = vmatpush1.bf16.msra.mxu0 0
    %193 = vmatprep.subr.bf16.mxu0 0
    %194 = vmatpush1.bf16.msra.mxu0 0
    %195 = vmatprep.subr.bf16.mxu0 0
    %196 = vmatpush1.bf16.msra.mxu0 0
    %197 = vmatprep.subr.bf16.mxu0 0
    %198 = vmatpush1.bf16.msra.mxu0 0
    %199 = vmatprep.mubr.bf16.mxu0 0
    %200 = vmatmul.mubr.bf16.gmra.mrb[0].mxu0 %v113
    %v201 = vpop.f32.mrb[0].mxu0
    %v202 = vadd.f32 %v99, %v201
    %v203 = vpop.f32.mrb[0].mxu0
    %v204 = vpop.f32.mrb[0].mxu0
    %v205 = vadd.f32 %v99, %v204
    %v206 = vpop.f32.mrb[0].mxu0
    %207 = vmatprep.mubr.bf16.mxu0 0
    %208 = vmatmul.mubr.bf16.gmra.mrb[0].mxu0 %v114
    %v209 = vpop.f32.mrb[0].mxu0
    %v210 = vadd.f32 %v99, %v209
    %v211 = vpop.f32.mrb[0].mxu0
    %v212 = vpop.f32.mrb[0].mxu0
    %v213 = vadd.f32 %v99, %v212
    %v214 = vpop.f32.mrb[0].mxu0
    %215 = vmatprep.mubr.bf16.mxu0 0
    %216 = vmatmul.mubr.bf16.gmra.mrb[0].mxu0 %v115
    %v217 = vpop.f32.mrb[0].mxu0
    %v218 = vadd.f32 %v99, %v217
    %v219 = vpop.f32.mrb[0].mxu0
    %v220 = vpop.f32.mrb[0].mxu0
    %v221 = vadd.f32 %v99, %v220
    %v222 = vpop.f32.mrb[0].mxu0
    %223 = vdwg.mxu0
    %v224 = vld [vmem:[#allocation8] sm:$0xff]
    %v225 = vld [vmem:[#allocation8 + $0x8] sm:$0xff]
    %v226 = vld [vmem:[#allocation8 + $0x10] sm:$0xff]
    %v227 = vld [vmem:[#allocation8 + $0x18] sm:$0xff]
    %v228 = vld [vmem:[#allocation8 + $0x20] sm:$0xff]
    %v229 = vld [vmem:[#allocation8 + $0x28] sm:$0xff]
    %v230 = vadd.f32 %v202, %v224
    %v231 = vadd.f32 %v205, %v225
    %v232 = vadd.f32 %v210, %v226
    %v233 = vadd.f32 %v213, %v227
    %v234 = vadd.f32 %v218, %v228
    %v235 = vadd.f32 %v221, %v229
    %236 = vst [vmem:[#allocation10] sm:$0xff] %v230
    %237 = vst [vmem:[#allocation10 + $0x8] sm:$0xff] %v231
    %238 = vst [vmem:[#allocation10 + $0x10] sm:$0xff] %v232
    %239 = vst [vmem:[#allocation10 + $0x18] sm:$0xff] %v233
    %240 = vst [vmem:[#allocation10 + $0x20] sm:$0xff] %v234
    %241 = vst [vmem:[#allocation10 + $0x28] sm:$0xff] %v235
    // Predicated region
    $region34: #{_forward_jit.12} parent=1 // pred_check
      _
    $region35: #{_forward_jit.12} parent=1 // pred_check_branch
      %243 = sbr.rel (0) target = $region37
    $region36: #{_forward_jit.12} parent=1 // pred_region
      %s245 = ssub.s32 768, 768
      %246 = vsyncadd [#allocation4], %s245
      %s247 = sshll.u32 [#allocation10], 4
      %s248 = int_to_ptr.vmem [resolvable:$true] %s247
      %253 = dma.vmem_to_hbm [thread:$0]  %s248, 768, %s4, [#allocation4], 128, 128, 8
    $region37: #{_forward_jit.12} parent=1 // pred_fallthru
      _
    // Predicated region
    $region38: #{_forward_jit.12} parent=1 // pred_check
      _
    $region39: #{_forward_jit.12} parent=1 // pred_check_branch
      %255 = sbr.rel (0) target = $region41
    $region40: #{_forward_jit.12} parent=1 // pred_region
      %256 = dma.done [#allocation4], 768
    $region41: #{_forward_jit.12} parent=1 // pred_fallthru
      _
    %257 = vsyncpa [#allocation3], 1
    %258 = vsyncpa [#allocation6], 1
    %259 = vsyncpa [#allocation9], 1
    %260 = vsyncpa [#allocation4], 1

// kernel: _forward_jit.10
$region0: #{_forward_jit.10}
  #allocation0 [shape = 'u32[]', space=smem, size = 0x4, offset = 0x4, fixed_abs, tag = 'smem constant byte address 0x4 - core index']
  #allocation1 [shape = 'u32[144,128]{1,0:T(1,128)}', space=vmem, size = 0x12000, scoped, tag = 'internal scratch']
  %s0 = inlined_call_operand.hbm [shape: f32[48,128], index: 0, kind: input, shape index: {}]
  %s1 = inlined_call_operand.hbm [shape: f32[2,128], index: 1, kind: input, shape index: {}]
  %s2 = inlined_call_operand.hbm [shape: bf16[128,384], index: 2, kind: input, shape index: {}]
  %s3 = inlined_call_operand.hbm [shape: bf16[48,384], index: 3, kind: output, shape index: {}]
  %s4 = sld [smem:[#allocation0]]
  $region34: #{_forward_jit.10} parent=0
    _
  %s6 = ssub.s32 1, %s4
  %s7 = scalar_select 0, %s6, %s4
  $region1: #{_forward_jit.10} parent=0
    #allocation2 [shape = 'u8[24576]{0}', space=vmem, size = 0x6000, scoped, tag = 'input window, operand 0, single buffered']
    #allocation3 [shape = 's32[1]{0}', space=sflag, size = 0x4, scoped, tag = 'scoped memory for _forward_jit.10']
    #allocation4 [shape = 's32[1]{0}', space=sflag, size = 0x4, scoped, tag = 'scoped memory for _forward_jit.10']
    #allocation5 [shape = 'u8[1024]{0}', space=vmem, size = 0x400, scoped, tag = 'input window, operand 1, single buffered']
    #allocation6 [shape = 's32[1]{0}', space=sflag, size = 0x4, scoped, tag = 'scoped memory for _forward_jit.10']
    #allocation7 [shape = 'u8[98304]{0}', space=vmem, size = 0x18000, scoped, tag = 'input window, operand 2, single buffered']
    #allocation8 [shape = 'u8[36864]{0}', space=vmem, size = 0x9000, scoped, tag = 'output window, operand 0, single buffered']
    %8 = vsyncpa [#allocation3], 0
    %9 = vsyncpa [#allocation6], 0
    %10 = vsyncpa [#allocation4], 0
    // Predicated region
    $region2: #{_forward_jit.10} parent=1 // pred_check
      _
    $region3: #{_forward_jit.10} parent=1 // pred_check_branch
      %12 = sbr.rel (0) target = $region5
    $region4: #{_forward_jit.10} parent=1 // pred_region
      %s14 = ssub.s32 768, 768
      %15 = vsyncadd [#allocation3], %s14
      %s16 = sshll.u32 [#allocation2], 4
      %s17 = int_to_ptr.vmem [resolvable:$true] %s16
      %22 = dma.hbm_to_vmem [thread:$0]  %s0, 768, %s17, [#allocation3], 128, 128, 8
    $region5: #{_forward_jit.10} parent=1 // pred_fallthru
      _
    // Predicated region
    $region6: #{_forward_jit.10} parent=1 // pred_check
      _
    $region7: #{_forward_jit.10} parent=1 // pred_check_branch
      %24 = sbr.rel (0) target = $region9
    $region8: #{_forward_jit.10} parent=1 // pred_region
      %s26 = ssub.s32 32, 32
      %27 = vsyncadd [#allocation6], %s26
      %s29 = sshll.u32 [#allocation5], 4
      %s30 = int_to_ptr.vmem [resolvable:$true] %s29
      %32 = dma.hbm_to_vmem [thread:$0]  %s1, 32, %s30, [#allocation6]
    $region9: #{_forward_jit.10} parent=1 // pred_fallthru
      _
    // Predicated region
    $region10: #{_forward_jit.10} parent=1 // pred_check
      _
    $region11: #{_forward_jit.10} parent=1 // pred_check_branch
      %34 = sbr.rel (0) target = $region13
    $region12: #{_forward_jit.10} parent=1 // pred_region
      %s36 = ssub.s32 3072, 3072
      %37 = vsyncadd [#allocation6], %s36
      %s38 = sshll.u32 [#allocation7], 4
      %s39 = int_to_ptr.vmem [resolvable:$true] %s38
      %44 = dma.hbm_to_vmem [thread:$0]  %s2, 3072, %s39, [#allocation6], 192, 192, 12
    $region13: #{_forward_jit.10} parent=1 // pred_fallthru
      _
    // Predicated region
    $region14: #{_forward_jit.10} parent=1 // pred_check
      _
    $region15: #{_forward_jit.10} parent=1 // pred_check_branch
      %46 = sbr.rel (0) target = $region17
    $region16: #{_forward_jit.10} parent=1 // pred_region
      %47 = dma.done [#allocation3], 768
    $region17: #{_forward_jit.10} parent=1 // pred_fallthru
      _
    // Predicated region
    $region18: #{_forward_jit.10} parent=1 // pred_check
      _
    $region19: #{_forward_jit.10} parent=1 // pred_check_branch
      %49 = sbr.rel (0) target = $region21
    $region20: #{_forward_jit.10} parent=1 // pred_region
      %50 = dma.done [#allocation6], 32
    $region21: #{_forward_jit.10} parent=1 // pred_fallthru
      _
    // Predicated region
    $region22: #{_forward_jit.10} parent=1 // pred_check
      _
    $region23: #{_forward_jit.10} parent=1 // pred_check_branch
      %52 = sbr.rel (0) target = $region25
    $region24: #{_forward_jit.10} parent=1 // pred_region
      %53 = dma.done [#allocation6], 3072
    $region25: #{_forward_jit.10} parent=1 // pred_fallthru
      _
    %v55 = vld [vmem:[#allocation2] sm:$0xff]
    %v56 = vld [vmem:[#allocation2 + $0x8] sm:$0xff]
    %v57 = vld [vmem:[#allocation2 + $0x10] sm:$0xff]
    %v58 = vld [vmem:[#allocation2 + $0x18] sm:$0xff]
    %v59 = vld [vmem:[#allocation2 + $0x20] sm:$0xff]
    %v60 = vld [vmem:[#allocation2 + $0x28] sm:$0xff]
    %61 = vadd.xlane.f32.xlu0 %v55
    %v62 = vpop.xlane.xlu0 %61
    %63 = vadd.xlane.f32.xlu0 %v56
    %v64 = vpop.xlane.xlu0 %63
    %65 = vadd.xlane.f32.xlu0 %v57
    %v66 = vpop.xlane.xlu0 %65
    %67 = vadd.xlane.f32.xlu0 %v58
    %v68 = vpop.xlane.xlu0 %67
    %69 = vadd.xlane.f32.xlu0 %v59
    %v70 = vpop.xlane.xlu0 %69
    %71 = vadd.xlane.f32.xlu0 %v60
    %v72 = vpop.xlane.xlu0 %71
    %v73 = vrcp.pop 128.0
    %v74 = vmul.f32 %v62, %v73
    %v75 = vmul.f32 %v64, %v73
    %v76 = vmul.f32 %v66, %v73
    %v77 = vmul.f32 %v68, %v73
    %v78 = vmul.f32 %v70, %v73
    %v79 = vmul.f32 %v72, %v73
    %v80 = vsub.f32 %v55, %v74
    %v81 = vsub.f32 %v56, %v75
    %v82 = vsub.f32 %v57, %v76
    %v83 = vsub.f32 %v58, %v77
    %v84 = vsub.f32 %v59, %v78
    %v85 = vsub.f32 %v60, %v79
    %v86 = vmul.f32 %v80, %v80
    %v87 = vmul.f32 %v81, %v81
    %v88 = vmul.f32 %v82, %v82
    %v89 = vmul.f32 %v83, %v83
    %v90 = vmul.f32 %v84, %v84
    %v91 = vmul.f32 %v85, %v85
    %92 = vadd.xlane.f32.xlu0 %v86
    %v93 = vpop.xlane.xlu0 %92
    %94 = vadd.xlane.f32.xlu0 %v87
    %v95 = vpop.xlane.xlu0 %94
    %96 = vadd.xlane.f32.xlu0 %v88
    %v97 = vpop.xlane.xlu0 %96
    %98 = vadd.xlane.f32.xlu0 %v89
    %v99 = vpop.xlane.xlu0 %98
    %100 = vadd.xlane.f32.xlu0 %v90
    %v101 = vpop.xlane.xlu0 %100
    %102 = vadd.xlane.f32.xlu0 %v91
    %v103 = vpop.xlane.xlu0 %102
    %v104 = vmul.f32 %v93, %v73
    %v105 = vmul.f32 %v95, %v73
    %v106 = vmul.f32 %v97, %v73
    %v107 = vmul.f32 %v99, %v73
    %v108 = vmul.f32 %v101, %v73
    %v109 = vmul.f32 %v103, %v73
    %v110 = vadd.f32 %v104, 1e-05
    %v111 = vadd.f32 %v105, 1e-05
    %v112 = vadd.f32 %v106, 1e-05
    %v113 = vadd.f32 %v107, 1e-05
    %v114 = vadd.f32 %v108, 1e-05
    %v115 = vadd.f32 %v109, 1e-05
    %v116 = vrsqrt.pop %v110
    %v117 = vrsqrt.pop %v111
    %v118 = vrsqrt.pop %v112
    %v119 = vrsqrt.pop %v113
    %v120 = vrsqrt.pop %v114
    %v121 = vrsqrt.pop %v115
    %v122 = vmul.f32 %v80, %v116
    %v123 = vmul.f32 %v81, %v117
    %v124 = vmul.f32 %v82, %v118
    %v125 = vmul.f32 %v83, %v119
    %v126 = vmul.f32 %v84, %v120
    %v127 = vmul.f32 %v85, %v121
    %v128 = vld [vmem:[#allocation5] sm:$0x3]
    %v129 = vlaneseq
    %v130 = vshrl.u32 %v129, 7
    %v131 = vsub.s32 0, %v130
    %v132 = vrot.slane %v128, %v131
    %v133 = vmul.f32 %v122, %v132
    %v134 = vmul.f32 %v123, %v132
    %v135 = vmul.f32 %v124, %v132
    %v136 = vmul.f32 %v125, %v132
    %v137 = vmul.f32 %v126, %v132
    %v138 = vmul.f32 %v127, %v132
    %v139 = vlaneseq
    %v140 = vshrl.u32 %v139, 7
    %v141 = vsub.s32 1, %v140
    %v142 = vrot.slane %v128, %v141
    %v143 = vadd.f32 %v133, %v142
    %v144 = vadd.f32 %v134, %v142
    %v145 = vadd.f32 %v135, %v142
    %v146 = vadd.f32 %v136, %v142
    %v147 = vadd.f32 %v137, %v142
    %v148 = vadd.f32 %v138, %v142
    %v149 = vpack.c.bf16 %v144, %v143
    %v150 = vpack.c.bf16 %v146, %v145
    %v151 = vpack.c.bf16 %v148, %v147
    %v152 = vld [vmem:[#allocation7] sm:$0xff]
    %v153 = vld [vmem:[#allocation7 + $0x8] sm:$0xf]
    %v154 = vld [vmem:[#allocation7 + $0xc] sm:$0xff]
    %v155 = vld [vmem:[#allocation7 + $0x14] sm:$0xf]
    %v156 = vld [vmem:[#allocation7 + $0x18] sm:$0xff]
    %v157 = vld [vmem:[#allocation7 + $0x20] sm:$0xf]
    %v158 = vld [vmem:[#allocation7 + $0x24] sm:$0xff]
    %v159 = vld [vmem:[#allocation7 + $0x2c] sm:$0xf]
    %v160 = vld [vmem:[#allocation7 + $0x30] sm:$0xff]
    %v161 = vld [vmem:[#allocation7 + $0x38] sm:$0xf]
    %v162 = vld [vmem:[#allocation7 + $0x3c] sm:$0xff]
    %v163 = vld [vmem:[#allocation7 + $0x44] sm:$0xf]
    %v164 = vld [vmem:[#allocation7 + $0x48] sm:$0xff]
    %v165 = vld [vmem:[#allocation7 + $0x50] sm:$0xf]
    %v166 = vld [vmem:[#allocation7 + $0x54] sm:$0xff]
    %v167 = vld [vmem:[#allocation7 + $0x5c] sm:$0xf]
    %v168 = vld [vmem:[#allocation7 + $0x60] sm:$0xff]
    %v169 = vld [vmem:[#allocation7 + $0x68] sm:$0xf]
    %v170 = vld [vmem:[#allocation7 + $0x6c] sm:$0xff]
    %v171 = vld [vmem:[#allocation7 + $0x74] sm:$0xf]
    %v172 = vld [vmem:[#allocation7 + $0x78] sm:$0xff]
    %v173 = vld [vmem:[#allocation7 + $0x80] sm:$0xf]
    %v174 = vld [vmem:[#allocation7 + $0x84] sm:$0xff]
    %v175 = vld [vmem:[#allocation7 + $0x8c] sm:$0xf]
    %v176 = vld [vmem:[#allocation7 + $0x90] sm:$0xff]
    %v177 = vld [vmem:[#allocation7 + $0x98] sm:$0xf]
    %v178 = vld [vmem:[#allocation7 + $0x9c] sm:$0xff]
    %v179 = vld [vmem:[#allocation7 + $0xa4] sm:$0xf]
    %v180 = vld [vmem:[#allocation7 + $0xa8] sm:$0xff]
    %v181 = vld [vmem:[#allocation7 + $0xb0] sm:$0xf]
    %v182 = vld [vmem:[#allocation7 + $0xb4] sm:$0xff]
    %v183 = vld [vmem:[#allocation7 + $0xbc] sm:$0xf]
    %v216 = vunpack.c.l.b16 %v152
    %v217 = vunpack.c.h.b16 %v152
    %v218 = vunpack.c.l.b16 %v153
    %v219 = vunpack.c.l.b16 %v154
    %v220 = vunpack.c.h.b16 %v154
    %v221 = vunpack.c.l.b16 %v155
    %v222 = vunpack.c.l.b16 %v156
    %v223 = vunpack.c.h.b16 %v156
    %v224 = vunpack.c.l.b16 %v157
    %v225 = vunpack.c.l.b16 %v158
    %v226 = vunpack.c.h.b16 %v158
    %v227 = vunpack.c.l.b16 %v159
    %v228 = vunpack.c.l.b16 %v160
    %v229 = vunpack.c.h.b16 %v160
    %v230 = vunpack.c.l.b16 %v161
    %v231 = vunpack.c.l.b16 %v162
    %v232 = vunpack.c.h.b16 %v162
    %v233 = vunpack.c.l.b16 %v163
    %v234 = vunpack.c.l.b16 %v164
    %v235 = vunpack.c.h.b16 %v164
    %v236 = vunpack.c.l.b16 %v165
    %v237 = vunpack.c.l.b16 %v166
    %v238 = vunpack.c.h.b16 %v166
    %v239 = vunpack.c.l.b16 %v167
    %v240 = vunpack.c.l.b16 %v168
    %v241 = vunpack.c.h.b16 %v168
    %v242 = vunpack.c.l.b16 %v169
    %v243 = vunpack.c.l.b16 %v170
    %v244 = vunpack.c.h.b16 %v170
    %v245 = vunpack.c.l.b16 %v171
    %v246 = vunpack.c.l.b16 %v172
    %v247 = vunpack.c.h.b16 %v172
    %v248 = vunpack.c.l.b16 %v173
    %v249 = vunpack.c.l.b16 %v174
    %v250 = vunpack.c.h.b16 %v174
    %v251 = vunpack.c.l.b16 %v175
    %v252 = vunpack.c.l.b16 %v176
    %v253 = vunpack.c.h.b16 %v176
    %v254 = vunpack.c.l.b16 %v177
    %v255 = vunpack.c.l.b16 %v178
    %v256 = vunpack.c.h.b16 %v178
    %v257 = vunpack.c.l.b16 %v179
    %v258 = vunpack.c.l.b16 %v180
    %v259 = vunpack.c.h.b16 %v180
    %v260 = vunpack.c.l.b16 %v181
    %v261 = vunpack.c.l.b16 %v182
    %v262 = vunpack.c.h.b16 %v182
    %v263 = vunpack.c.l.b16 %v183
    %v264 = vpack.c.b16 %v219, %v216
    %v265 = vpack.c.b16 %v220, %v217
    %v266 = vpack.c.b16 %v221, %v218
    %v267 = vpack.c.b16 %v225, %v222
    %v268 = vpack.c.b16 %v226, %v223
    %v269 = vpack.c.b16 %v227, %v224
    %v270 = vpack.c.b16 %v231, %v228
    %v271 = vpack.c.b16 %v232, %v229
    %v272 = vpack.c.b16 %v233, %v230
    %v273 = vpack.c.b16 %v237, %v234
    %v274 = vpack.c.b16 %v238, %v235
    %v275 = vpack.c.b16 %v239, %v236
    %v276 = vpack.c.b16 %v243, %v240
    %v277 = vpack.c.b16 %v244, %v241
    %v278 = vpack.c.b16 %v245, %v242
    %v279 = vpack.c.b16 %v249, %v246
    %v280 = vpack.c.b16 %v250, %v247
    %v281 = vpack.c.b16 %v251, %v248
    %v282 = vpack.c.b16 %v255, %v252
    %v283 = vpack.c.b16 %v256, %v253
    %v284 = vpack.c.b16 %v257, %v254
    %v285 = vpack.c.b16 %v261, %v258
    %v286 = vpack.c.b16 %v262, %v259
    %v287 = vpack.c.b16 %v263, %v260
    %312 = vmatprep.subr.bf16.mxu0 %v265
    %313 = vmatpush1.bf16.msra.mxu0 %v264
    %314 = vmatprep.subr.bf16.mxu0 %v268
    %315 = vmatpush1.bf16.msra.mxu0 %v267
    %316 = vmatprep.subr.bf16.mxu0 %v271
    %317 = vmatpush1.bf16.msra.mxu0 %v270
    %318 = vmatprep.subr.bf16.mxu0 %v274
    %319 = vmatpush1.bf16.msra.mxu0 %v273
    %320 = vmatprep.subr.bf16.mxu0 %v277
    %321 = vmatpush1.bf16.msra.mxu0 %v276
    %322 = vmatprep.subr.bf16.mxu0 %v280
    %323 = vmatpush1.bf16.msra.mxu0 %v279
    %324 = vmatprep.subr.bf16.mxu0 %v283
    %325 = vmatpush1.bf16.msra.mxu0 %v282
    %326 = vmatprep.subr.bf16.mxu0 %v286
    %327 = vmatpush1.bf16.msra.mxu0 %v285
    %328 = vmatprep.subr.bf16.mxu0 0
    %329 = vmatpush1.bf16.msra.mxu0 0
    %330 = vmatprep.subr.bf16.mxu0 0
    %331 = vmatpush1.bf16.msra.mxu0 0
    %332 = vmatprep.subr.bf16.mxu0 0
    %333 = vmatpush1.bf16.msra.mxu0 0
    %334 = vmatprep.subr.bf16.mxu0 0
    %335 = vmatpush1.bf16.msra.mxu0 0
    %336 = vmatprep.subr.bf16.mxu0 0
    %337 = vmatpush1.bf16.msra.mxu0 0
    %338 = vmatprep.subr.bf16.mxu0 0
    %339 = vmatpush1.bf16.msra.mxu0 0
    %340 = vmatprep.subr.bf16.mxu0 0
    %341 = vmatpush1.bf16.msra.mxu0 0
    %342 = vmatprep.subr.bf16.mxu0 0
    %343 = vmatpush1.bf16.msra.mxu0 0
    %344 = vmatprep.mubr.bf16.mxu0 0
    %345 = vmatmul.mubr.bf16.gmra.mrb[0].mxu0 %v149
    %v346 = vpop.f32.mrb[0].mxu0
    %v347 = vadd.f32 0.0, %v346
    %v348 = vpop.f32.mrb[0].mxu0
    %v349 = vadd.f32 0.0, %v348
    %v350 = vpop.f32.mrb[0].mxu0
    %v351 = vadd.f32 0.0, %v350
    %v352 = vpop.f32.mrb[0].mxu0
    %v353 = vadd.f32 0.0, %v352
    %354 = vmatprep.mubr.bf16.mxu0 0
    %355 = vmatmul.mubr.bf16.gmra.mrb[0].mxu0 %v150
    %v356 = vpop.f32.mrb[0].mxu0
    %v357 = vadd.f32 0.0, %v356
    %v358 = vpop.f32.mrb[0].mxu0
    %v359 = vadd.f32 0.0, %v358
    %v360 = vpop.f32.mrb[0].mxu0
    %v361 = vadd.f32 0.0, %v360
    %v362 = vpop.f32.mrb[0].mxu0
    %v363 = vadd.f32 0.0, %v362
    %364 = vmatprep.mubr.bf16.mxu0 0
    %365 = vmatmul.mubr.bf16.gmra.mrb[0].mxu0 %v151
    %v366 = vpop.f32.mrb[0].mxu0
    %v367 = vadd.f32 0.0, %v366
    %v368 = vpop.f32.mrb[0].mxu0
    %v369 = vadd.f32 0.0, %v368
    %v370 = vpop.f32.mrb[0].mxu0
    %v371 = vadd.f32 0.0, %v370
    %v372 = vpop.f32.mrb[0].mxu0
    %v373 = vadd.f32 0.0, %v372
    %374 = vdwg.mxu0
    %375 = vmatprep.subr.bf16.mxu0 0
    %376 = vmatpush1.bf16.msra.mxu0 %v266
    %377 = vmatprep.subr.bf16.mxu0 0
    %378 = vmatpush1.bf16.msra.mxu0 %v269
    %379 = vmatprep.subr.bf16.mxu0 0
    %380 = vmatpush1.bf16.msra.mxu0 %v272
    %381 = vmatprep.subr.bf16.mxu0 0
    %382 = vmatpush1.bf16.msra.mxu0 %v275
    %383 = vmatprep.subr.bf16.mxu0 0
    %384 = vmatpush1.bf16.msra.mxu0 %v278
    %385 = vmatprep.subr.bf16.mxu0 0
    %386 = vmatpush1.bf16.msra.mxu0 %v281
    %387 = vmatprep.subr.bf16.mxu0 0
    %388 = vmatpush1.bf16.msra.mxu0 %v284
    %389 = vmatprep.subr.bf16.mxu0 0
    %390 = vmatpush1.bf16.msra.mxu0 %v287
    %391 = vmatprep.subr.bf16.mxu0 0
    %392 = vmatpush1.bf16.msra.mxu0 0
    %393 = vmatprep.subr.bf16.mxu0 0
    %394 = vmatpush1.bf16.msra.mxu0 0
    %395 = vmatprep.subr.bf16.mxu0 0
    %396 = vmatpush1.bf16.msra.mxu0 0
    %397 = vmatprep.subr.bf16.mxu0 0
    %398 = vmatpush1.bf16.msra.mxu0 0
    %399 = vmatprep.subr.bf16.mxu0 0
    %400 = vmatpush1.bf16.msra.mxu0 0
    %401 = vmatprep.subr.bf16.mxu0 0
    %402 = vmatpush1.bf16.msra.mxu0 0
    %403 = vmatprep.subr.bf16.mxu0 0
    %404 = vmatpush1.bf16.msra.mxu0 0
    %405 = vmatprep.subr.bf16.mxu0 0
    %406 = vmatpush1.bf16.msra.mxu0 0
    %407 = vmatprep.mubr.bf16.mxu0 0
    %408 = vmatmul.mubr.bf16.gmra.mrb[0].mxu0 %v149
    %v409 = vpop.f32.mrb[0].mxu0
    %v410 = vadd.f32 0.0, %v409
    %v411 = vpop.f32.mrb[0].mxu0
    %v412 = vpop.f32.mrb[0].mxu0
    %v413 = vadd.f32 0.0, %v412
    %v414 = vpop.f32.mrb[0].mxu0
    %415 = vmatprep.mubr.bf16.mxu0 0
    %416 = vmatmul.mubr.bf16.gmra.mrb[0].mxu0 %v150
    %v417 = vpop.f32.mrb[0].mxu0
    %v418 = vadd.f32 0.0, %v417
    %v419 = vpop.f32.mrb[0].mxu0
    %v420 = vpop.f32.mrb[0].mxu0
    %v421 = vadd.f32 0.0, %v420
    %v422 = vpop.f32.mrb[0].mxu0
    %423 = vmatprep.mubr.bf16.mxu0 0
    %424 = vmatmul.mubr.bf16.gmra.mrb[0].mxu0 %v151
    %v425 = vpop.f32.mrb[0].mxu0
    %v426 = vadd.f32 0.0, %v425
    %v427 = vpop.f32.mrb[0].mxu0
    %v428 = vpop.f32.mrb[0].mxu0
    %v429 = vadd.f32 0.0, %v428
    %v430 = vpop.f32.mrb[0].mxu0
    %431 = vdwg.mxu0
    %v432 = vpack.c.bf16 %v351, %v347
    %v433 = vpack.c.bf16 %v353, %v349
    %v434 = vpack.c.bf16 %v413, %v410
    %v435 = vpack.c.bf16 %v361, %v357
    %v436 = vpack.c.bf16 %v363, %v359
    %v437 = vpack.c.bf16 %v421, %v418
    %v438 = vpack.c.bf16 %v371, %v367
    %v439 = vpack.c.bf16 %v373, %v369
    %v440 = vpack.c.bf16 %v429, %v426
    %v450 = vunpack.c.l.b16 %v432
    %v451 = vunpack.c.l.b16 %v433
    %v452 = vunpack.c.l.b16 %v434
    %v453 = vunpack.c.h.b16 %v432
    %v454 = vunpack.c.h.b16 %v433
    %v455 = vunpack.c.h.b16 %v434
    %v456 = vunpack.c.l.b16 %v435
    %v457 = vunpack.c.l.b16 %v436
    %v458 = vunpack.c.l.b16 %v437
    %v459 = vunpack.c.h.b16 %v435
    %v460 = vunpack.c.h.b16 %v436
    %v461 = vunpack.c.h.b16 %v437
    %v462 = vunpack.c.l.b16 %v438
    %v463 = vunpack.c.l.b16 %v439
    %v464 = vunpack.c.l.b16 %v440
    %v465 = vunpack.c.h.b16 %v438
    %v466 = vunpack.c.h.b16 %v439
    %v467 = vunpack.c.h.b16 %v440
    %v468 = vpack.c.b16 %v451, %v450
    %v469 = vpack.c.b16 %v452, %v452
    %v470 = vpack.c.b16 %v454, %v453
    %v471 = vpack.c.b16 %v455, %v455
    %v472 = vpack.c.b16 %v457, %v456
    %v473 = vpack.c.b16 %v458, %v458
    %v474 = vpack.c.b16 %v460, %v459
    %v475 = vpack.c.b16 %v461, %v461
    %v476 = vpack.c.b16 %v463, %v462
    %v477 = vpack.c.b16 %v464, %v464
    %v478 = vpack.c.b16 %v466, %v465
    %v479 = vpack.c.b16 %v467, %v467
    %492 = vst [vmem:[#allocation8] sm:$0xff] %v468
    %493 = vst [vmem:[#allocation8 + $0x8] sm:$0xf] %v469
    %494 = vst [vmem:[#allocation8 + $0xc] sm:$0xff] %v470
    %495 = vst [vmem:[#allocation8 + $0x14] sm:$0xf] %v471
    %496 = vst [vmem:[#allocation8 + $0x18] sm:$0xff] %v472
    %497 = vst [vmem:[#allocation8 + $0x20] sm:$0xf] %v473
    %498 = vst [vmem:[#allocation8 + $0x24] sm:$0xff] %v474
    %499 = vst [vmem:[#allocation8 + $0x2c] sm:$0xf] %v475
    %500 = vst [vmem:[#allocation8 + $0x30] sm:$0xff] %v476
    %501 = vst [vmem:[#allocation8 + $0x38] sm:$0xf] %v477
    %502 = vst [vmem:[#allocation8 + $0x3c] sm:$0xff] %v478
    %503 = vst [vmem:[#allocation8 + $0x44] sm:$0xf] %v479
    // Predicated region
    $region26: #{_forward_jit.10} parent=1 // pred_check
      _
    $region27: #{_forward_jit.10} parent=1 // pred_check_branch
      %505 = sbr.rel (0) target = $region29
    $region28: #{_forward_jit.10} parent=1 // pred_region
      %s507 = ssub.s32 1152, 1152
      %508 = vsyncadd [#allocation4], %s507
      %s509 = sshll.u32 [#allocation8], 4
      %s510 = int_to_ptr.vmem [resolvable:$true] %s509
      %515 = dma.vmem_to_hbm [thread:$0]  %s510, 1152, %s3, [#allocation4], 192, 192, 12
    $region29: #{_forward_jit.10} parent=1 // pred_fallthru
      _
    // Predicated region
    $region30: #{_forward_jit.10} parent=1 // pred_check
      _
    $region31: #{_forward_jit.10} parent=1 // pred_check_branch
      %517 = sbr.rel (0) target = $region33
    $region32: #{_forward_jit.10} parent=1 // pred_region
      %518 = dma.done [#allocation4], 1152
    $region33: #{_forward_jit.10} parent=1 // pred_fallthru
      _
    %519 = vsyncpa [#allocation3], 1
    %520 = vsyncpa [#allocation6], 1
    %521 = vsyncpa [#allocation4], 1

// kernel: _forward_jit.11
$region0: #{_forward_jit.11}
  #allocation0 [shape = 'u32[]', space=smem, size = 0x4, offset = 0x4, fixed_abs, tag = 'smem constant byte address 0x4 - core index']
  #allocation1 [shape = 'u32[144,128]{1,0:T(1,128)}', space=vmem, size = 0x12000, scoped, tag = 'internal scratch']
  %s0 = inlined_call_operand.hbm [shape: bf16[1,48,384], index: 0, kind: input, shape index: {}]
  %s1 = inlined_call_operand.hbm [shape: bf16[1,48,128], index: 1, kind: output, shape index: {}]
  %s2 = sld [smem:[#allocation0]]
  $region18: #{_forward_jit.11} parent=0
    _
  %s4 = ssub.s32 1, %s2
  %s5 = scalar_select 0, %s4, %s2
  $region1: #{_forward_jit.11} parent=0
    #allocation2 [shape = 'u8[36864]{0}', space=vmem, size = 0x9000, scoped, tag = 'input window, operand 0, single buffered']
    #allocation3 [shape = 's32[1]{0}', space=sflag, size = 0x4, scoped, tag = 'scoped memory for _forward_jit.11']
    #allocation4 [shape = 's32[1]{0}', space=sflag, size = 0x4, scoped, tag = 'scoped memory for _forward_jit.11']
    #allocation5 [shape = 'u8[12288]{0}', space=vmem, size = 0x3000, scoped, tag = 'output window, operand 0, single buffered']
    %6 = vsyncpa [#allocation3], 0
    %7 = vsyncpa [#allocation4], 0
    // Predicated region
    $region2: #{_forward_jit.11} parent=1 // pred_check
      _
    $region3: #{_forward_jit.11} parent=1 // pred_check_branch
      %9 = sbr.rel (0) target = $region5
    $region4: #{_forward_jit.11} parent=1 // pred_region
      %s11 = ssub.s32 1152, 1152
      %12 = vsyncadd [#allocation3], %s11
      %s13 = sshll.u32 [#allocation2], 4
      %s14 = int_to_ptr.vmem [resolvable:$true] %s13
      %19 = dma.hbm_to_vmem [thread:$0]  %s0, 1152, %s14, [#allocation3], 192, 192, 12
    $region5: #{_forward_jit.11} parent=1 // pred_fallthru
      _
    // Predicated region
    $region6: #{_forward_jit.11} parent=1 // pred_check
      _
    $region7: #{_forward_jit.11} parent=1 // pred_check_branch
      %21 = sbr.rel (0) target = $region9
    $region8: #{_forward_jit.11} parent=1 // pred_region
      %22 = dma.done [#allocation3], 1152
    $region9: #{_forward_jit.11} parent=1 // pred_fallthru
      _
    %v24 = vld [vmem:[#allocation2] sm:$0xff]
    %v25 = vld [vmem:[#allocation2 + $0x8] sm:$0xf]
    %v26 = vld [vmem:[#allocation2 + $0xc] sm:$0xff]
    %v27 = vld [vmem:[#allocation2 + $0x14] sm:$0xf]
    %v28 = vld [vmem:[#allocation2 + $0x18] sm:$0xff]
    %v29 = vld [vmem:[#allocation2 + $0x20] sm:$0xf]
    %v30 = vld [vmem:[#allocation2 + $0x24] sm:$0xff]
    %v31 = vld [vmem:[#allocation2 + $0x2c] sm:$0xf]
    %v32 = vld [vmem:[#allocation2 + $0x30] sm:$0xff]
    %v33 = vld [vmem:[#allocation2 + $0x38] sm:$0xf]
    %v34 = vld [vmem:[#allocation2 + $0x3c] sm:$0xff]
    %v35 = vld [vmem:[#allocation2 + $0x44] sm:$0xf]
    %v36 = vlaneseq
    %v37 = vand.u32 %v36, 127
    %vm38 = vcmp.ge.s32.totalorder %v37, 33
    %v39 = vunpack.c.l.bf16 %v24
    %v40 = vunpack.c.l.bf16 %v26
    %v41 = vunpack.c.l.bf16 %v28
    %v42 = vunpack.c.l.bf16 %v30
    %v43 = vunpack.c.l.bf16 %v32
    %v44 = vunpack.c.l.bf16 %v34
    %v45 = vmul.f32 %v39, 0.088388346
    %v46 = vmul.f32 %v40, 0.088388346
    %v47 = vmul.f32 %v41, 0.088388346
    %v48 = vmul.f32 %v42, 0.088388346
    %v49 = vmul.f32 %v43, 0.088388346
    %v50 = vmul.f32 %v44, 0.088388346
    %v51 = vpack.c.bf16 %v46, %v45
    %v52 = vpack.c.bf16 %v48, %v47
    %v53 = vpack.c.bf16 %v50, %v49
    %v60 = vunpack.c.h.b16 %v24
    %v61 = vunpack.c.h.b16 %v26
    %v62 = vunpack.c.h.b16 %v28
    %v63 = vunpack.c.h.b16 %v30
    %v64 = vunpack.c.h.b16 %v32
    %v65 = vunpack.c.h.b16 %v34
    %v66 = vpack.c.b16 %v61, %v60
    %v67 = vpack.c.b16 %v63, %v62
    %v68 = vpack.c.b16 %v65, %v64
    %vm69 = vcmask 261120
    %v71 = vsel %vm69, %v51, 0
    %v74 = vsel %vm69, %v52, 0
    %v77 = vsel %vm69, %v53, 0
    %v80 = vsel %vm69, %v66, 0
    %v83 = vsel %vm69, %v67, 0
    %v86 = vsel %vm69, %v68, 0
    %88 = vmatprep.subr.bf16.mxu0 0
    %89 = vmatpush1.bf16.xpose.msra.mxu0 %v80
    %90 = vmatprep.subr.bf16.mxu0 0
    %91 = vmatpush1.bf16.xpose.msra.mxu0 %v83
    %92 = vmatprep.subr.bf16.mxu0 0
    %93 = vmatpush1.bf16.xpose.msra.mxu0 %v86
    %94 = vmatprep.subr.bf16.mxu0 0
    %95 = vmatpush1.bf16.xpose.msra.mxu0 0
    %96 = vmatprep.subr.bf16.mxu0 0
    %97 = vmatpush1.bf16.xpose.msra.mxu0 0
    %98 = vmatprep.subr.bf16.mxu0 0
    %99 = vmatpush1.bf16.xpose.msra.mxu0 0
    %100 = vmatprep.subr.bf16.mxu0 0
    %101 = vmatpush1.bf16.xpose.msra.mxu0 0
    %102 = vmatprep.subr.bf16.mxu0 0
    %103 = vmatpush1.bf16.xpose.msra.mxu0 0
    %104 = vmatprep.subr.bf16.mxu0 0
    %105 = vmatpush1.bf16.xpose.msra.mxu0 0
    %106 = vmatprep.subr.bf16.mxu0 0
    %107 = vmatpush1.bf16.xpose.msra.mxu0 0
    %108 = vmatprep.subr.bf16.mxu0 0
    %109 = vmatpush1.bf16.xpose.msra.mxu0 0
    %110 = vmatprep.subr.bf16.mxu0 0
    %111 = vmatpush1.bf16.xpose.msra.mxu0 0
    %112 = vmatprep.subr.bf16.mxu0 0
    %113 = vmatpush1.bf16.xpose.msra.mxu0 0
    %114 = vmatprep.subr.bf16.mxu0 0
    %115 = vmatpush1.bf16.xpose.msra.mxu0 0
    %116 = vmatprep.subr.bf16.mxu0 0
    %117 = vmatpush1.bf16.xpose.msra.mxu0 0
    %118 = vmatprep.subr.bf16.mxu0 0
    %119 = vmatpush1.bf16.xpose.msra.mxu0 0
    %120 = vmatprep.mubr.bf16.mxu0 0
    %121 = vmatmul.mubr.bf16.gmra.mrb[0].mxu0 %v71
    %v122 = vpop.f32.mrb[0].mxu0
    %v123 = vadd.f32 0.0, %v122
    %v124 = vpop.f32.mrb[0].mxu0
    %v125 = vpop.f32.mrb[0].mxu0
    %v126 = vadd.f32 0.0, %v125
    %v127 = vpop.f32.mrb[0].mxu0
    %128 = vmatprep.mubr.bf16.mxu0 0
    %129 = vmatmul.mubr.bf16.gmra.mrb[0].mxu0 %v74
    %v130 = vpop.f32.mrb[0].mxu0
    %v131 = vadd.f32 0.0, %v130
    %v132 = vpop.f32.mrb[0].mxu0
    %v133 = vpop.f32.mrb[0].mxu0
    %v134 = vadd.f32 0.0, %v133
    %v135 = vpop.f32.mrb[0].mxu0
    %136 = vmatprep.mubr.bf16.mxu0 0
    %137 = vmatmul.mubr.bf16.gmra.mrb[0].mxu0 %v77
    %v138 = vpop.f32.mrb[0].mxu0
    %v139 = vadd.f32 0.0, %v138
    %v140 = vpop.f32.mrb[0].mxu0
    %v141 = vpop.f32.mrb[0].mxu0
    %v142 = vadd.f32 0.0, %v141
    %v143 = vpop.f32.mrb[0].mxu0
    %144 = vdwg.mxu0
    %v145 = vsel %vm38, -1e+30, %v123
    %v146 = vsel %vm38, -1e+30, %v126
    %v147 = vsel %vm38, -1e+30, %v131
    %v148 = vsel %vm38, -1e+30, %v134
    %v149 = vsel %vm38, -1e+30, %v139
    %v150 = vsel %vm38, -1e+30, %v142
    %vm151 = vcmask 392192
    %v152 = vsel %vm151, %v145, -inf
    %153 = vmax.xlane.f32.xlu0 %v152
    %v154 = vpop.xlane.xlu0 %153
    %v155 = vsel %vm151, %v146, -inf
    %156 = vmax.xlane.f32.xlu0 %v155
    %v157 = vpop.xlane.xlu0 %156
    %v158 = vsel %vm151, %v147, -inf
    %159 = vmax.xlane.f32.xlu0 %v158
    %v160 = vpop.xlane.xlu0 %159
    %v161 = vsel %vm151, %v148, -inf
    %162 = vmax.xlane.f32.xlu0 %v161
    %v163 = vpop.xlane.xlu0 %162
    %v164 = vsel %vm151, %v149, -inf
    %165 = vmax.xlane.f32.xlu0 %v164
    %v166 = vpop.xlane.xlu0 %165
    %v167 = vsel %vm151, %v150, -inf
    %168 = vmax.xlane.f32.xlu0 %v167
    %v169 = vpop.xlane.xlu0 %168
    %v170 = vsub.f32 %v145, %v154
    %v171 = vsub.f32 %v146, %v157
    %v172 = vsub.f32 %v147, %v160
    %v173 = vsub.f32 %v148, %v163
    %v174 = vsub.f32 %v149, %v166
    %v175 = vsub.f32 %v150, %v169
    %v176 = vmul.f32 %v170, 1.442695
    %v177 = vpow.pop %v176
    %v178 = vmul.f32 %v171, 1.442695
    %v179 = vpow.pop %v178
    %v180 = vmul.f32 %v172, 1.442695
    %v181 = vpow.pop %v180
    %v182 = vmul.f32 %v173, 1.442695
    %v183 = vpow.pop %v182
    %v184 = vmul.f32 %v174, 1.442695
    %v185 = vpow.pop %v184
    %v186 = vmul.f32 %v175, 1.442695
    %v187 = vpow.pop %v186
    %v188 = vsel %vm151, %v177, 0.0
    %189 = vadd.xlane.f32.xlu0 %v188
    %v190 = vpop.xlane.xlu0 %189
    %v191 = vsel %vm151, %v179, 0.0
    %192 = vadd.xlane.f32.xlu0 %v191
    %v193 = vpop.xlane.xlu0 %192
    %v194 = vsel %vm151, %v181, 0.0
    %195 = vadd.xlane.f32.xlu0 %v194
    %v196 = vpop.xlane.xlu0 %195
    %v197 = vsel %vm151, %v183, 0.0
    %198 = vadd.xlane.f32.xlu0 %v197
    %v199 = vpop.xlane.xlu0 %198
    %v200 = vsel %vm151, %v185, 0.0
    %201 = vadd.xlane.f32.xlu0 %v200
    %v202 = vpop.xlane.xlu0 %201
    %v203 = vsel %vm151, %v187, 0.0
    %204 = vadd.xlane.f32.xlu0 %v203
    %v205 = vpop.xlane.xlu0 %204
    %v206 = vpack.c.bf16 %v179, %v177
    %v207 = vpack.c.bf16 %v183, %v181
    %v208 = vpack.c.bf16 %v187, %v185
    %v215 = vunpack.c.l.b16 %v25
    %v216 = vunpack.c.l.b16 %v27
    %v217 = vunpack.c.l.b16 %v29
    %v218 = vunpack.c.l.b16 %v31
    %v219 = vunpack.c.l.b16 %v33
    %v220 = vunpack.c.l.b16 %v35
    %v221 = vpack.c.b16 %v216, %v215
    %v222 = vpack.c.b16 %v218, %v217
    %v223 = vpack.c.b16 %v220, %v219
    %v228 = vsel %vm151, %v206, 0
    %v231 = vsel %vm151, %v207, 0
    %v234 = vsel %vm151, %v208, 0
    %236 = vmatprep.subr.bf16.mxu0 0
    %237 = vmatpush1.bf16.msra.mxu0 %v221
    %238 = vmatprep.subr.bf16.mxu0 0
    %239 = vmatpush1.bf16.msra.mxu0 %v222
    %240 = vmatprep.subr.bf16.mxu0 0
    %241 = vmatpush1.bf16.msra.mxu0 %v223
    %242 = vmatprep.subr.bf16.mxu0 0
    %243 = vmatpush1.bf16.msra.mxu0 0
    %244 = vmatprep.subr.bf16.mxu0 0
    %245 = vmatpush1.bf16.msra.mxu0 0
    %246 = vmatprep.subr.bf16.mxu0 0
    %247 = vmatpush1.bf16.msra.mxu0 0
    %248 = vmatprep.subr.bf16.mxu0 0
    %249 = vmatpush1.bf16.msra.mxu0 0
    %250 = vmatprep.subr.bf16.mxu0 0
    %251 = vmatpush1.bf16.msra.mxu0 0
    %252 = vmatprep.subr.bf16.mxu0 0
    %253 = vmatpush1.bf16.msra.mxu0 0
    %254 = vmatprep.subr.bf16.mxu0 0
    %255 = vmatpush1.bf16.msra.mxu0 0
    %256 = vmatprep.subr.bf16.mxu0 0
    %257 = vmatpush1.bf16.msra.mxu0 0
    %258 = vmatprep.subr.bf16.mxu0 0
    %259 = vmatpush1.bf16.msra.mxu0 0
    %260 = vmatprep.subr.bf16.mxu0 0
    %261 = vmatpush1.bf16.msra.mxu0 0
    %262 = vmatprep.subr.bf16.mxu0 0
    %263 = vmatpush1.bf16.msra.mxu0 0
    %264 = vmatprep.subr.bf16.mxu0 0
    %265 = vmatpush1.bf16.msra.mxu0 0
    %266 = vmatprep.subr.bf16.mxu0 0
    %267 = vmatpush1.bf16.msra.mxu0 0
    %268 = vmatprep.mubr.bf16.mxu0 0
    %269 = vmatmul.mubr.bf16.gmra.mrb[0].mxu0 %v228
    %v270 = vpop.f32.mrb[0].mxu0
    %v271 = vadd.f32 0.0, %v270
    %v272 = vpop.f32.mrb[0].mxu0
    %v273 = vpop.f32.mrb[0].mxu0
    %v274 = vadd.f32 0.0, %v273
    %v275 = vpop.f32.mrb[0].mxu0
    %276 = vmatprep.mubr.bf16.mxu0 0
    %277 = vmatmul.mubr.bf16.gmra.mrb[0].mxu0 %v231
    %v278 = vpop.f32.mrb[0].mxu0
    %v279 = vadd.f32 0.0, %v278
    %v280 = vpop.f32.mrb[0].mxu0
    %v281 = vpop.f32.mrb[0].mxu0
    %v282 = vadd.f32 0.0, %v281
    %v283 = vpop.f32.mrb[0].mxu0
    %284 = vmatprep.mubr.bf16.mxu0 0
    %285 = vmatmul.mubr.bf16.gmra.mrb[0].mxu0 %v234
    %v286 = vpop.f32.mrb[0].mxu0
    %v287 = vadd.f32 0.0, %v286
    %v288 = vpop.f32.mrb[0].mxu0
    %v289 = vpop.f32.mrb[0].mxu0
    %v290 = vadd.f32 0.0, %v289
    %v291 = vpop.f32.mrb[0].mxu0
    %292 = vdwg.mxu0
    %v293 = vrcp.pop %v190
    %v294 = vrcp.pop %v193
    %v295 = vrcp.pop %v196
    %v296 = vrcp.pop %v199
    %v297 = vrcp.pop %v202
    %v298 = vrcp.pop %v205
    %v299 = vmul.f32 %v271, %v293
    %v300 = vmul.f32 %v274, %v294
    %v301 = vmul.f32 %v279, %v295
    %v302 = vmul.f32 %v282, %v296
    %v303 = vmul.f32 %v287, %v297
    %v304 = vmul.f32 %v290, %v298
    %308 = vrot.lane.b32.xlu0 %v51, 96
    %v309 = vpop.permute.xlu0 %308
    %310 = vrot.lane.b32.xlu0 %v52, 96
    %v311 = vpop.permute.xlu0 %310
    %312 = vrot.lane.b32.xlu0 %v53, 96
    %v313 = vpop.permute.xlu0 %312
    %314 = vrot.lane.b32.xlu0 %v66, 96
    %v315 = vpop.permute.xlu0 %314
    %316 = vrot.lane.b32.xlu0 %v67, 96
    %v317 = vpop.permute.xlu0 %316
    %318 = vrot.lane.b32.xlu0 %v68, 96
    %v319 = vpop.permute.xlu0 %318
    %v321 = vsel %vm69, %v309, 0
    %v324 = vsel %vm69, %v311, 0
    %v327 = vsel %vm69, %v313, 0
    %v330 = vsel %vm69, %v315, 0
    %v333 = vsel %vm69, %v317, 0
    %v336 = vsel %vm69, %v319, 0
    %338 = vmatprep.subr.bf16.mxu0 0
    %339 = vmatpush1.bf16.xpose.msra.mxu0 %v330
    %340 = vmatprep.subr.bf16.mxu0 0
    %341 = vmatpush1.bf16.xpose.msra.mxu0 %v333
    %342 = vmatprep.subr.bf16.mxu0 0
    %343 = vmatpush1.bf16.xpose.msra.mxu0 %v336
    %344 = vmatprep.subr.bf16.mxu0 0
    %345 = vmatpush1.bf16.xpose.msra.mxu0 0
    %346 = vmatprep.subr.bf16.mxu0 0
    %347 = vmatpush1.bf16.xpose.msra.mxu0 0
    %348 = vmatprep.subr.bf16.mxu0 0
    %349 = vmatpush1.bf16.xpose.msra.mxu0 0
    %350 = vmatprep.subr.bf16.mxu0 0
    %351 = vmatpush1.bf16.xpose.msra.mxu0 0
    %352 = vmatprep.subr.bf16.mxu0 0
    %353 = vmatpush1.bf16.xpose.msra.mxu0 0
    %354 = vmatprep.subr.bf16.mxu0 0
    %355 = vmatpush1.bf16.xpose.msra.mxu0 0
    %356 = vmatprep.subr.bf16.mxu0 0
    %357 = vmatpush1.bf16.xpose.msra.mxu0 0
    %358 = vmatprep.subr.bf16.mxu0 0
    %359 = vmatpush1.bf16.xpose.msra.mxu0 0
    %360 = vmatprep.subr.bf16.mxu0 0
    %361 = vmatpush1.bf16.xpose.msra.mxu0 0
    %362 = vmatprep.subr.bf16.mxu0 0
    %363 = vmatpush1.bf16.xpose.msra.mxu0 0
    %364 = vmatprep.subr.bf16.mxu0 0
    %365 = vmatpush1.bf16.xpose.msra.mxu0 0
    %366 = vmatprep.subr.bf16.mxu0 0
    %367 = vmatpush1.bf16.xpose.msra.mxu0 0
    %368 = vmatprep.subr.bf16.mxu0 0
    %369 = vmatpush1.bf16.xpose.msra.mxu0 0
    %370 = vmatprep.mubr.bf16.mxu0 0
    %371 = vmatmul.mubr.bf16.gmra.mrb[0].mxu0 %v321
    %v372 = vpop.f32.mrb[0].mxu0
    %v373 = vadd.f32 0.0, %v372
    %v374 = vpop.f32.mrb[0].mxu0
    %v375 = vpop.f32.mrb[0].mxu0
    %v376 = vadd.f32 0.0, %v375
    %v377 = vpop.f32.mrb[0].mxu0
    %378 = vmatprep.mubr.bf16.mxu0 0
    %379 = vmatmul.mubr.bf16.gmra.mrb[0].mxu0 %v324
    %v380 = vpop.f32.mrb[0].mxu0
    %v381 = vadd.f32 0.0, %v380
    %v382 = vpop.f32.mrb[0].mxu0
    %v383 = vpop.f32.mrb[0].mxu0
    %v384 = vadd.f32 0.0, %v383
    %v385 = vpop.f32.mrb[0].mxu0
    %386 = vmatprep.mubr.bf16.mxu0 0
    %387 = vmatmul.mubr.bf16.gmra.mrb[0].mxu0 %v327
    %v388 = vpop.f32.mrb[0].mxu0
    %v389 = vadd.f32 0.0, %v388
    %v390 = vpop.f32.mrb[0].mxu0
    %v391 = vpop.f32.mrb[0].mxu0
    %v392 = vadd.f32 0.0, %v391
    %v393 = vpop.f32.mrb[0].mxu0
    %394 = vdwg.mxu0
    %v395 = vsel %vm38, -1e+30, %v373
    %v396 = vsel %vm38, -1e+30, %v376
    %v397 = vsel %vm38, -1e+30, %v381
    %v398 = vsel %vm38, -1e+30, %v384
    %v399 = vsel %vm38, -1e+30, %v389
    %v400 = vsel %vm38, -1e+30, %v392
    %v401 = vsel %vm151, %v395, -inf
    %402 = vmax.xlane.f32.xlu0 %v401
    %v403 = vpop.xlane.xlu0 %402
    %v404 = vsel %vm151, %v396, -inf
    %405 = vmax.xlane.f32.xlu0 %v404
    %v406 = vpop.xlane.xlu0 %405
    %v407 = vsel %vm151, %v397, -inf
    %408 = vmax.xlane.f32.xlu0 %v407
    %v409 = vpop.xlane.xlu0 %408
    %v410 = vsel %vm151, %v398, -inf
    %411 = vmax.xlane.f32.xlu0 %v410
    %v412 = vpop.xlane.xlu0 %411
    %v413 = vsel %vm151, %v399, -inf
    %414 = vmax.xlane.f32.xlu0 %v413
    %v415 = vpop.xlane.xlu0 %414
    %v416 = vsel %vm151, %v400, -inf
    %417 = vmax.xlane.f32.xlu0 %v416
    %v418 = vpop.xlane.xlu0 %417
    %v419 = vsub.f32 %v395, %v403
    %v420 = vsub.f32 %v396, %v406
    %v421 = vsub.f32 %v397, %v409
    %v422 = vsub.f32 %v398, %v412
    %v423 = vsub.f32 %v399, %v415
    %v424 = vsub.f32 %v400, %v418
    %v425 = vmul.f32 %v419, 1.442695
    %v426 = vpow.pop %v425
    %v427 = vmul.f32 %v420, 1.442695
    %v428 = vpow.pop %v427
    %v429 = vmul.f32 %v421, 1.442695
    %v430 = vpow.pop %v429
    %v431 = vmul.f32 %v422, 1.442695
    %v432 = vpow.pop %v431
    %v433 = vmul.f32 %v423, 1.442695
    %v434 = vpow.pop %v433
    %v435 = vmul.f32 %v424, 1.442695
    %v436 = vpow.pop %v435
    %v437 = vsel %vm151, %v426, 0.0
    %438 = vadd.xlane.f32.xlu0 %v437
    %v439 = vpop.xlane.xlu0 %438
    %v440 = vsel %vm151, %v428, 0.0
    %441 = vadd.xlane.f32.xlu0 %v440
    %v442 = vpop.xlane.xlu0 %441
    %v443 = vsel %vm151, %v430, 0.0
    %444 = vadd.xlane.f32.xlu0 %v443
    %v445 = vpop.xlane.xlu0 %444
    %v446 = vsel %vm151, %v432, 0.0
    %447 = vadd.xlane.f32.xlu0 %v446
    %v448 = vpop.xlane.xlu0 %447
    %v449 = vsel %vm151, %v434, 0.0
    %450 = vadd.xlane.f32.xlu0 %v449
    %v451 = vpop.xlane.xlu0 %450
    %v452 = vsel %vm151, %v436, 0.0
    %453 = vadd.xlane.f32.xlu0 %v452
    %v454 = vpop.xlane.xlu0 %453
    %v455 = vpack.c.bf16 %v428, %v426
    %v456 = vpack.c.bf16 %v432, %v430
    %v457 = vpack.c.bf16 %v436, %v434
    %458 = vrot.lane.b32.xlu0 %v221, 96
    %v459 = vpop.permute.xlu0 %458
    %460 = vrot.lane.b32.xlu0 %v222, 96
    %v461 = vpop.permute.xlu0 %460
    %462 = vrot.lane.b32.xlu0 %v223, 96
    %v463 = vpop.permute.xlu0 %462
    %v468 = vsel %vm151, %v455, 0
    %v471 = vsel %vm151, %v456, 0
    %v474 = vsel %vm151, %v457, 0
    %476 = vmatprep.subr.bf16.mxu0 0
    %477 = vmatpush1.bf16.msra.mxu0 %v459
    %478 = vmatprep.subr.bf16.mxu0 0
    %479 = vmatpush1.bf16.msra.mxu0 %v461
    %480 = vmatprep.subr.bf16.mxu0 0
    %481 = vmatpush1.bf16.msra.mxu0 %v463
    %482 = vmatprep.subr.bf16.mxu0 0
    %483 = vmatpush1.bf16.msra.mxu0 0
    %484 = vmatprep.subr.bf16.mxu0 0
    %485 = vmatpush1.bf16.msra.mxu0 0
    %486 = vmatprep.subr.bf16.mxu0 0
    %487 = vmatpush1.bf16.msra.mxu0 0
    %488 = vmatprep.subr.bf16.mxu0 0
    %489 = vmatpush1.bf16.msra.mxu0 0
    %490 = vmatprep.subr.bf16.mxu0 0
    %491 = vmatpush1.bf16.msra.mxu0 0
    %492 = vmatprep.subr.bf16.mxu0 0
    %493 = vmatpush1.bf16.msra.mxu0 0
    %494 = vmatprep.subr.bf16.mxu0 0
    %495 = vmatpush1.bf16.msra.mxu0 0
    %496 = vmatprep.subr.bf16.mxu0 0
    %497 = vmatpush1.bf16.msra.mxu0 0
    %498 = vmatprep.subr.bf16.mxu0 0
    %499 = vmatpush1.bf16.msra.mxu0 0
    %500 = vmatprep.subr.bf16.mxu0 0
    %501 = vmatpush1.bf16.msra.mxu0 0
    %502 = vmatprep.subr.bf16.mxu0 0
    %503 = vmatpush1.bf16.msra.mxu0 0
    %504 = vmatprep.subr.bf16.mxu0 0
    %505 = vmatpush1.bf16.msra.mxu0 0
    %506 = vmatprep.subr.bf16.mxu0 0
    %507 = vmatpush1.bf16.msra.mxu0 0
    %508 = vmatprep.mubr.bf16.mxu0 0
    %509 = vmatmul.mubr.bf16.gmra.mrb[0].mxu0 %v468
    %v510 = vpop.f32.mrb[0].mxu0
    %v511 = vadd.f32 0.0, %v510
    %v512 = vpop.f32.mrb[0].mxu0
    %v513 = vpop.f32.mrb[0].mxu0
    %v514 = vadd.f32 0.0, %v513
    %v515 = vpop.f32.mrb[0].mxu0
    %516 = vmatprep.mubr.bf16.mxu0 0
    %517 = vmatmul.mubr.bf16.gmra.mrb[0].mxu0 %v471
    %v518 = vpop.f32.mrb[0].mxu0
    %v519 = vadd.f32 0.0, %v518
    %v520 = vpop.f32.mrb[0].mxu0
    %v521 = vpop.f32.mrb[0].mxu0
    %v522 = vadd.f32 0.0, %v521
    %v523 = vpop.f32.mrb[0].mxu0
    %524 = vmatprep.mubr.bf16.mxu0 0
    %525 = vmatmul.mubr.bf16.gmra.mrb[0].mxu0 %v474
    %v526 = vpop.f32.mrb[0].mxu0
    %v527 = vadd.f32 0.0, %v526
    %v528 = vpop.f32.mrb[0].mxu0
    %v529 = vpop.f32.mrb[0].mxu0
    %v530 = vadd.f32 0.0, %v529
    %v531 = vpop.f32.mrb[0].mxu0
    %532 = vdwg.mxu0
    %v533 = vrcp.pop %v439
    %v534 = vrcp.pop %v442
    %v535 = vrcp.pop %v445
    %v536 = vrcp.pop %v448
    %v537 = vrcp.pop %v451
    %v538 = vrcp.pop %v454
    %v539 = vmul.f32 %v511, %v533
    %v540 = vmul.f32 %v514, %v534
    %v541 = vmul.f32 %v519, %v535
    %v542 = vmul.f32 %v522, %v536
    %v543 = vmul.f32 %v527, %v537
    %v544 = vmul.f32 %v530, %v538
    %545 = vrot.lane.b32.xlu0 %v51, 64
    %v546 = vpop.permute.xlu0 %545
    %547 = vrot.lane.b32.xlu0 %v52, 64
    %v548 = vpop.permute.xlu0 %547
    %549 = vrot.lane.b32.xlu0 %v53, 64
    %v550 = vpop.permute.xlu0 %549
    %551 = vrot.lane.b32.xlu0 %v66, 64
    %v552 = vpop.permute.xlu0 %551
    %553 = vrot.lane.b32.xlu0 %v67, 64
    %v554 = vpop.permute.xlu0 %553
    %555 = vrot.lane.b32.xlu0 %v68, 64
    %v556 = vpop.permute.xlu0 %555
    %v558 = vsel %vm69, %v546, 0
    %v561 = vsel %vm69, %v548, 0
    %v564 = vsel %vm69, %v550, 0
    %v567 = vsel %vm69, %v552, 0
    %v570 = vsel %vm69, %v554, 0
    %v573 = vsel %vm69, %v556, 0
    %575 = vmatprep.subr.bf16.mxu0 0
    %576 = vmatpush1.bf16.xpose.msra.mxu0 %v567
    %577 = vmatprep.subr.bf16.mxu0 0
    %578 = vmatpush1.bf16.xpose.msra.mxu0 %v570
    %579 = vmatprep.subr.bf16.mxu0 0
    %580 = vmatpush1.bf16.xpose.msra.mxu0 %v573
    %581 = vmatprep.subr.bf16.mxu0 0
    %582 = vmatpush1.bf16.xpose.msra.mxu0 0
    %583 = vmatprep.subr.bf16.mxu0 0
    %584 = vmatpush1.bf16.xpose.msra.mxu0 0
    %585 = vmatprep.subr.bf16.mxu0 0
    %586 = vmatpush1.bf16.xpose.msra.mxu0 0
    %587 = vmatprep.subr.bf16.mxu0 0
    %588 = vmatpush1.bf16.xpose.msra.mxu0 0
    %589 = vmatprep.subr.bf16.mxu0 0
    %590 = vmatpush1.bf16.xpose.msra.mxu0 0
    %591 = vmatprep.subr.bf16.mxu0 0
    %592 = vmatpush1.bf16.xpose.msra.mxu0 0
    %593 = vmatprep.subr.bf16.mxu0 0
    %594 = vmatpush1.bf16.xpose.msra.mxu0 0
    %595 = vmatprep.subr.bf16.mxu0 0
    %596 = vmatpush1.bf16.xpose.msra.mxu0 0
    %597 = vmatprep.subr.bf16.mxu0 0
    %598 = vmatpush1.bf16.xpose.msra.mxu0 0
    %599 = vmatprep.subr.bf16.mxu0 0
    %600 = vmatpush1.bf16.xpose.msra.mxu0 0
    %601 = vmatprep.subr.bf16.mxu0 0
    %602 = vmatpush1.bf16.xpose.msra.mxu0 0
    %603 = vmatprep.subr.bf16.mxu0 0
    %604 = vmatpush1.bf16.xpose.msra.mxu0 0
    %605 = vmatprep.subr.bf16.mxu0 0
    %606 = vmatpush1.bf16.xpose.msra.mxu0 0
    %607 = vmatprep.mubr.bf16.mxu0 0
    %608 = vmatmul.mubr.bf16.gmra.mrb[0].mxu0 %v558
    %v609 = vpop.f32.mrb[0].mxu0
    %v610 = vadd.f32 0.0, %v609
    %v611 = vpop.f32.mrb[0].mxu0
    %v612 = vpop.f32.mrb[0].mxu0
    %v613 = vadd.f32 0.0, %v612
    %v614 = vpop.f32.mrb[0].mxu0
    %615 = vmatprep.mubr.bf16.mxu0 0
    %616 = vmatmul.mubr.bf16.gmra.mrb[0].mxu0 %v561
    %v617 = vpop.f32.mrb[0].mxu0
    %v618 = vadd.f32 0.0, %v617
    %v619 = vpop.f32.mrb[0].mxu0
    %v620 = vpop.f32.mrb[0].mxu0
    %v621 = vadd.f32 0.0, %v620
    %v622 = vpop.f32.mrb[0].mxu0
    %623 = vmatprep.mubr.bf16.mxu0 0
    %624 = vmatmul.mubr.bf16.gmra.mrb[0].mxu0 %v564
    %v625 = vpop.f32.mrb[0].mxu0
    %v626 = vadd.f32 0.0, %v625
    %v627 = vpop.f32.mrb[0].mxu0
    %v628 = vpop.f32.mrb[0].mxu0
    %v629 = vadd.f32 0.0, %v628
    %v630 = vpop.f32.mrb[0].mxu0
    %631 = vdwg.mxu0
    %v632 = vsel %vm38, -1e+30, %v610
    %v633 = vsel %vm38, -1e+30, %v613
    %v634 = vsel %vm38, -1e+30, %v618
    %v635 = vsel %vm38, -1e+30, %v621
    %v636 = vsel %vm38, -1e+30, %v626
    %v637 = vsel %vm38, -1e+30, %v629
    %v638 = vsel %vm151, %v632, -inf
    %639 = vmax.xlane.f32.xlu0 %v638
    %v640 = vpop.xlane.xlu0 %639
    %v641 = vsel %vm151, %v633, -inf
    %642 = vmax.xlane.f32.xlu0 %v641
    %v643 = vpop.xlane.xlu0 %642
    %v644 = vsel %vm151, %v634, -inf
    %645 = vmax.xlane.f32.xlu0 %v644
    %v646 = vpop.xlane.xlu0 %645
    %v647 = vsel %vm151, %v635, -inf
    %648 = vmax.xlane.f32.xlu0 %v647
    %v649 = vpop.xlane.xlu0 %648
    %v650 = vsel %vm151, %v636, -inf
    %651 = vmax.xlane.f32.xlu0 %v650
    %v652 = vpop.xlane.xlu0 %651
    %v653 = vsel %vm151, %v637, -inf
    %654 = vmax.xlane.f32.xlu0 %v653
    %v655 = vpop.xlane.xlu0 %654
    %v656 = vsub.f32 %v632, %v640
    %v657 = vsub.f32 %v633, %v643
    %v658 = vsub.f32 %v634, %v646
    %v659 = vsub.f32 %v635, %v649
    %v660 = vsub.f32 %v636, %v652
    %v661 = vsub.f32 %v637, %v655
    %v662 = vmul.f32 %v656, 1.442695
    %v663 = vpow.pop %v662
    %v664 = vmul.f32 %v657, 1.442695
    %v665 = vpow.pop %v664
    %v666 = vmul.f32 %v658, 1.442695
    %v667 = vpow.pop %v666
    %v668 = vmul.f32 %v659, 1.442695
    %v669 = vpow.pop %v668
    %v670 = vmul.f32 %v660, 1.442695
    %v671 = vpow.pop %v670
    %v672 = vmul.f32 %v661, 1.442695
    %v673 = vpow.pop %v672
    %v674 = vsel %vm151, %v663, 0.0
    %675 = vadd.xlane.f32.xlu0 %v674
    %v676 = vpop.xlane.xlu0 %675
    %v677 = vsel %vm151, %v665, 0.0
    %678 = vadd.xlane.f32.xlu0 %v677
    %v679 = vpop.xlane.xlu0 %678
    %v680 = vsel %vm151, %v667, 0.0
    %681 = vadd.xlane.f32.xlu0 %v680
    %v682 = vpop.xlane.xlu0 %681
    %v683 = vsel %vm151, %v669, 0.0
    %684 = vadd.xlane.f32.xlu0 %v683
    %v685 = vpop.xlane.xlu0 %684
    %v686 = vsel %vm151, %v671, 0.0
    %687 = vadd.xlane.f32.xlu0 %v686
    %v688 = vpop.xlane.xlu0 %687
    %v689 = vsel %vm151, %v673, 0.0
    %690 = vadd.xlane.f32.xlu0 %v689
    %v691 = vpop.xlane.xlu0 %690
    %v692 = vpack.c.bf16 %v665, %v663
    %v693 = vpack.c.bf16 %v669, %v667
    %v694 = vpack.c.bf16 %v673, %v671
    %695 = vrot.lane.b32.xlu0 %v221, 64
    %v696 = vpop.permute.xlu0 %695
    %697 = vrot.lane.b32.xlu0 %v222, 64
    %v698 = vpop.permute.xlu0 %697
    %699 = vrot.lane.b32.xlu0 %v223, 64
    %v700 = vpop.permute.xlu0 %699
    %v705 = vsel %vm151, %v692, 0
    %v708 = vsel %vm151, %v693, 0
    %v711 = vsel %vm151, %v694, 0
    %713 = vmatprep.subr.bf16.mxu0 0
    %714 = vmatpush1.bf16.msra.mxu0 %v696
    %715 = vmatprep.subr.bf16.mxu0 0
    %716 = vmatpush1.bf16.msra.mxu0 %v698
    %717 = vmatprep.subr.bf16.mxu0 0
    %718 = vmatpush1.bf16.msra.mxu0 %v700
    %719 = vmatprep.subr.bf16.mxu0 0
    %720 = vmatpush1.bf16.msra.mxu0 0
    %721 = vmatprep.subr.bf16.mxu0 0
    %722 = vmatpush1.bf16.msra.mxu0 0
    %723 = vmatprep.subr.bf16.mxu0 0
    %724 = vmatpush1.bf16.msra.mxu0 0
    %725 = vmatprep.subr.bf16.mxu0 0
    %726 = vmatpush1.bf16.msra.mxu0 0
    %727 = vmatprep.subr.bf16.mxu0 0
    %728 = vmatpush1.bf16.msra.mxu0 0
    %729 = vmatprep.subr.bf16.mxu0 0
    %730 = vmatpush1.bf16.msra.mxu0 0
    %731 = vmatprep.subr.bf16.mxu0 0
    %732 = vmatpush1.bf16.msra.mxu0 0
    %733 = vmatprep.subr.bf16.mxu0 0
    %734 = vmatpush1.bf16.msra.mxu0 0
    %735 = vmatprep.subr.bf16.mxu0 0
    %736 = vmatpush1.bf16.msra.mxu0 0
    %737 = vmatprep.subr.bf16.mxu0 0
    %738 = vmatpush1.bf16.msra.mxu0 0
    %739 = vmatprep.subr.bf16.mxu0 0
    %740 = vmatpush1.bf16.msra.mxu0 0
    %741 = vmatprep.subr.bf16.mxu0 0
    %742 = vmatpush1.bf16.msra.mxu0 0
    %743 = vmatprep.subr.bf16.mxu0 0
    %744 = vmatpush1.bf16.msra.mxu0 0
    %745 = vmatprep.mubr.bf16.mxu0 0
    %746 = vmatmul.mubr.bf16.gmra.mrb[0].mxu0 %v705
    %v747 = vpop.f32.mrb[0].mxu0
    %v748 = vadd.f32 0.0, %v747
    %v749 = vpop.f32.mrb[0].mxu0
    %v750 = vpop.f32.mrb[0].mxu0
    %v751 = vadd.f32 0.0, %v750
    %v752 = vpop.f32.mrb[0].mxu0
    %753 = vmatprep.mubr.bf16.mxu0 0
    %754 = vmatmul.mubr.bf16.gmra.mrb[0].mxu0 %v708
    %v755 = vpop.f32.mrb[0].mxu0
    %v756 = vadd.f32 0.0, %v755
    %v757 = vpop.f32.mrb[0].mxu0
    %v758 = vpop.f32.mrb[0].mxu0
    %v759 = vadd.f32 0.0, %v758
    %v760 = vpop.f32.mrb[0].mxu0
    %761 = vmatprep.mubr.bf16.mxu0 0
    %762 = vmatmul.mubr.bf16.gmra.mrb[0].mxu0 %v711
    %v763 = vpop.f32.mrb[0].mxu0
    %v764 = vadd.f32 0.0, %v763
    %v765 = vpop.f32.mrb[0].mxu0
    %v766 = vpop.f32.mrb[0].mxu0
    %v767 = vadd.f32 0.0, %v766
    %v768 = vpop.f32.mrb[0].mxu0
    %769 = vdwg.mxu0
    %v770 = vrcp.pop %v676
    %v771 = vrcp.pop %v679
    %v772 = vrcp.pop %v682
    %v773 = vrcp.pop %v685
    %v774 = vrcp.pop %v688
    %v775 = vrcp.pop %v691
    %v776 = vmul.f32 %v748, %v770
    %v777 = vmul.f32 %v751, %v771
    %v778 = vmul.f32 %v756, %v772
    %v779 = vmul.f32 %v759, %v773
    %v780 = vmul.f32 %v764, %v774
    %v781 = vmul.f32 %v767, %v775
    %782 = vrot.lane.b32.xlu0 %v51, 32
    %v783 = vpop.permute.xlu0 %782
    %784 = vrot.lane.b32.xlu0 %v52, 32
    %v785 = vpop.permute.xlu0 %784
    %786 = vrot.lane.b32.xlu0 %v53, 32
    %v787 = vpop.permute.xlu0 %786
    %788 = vrot.lane.b32.xlu0 %v66, 32
    %v789 = vpop.permute.xlu0 %788
    %790 = vrot.lane.b32.xlu0 %v67, 32
    %v791 = vpop.permute.xlu0 %790
    %792 = vrot.lane.b32.xlu0 %v68, 32
    %v793 = vpop.permute.xlu0 %792
    %v795 = vsel %vm69, %v783, 0
    %v798 = vsel %vm69, %v785, 0
    %v801 = vsel %vm69, %v787, 0
    %v804 = vsel %vm69, %v789, 0
    %v807 = vsel %vm69, %v791, 0
    %v810 = vsel %vm69, %v793, 0
    %812 = vmatprep.subr.bf16.mxu0 0
    %813 = vmatpush1.bf16.xpose.msra.mxu0 %v804
    %814 = vmatprep.subr.bf16.mxu0 0
    %815 = vmatpush1.bf16.xpose.msra.mxu0 %v807
    %816 = vmatprep.subr.bf16.mxu0 0
    %817 = vmatpush1.bf16.xpose.msra.mxu0 %v810
    %818 = vmatprep.subr.bf16.mxu0 0
    %819 = vmatpush1.bf16.xpose.msra.mxu0 0
    %820 = vmatprep.subr.bf16.mxu0 0
    %821 = vmatpush1.bf16.xpose.msra.mxu0 0
    %822 = vmatprep.subr.bf16.mxu0 0
    %823 = vmatpush1.bf16.xpose.msra.mxu0 0
    %824 = vmatprep.subr.bf16.mxu0 0
    %825 = vmatpush1.bf16.xpose.msra.mxu0 0
    %826 = vmatprep.subr.bf16.mxu0 0
    %827 = vmatpush1.bf16.xpose.msra.mxu0 0
    %828 = vmatprep.subr.bf16.mxu0 0
    %829 = vmatpush1.bf16.xpose.msra.mxu0 0
    %830 = vmatprep.subr.bf16.mxu0 0
    %831 = vmatpush1.bf16.xpose.msra.mxu0 0
    %832 = vmatprep.subr.bf16.mxu0 0
    %833 = vmatpush1.bf16.xpose.msra.mxu0 0
    %834 = vmatprep.subr.bf16.mxu0 0
    %835 = vmatpush1.bf16.xpose.msra.mxu0 0
    %836 = vmatprep.subr.bf16.mxu0 0
    %837 = vmatpush1.bf16.xpose.msra.mxu0 0
    %838 = vmatprep.subr.bf16.mxu0 0
    %839 = vmatpush1.bf16.xpose.msra.mxu0 0
    %840 = vmatprep.subr.bf16.mxu0 0
    %841 = vmatpush1.bf16.xpose.msra.mxu0 0
    %842 = vmatprep.subr.bf16.mxu0 0
    %843 = vmatpush1.bf16.xpose.msra.mxu0 0
    %844 = vmatprep.mubr.bf16.mxu0 0
    %845 = vmatmul.mubr.bf16.gmra.mrb[0].mxu0 %v795
    %v846 = vpop.f32.mrb[0].mxu0
    %v847 = vadd.f32 0.0, %v846
    %v848 = vpop.f32.mrb[0].mxu0
    %v849 = vpop.f32.mrb[0].mxu0
    %v850 = vadd.f32 0.0, %v849
    %v851 = vpop.f32.mrb[0].mxu0
    %852 = vmatprep.mubr.bf16.mxu0 0
    %853 = vmatmul.mubr.bf16.gmra.mrb[0].mxu0 %v798
    %v854 = vpop.f32.mrb[0].mxu0
    %v855 = vadd.f32 0.0, %v854
    %v856 = vpop.f32.mrb[0].mxu0
    %v857 = vpop.f32.mrb[0].mxu0
    %v858 = vadd.f32 0.0, %v857
    %v859 = vpop.f32.mrb[0].mxu0
    %860 = vmatprep.mubr.bf16.mxu0 0
    %861 = vmatmul.mubr.bf16.gmra.mrb[0].mxu0 %v801
    %v862 = vpop.f32.mrb[0].mxu0
    %v863 = vadd.f32 0.0, %v862
    %v864 = vpop.f32.mrb[0].mxu0
    %v865 = vpop.f32.mrb[0].mxu0
    %v866 = vadd.f32 0.0, %v865
    %v867 = vpop.f32.mrb[0].mxu0
    %868 = vdwg.mxu0
    %v869 = vsel %vm38, -1e+30, %v847
    %v870 = vsel %vm38, -1e+30, %v850
    %v871 = vsel %vm38, -1e+30, %v855
    %v872 = vsel %vm38, -1e+30, %v858
    %v873 = vsel %vm38, -1e+30, %v863
    %v874 = vsel %vm38, -1e+30, %v866
    %v875 = vsel %vm151, %v869, -inf
    %876 = vmax.xlane.f32.xlu0 %v875
    %v877 = vpop.xlane.xlu0 %876
    %v878 = vsel %vm151, %v870, -inf
    %879 = vmax.xlane.f32.xlu0 %v878
    %v880 = vpop.xlane.xlu0 %879
    %v881 = vsel %vm151, %v871, -inf
    %882 = vmax.xlane.f32.xlu0 %v881
    %v883 = vpop.xlane.xlu0 %882
    %v884 = vsel %vm151, %v872, -inf
    %885 = vmax.xlane.f32.xlu0 %v884
    %v886 = vpop.xlane.xlu0 %885
    %v887 = vsel %vm151, %v873, -inf
    %888 = vmax.xlane.f32.xlu0 %v887
    %v889 = vpop.xlane.xlu0 %888
    %v890 = vsel %vm151, %v874, -inf
    %891 = vmax.xlane.f32.xlu0 %v890
    %v892 = vpop.xlane.xlu0 %891
    %v893 = vsub.f32 %v869, %v877
    %v894 = vsub.f32 %v870, %v880
    %v895 = vsub.f32 %v871, %v883
    %v896 = vsub.f32 %v872, %v886
    %v897 = vsub.f32 %v873, %v889
    %v898 = vsub.f32 %v874, %v892
    %v899 = vmul.f32 %v893, 1.442695
    %v900 = vpow.pop %v899
    %v901 = vmul.f32 %v894, 1.442695
    %v902 = vpow.pop %v901
    %v903 = vmul.f32 %v895, 1.442695
    %v904 = vpow.pop %v903
    %v905 = vmul.f32 %v896, 1.442695
    %v906 = vpow.pop %v905
    %v907 = vmul.f32 %v897, 1.442695
    %v908 = vpow.pop %v907
    %v909 = vmul.f32 %v898, 1.442695
    %v910 = vpow.pop %v909
    %v911 = vsel %vm151, %v900, 0.0
    %912 = vadd.xlane.f32.xlu0 %v911
    %v913 = vpop.xlane.xlu0 %912
    %v914 = vsel %vm151, %v902, 0.0
    %915 = vadd.xlane.f32.xlu0 %v914
    %v916 = vpop.xlane.xlu0 %915
    %v917 = vsel %vm151, %v904, 0.0
    %918 = vadd.xlane.f32.xlu0 %v917
    %v919 = vpop.xlane.xlu0 %918
    %v920 = vsel %vm151, %v906, 0.0
    %921 = vadd.xlane.f32.xlu0 %v920
    %v922 = vpop.xlane.xlu0 %921
    %v923 = vsel %vm151, %v908, 0.0
    %924 = vadd.xlane.f32.xlu0 %v923
    %v925 = vpop.xlane.xlu0 %924
    %v926 = vsel %vm151, %v910, 0.0
    %927 = vadd.xlane.f32.xlu0 %v926
    %v928 = vpop.xlane.xlu0 %927
    %v929 = vpack.c.bf16 %v902, %v900
    %v930 = vpack.c.bf16 %v906, %v904
    %v931 = vpack.c.bf16 %v910, %v908
    %932 = vrot.lane.b32.xlu0 %v221, 32
    %v933 = vpop.permute.xlu0 %932
    %934 = vrot.lane.b32.xlu0 %v222, 32
    %v935 = vpop.permute.xlu0 %934
    %936 = vrot.lane.b32.xlu0 %v223, 32
    %v937 = vpop.permute.xlu0 %936
    %v942 = vsel %vm151, %v929, 0
    %v945 = vsel %vm151, %v930, 0
    %v948 = vsel %vm151, %v931, 0
    %950 = vmatprep.subr.bf16.mxu0 0
    %951 = vmatpush1.bf16.msra.mxu0 %v933
    %952 = vmatprep.subr.bf16.mxu0 0
    %953 = vmatpush1.bf16.msra.mxu0 %v935
    %954 = vmatprep.subr.bf16.mxu0 0
    %955 = vmatpush1.bf16.msra.mxu0 %v937
    %956 = vmatprep.subr.bf16.mxu0 0
    %957 = vmatpush1.bf16.msra.mxu0 0
    %958 = vmatprep.subr.bf16.mxu0 0
    %959 = vmatpush1.bf16.msra.mxu0 0
    %960 = vmatprep.subr.bf16.mxu0 0
    %961 = vmatpush1.bf16.msra.mxu0 0
    %962 = vmatprep.subr.bf16.mxu0 0
    %963 = vmatpush1.bf16.msra.mxu0 0
    %964 = vmatprep.subr.bf16.mxu0 0
    %965 = vmatpush1.bf16.msra.mxu0 0
    %966 = vmatprep.subr.bf16.mxu0 0
    %967 = vmatpush1.bf16.msra.mxu0 0
    %968 = vmatprep.subr.bf16.mxu0 0
    %969 = vmatpush1.bf16.msra.mxu0 0
    %970 = vmatprep.subr.bf16.mxu0 0
    %971 = vmatpush1.bf16.msra.mxu0 0
    %972 = vmatprep.subr.bf16.mxu0 0
    %973 = vmatpush1.bf16.msra.mxu0 0
    %974 = vmatprep.subr.bf16.mxu0 0
    %975 = vmatpush1.bf16.msra.mxu0 0
    %976 = vmatprep.subr.bf16.mxu0 0
    %977 = vmatpush1.bf16.msra.mxu0 0
    %978 = vmatprep.subr.bf16.mxu0 0
    %979 = vmatpush1.bf16.msra.mxu0 0
    %980 = vmatprep.subr.bf16.mxu0 0
    %981 = vmatpush1.bf16.msra.mxu0 0
    %982 = vmatprep.mubr.bf16.mxu0 0
    %983 = vmatmul.mubr.bf16.gmra.mrb[0].mxu0 %v942
    %v984 = vpop.f32.mrb[0].mxu0
    %v985 = vadd.f32 0.0, %v984
    %v986 = vpop.f32.mrb[0].mxu0
    %v987 = vpop.f32.mrb[0].mxu0
    %v988 = vadd.f32 0.0, %v987
    %v989 = vpop.f32.mrb[0].mxu0
    %990 = vmatprep.mubr.bf16.mxu0 0
    %991 = vmatmul.mubr.bf16.gmra.mrb[0].mxu0 %v945
    %v992 = vpop.f32.mrb[0].mxu0
    %v993 = vadd.f32 0.0, %v992
    %v994 = vpop.f32.mrb[0].mxu0
    %v995 = vpop.f32.mrb[0].mxu0
    %v996 = vadd.f32 0.0, %v995
    %v997 = vpop.f32.mrb[0].mxu0
    %998 = vmatprep.mubr.bf16.mxu0 0
    %999 = vmatmul.mubr.bf16.gmra.mrb[0].mxu0 %v948
    %v1000 = vpop.f32.mrb[0].mxu0
    %v1001 = vadd.f32 0.0, %v1000
    %v1002 = vpop.f32.mrb[0].mxu0
    %v1003 = vpop.f32.mrb[0].mxu0
    %v1004 = vadd.f32 0.0, %v1003
    %v1005 = vpop.f32.mrb[0].mxu0
    %1006 = vdwg.mxu0
    %v1007 = vrcp.pop %v913
    %v1008 = vrcp.pop %v916
    %v1009 = vrcp.pop %v919
    %v1010 = vrcp.pop %v922
    %v1011 = vrcp.pop %v925
    %v1012 = vrcp.pop %v928
    %v1013 = vmul.f32 %v985, %v1007
    %v1014 = vmul.f32 %v988, %v1008
    %v1015 = vmul.f32 %v993, %v1009
    %v1016 = vmul.f32 %v996, %v1010
    %v1017 = vmul.f32 %v1001, %v1011
    %v1018 = vmul.f32 %v1004, %v1012
    %1025 = vrot.lane.b32.xlu0 %v539, 32
    %v1026 = vpop.permute.xlu0 %1025
    %1027 = vrot.lane.b32.xlu0 %v540, 32
    %v1028 = vpop.permute.xlu0 %1027
    %1029 = vrot.lane.b32.xlu0 %v541, 32
    %v1030 = vpop.permute.xlu0 %1029
    %1031 = vrot.lane.b32.xlu0 %v542, 32
    %v1032 = vpop.permute.xlu0 %1031
    %1033 = vrot.lane.b32.xlu0 %v543, 32
    %v1034 = vpop.permute.xlu0 %1033
    %1035 = vrot.lane.b32.xlu0 %v544, 32
    %v1036 = vpop.permute.xlu0 %1035
    %1049 = vrot.lane.b32.xlu0 %v776, 64
    %v1050 = vpop.permute.xlu0 %1049
    %1051 = vrot.lane.b32.xlu0 %v777, 64
    %v1052 = vpop.permute.xlu0 %1051
    %1053 = vrot.lane.b32.xlu0 %v778, 64
    %v1054 = vpop.permute.xlu0 %1053
    %1055 = vrot.lane.b32.xlu0 %v779, 64
    %v1056 = vpop.permute.xlu0 %1055
    %1057 = vrot.lane.b32.xlu0 %v780, 64
    %v1058 = vpop.permute.xlu0 %1057
    %1059 = vrot.lane.b32.xlu0 %v781, 64
    %v1060 = vpop.permute.xlu0 %1059
    %1073 = vrot.lane.b32.xlu0 %v1013, 96
    %v1074 = vpop.permute.xlu0 %1073
    %1075 = vrot.lane.b32.xlu0 %v1014, 96
    %v1076 = vpop.permute.xlu0 %1075
    %1077 = vrot.lane.b32.xlu0 %v1015, 96
    %v1078 = vpop.permute.xlu0 %1077
    %1079 = vrot.lane.b32.xlu0 %v1016, 96
    %v1080 = vpop.permute.xlu0 %1079
    %1081 = vrot.lane.b32.xlu0 %v1017, 96
    %v1082 = vpop.permute.xlu0 %1081
    %1083 = vrot.lane.b32.xlu0 %v1018, 96
    %v1084 = vpop.permute.xlu0 %1083
    %v1091 = vsel %vm69, %v299, %v1026
    %v1092 = vsel %vm69, %v300, %v1028
    %v1093 = vsel %vm69, %v301, %v1030
    %v1094 = vsel %vm69, %v302, %v1032
    %v1095 = vsel %vm69, %v303, %v1034
    %v1096 = vsel %vm69, %v304, %v1036
    %vm1097 = vcmask 523264
    %v1098 = vsel %vm1097, %v1091, %v1050
    %v1099 = vsel %vm1097, %v1092, %v1052
    %v1100 = vsel %vm1097, %v1093, %v1054
    %v1101 = vsel %vm1097, %v1094, %v1056
    %v1102 = vsel %vm1097, %v1095, %v1058
    %v1103 = vsel %vm1097, %v1096, %v1060
    %vm1104 = vcmask 785408
    %v1105 = vsel %vm1104, %v1098, %v1074
    %v1106 = vsel %vm1104, %v1099, %v1076
    %v1107 = vsel %vm1104, %v1100, %v1078
    %v1108 = vsel %vm1104, %v1101, %v1080
    %v1109 = vsel %vm1104, %v1102, %v1082
    %v1110 = vsel %vm1104, %v1103, %v1084
    %v1111 = vpack.c.bf16 %v1106, %v1105
    %v1112 = vpack.c.bf16 %v1108, %v1107
    %v1113 = vpack.c.bf16 %v1110, %v1109
    %v1117 = vunpack.c.l.b16 %v1111
    %v1118 = vunpack.c.h.b16 %v1111
    %v1119 = vunpack.c.l.b16 %v1112
    %v1120 = vunpack.c.h.b16 %v1112
    %v1121 = vunpack.c.l.b16 %v1113
    %v1122 = vunpack.c.h.b16 %v1113
    %v1123 = vpack.c.b16 %v1117, %v1117
    %v1124 = vpack.c.b16 %v1118, %v1118
    %v1125 = vpack.c.b16 %v1119, %v1119
    %v1126 = vpack.c.b16 %v1120, %v1120
    %v1127 = vpack.c.b16 %v1121, %v1121
    %v1128 = vpack.c.b16 %v1122, %v1122
    %1135 = vst [vmem:[#allocation5] sm:$0xf] %v1123
    %1136 = vst [vmem:[#allocation5 + $0x4] sm:$0xf] %v1124
    %1137 = vst [vmem:[#allocation5 + $0x8] sm:$0xf] %v1125
    %1138 = vst [vmem:[#allocation5 + $0xc] sm:$0xf] %v1126
    %1139 = vst [vmem:[#allocation5 + $0x10] sm:$0xf] %v1127
    %1140 = vst [vmem:[#allocation5 + $0x14] sm:$0xf] %v1128
    // Predicated region
    $region10: #{_forward_jit.11} parent=1 // pred_check
      _
    $region11: #{_forward_jit.11} parent=1 // pred_check_branch
      %1142 = sbr.rel (0) target = $region13
    $region12: #{_forward_jit.11} parent=1 // pred_region
      %s1144 = ssub.s32 384, 384
      %1145 = vsyncadd [#allocation4], %s1144
      %s1146 = sshll.u32 [#allocation5], 4
      %s1147 = int_to_ptr.vmem [resolvable:$true] %s1146
      %1152 = dma.vmem_to_hbm [thread:$0]  %s1147, 384, %s1, [#allocation4], 64, 64, 4
    $region13: #{_forward_jit.11} parent=1 // pred_fallthru
      _
    // Predicated region
    $region14: #{_forward_jit.11} parent=1 // pred_check
      _
    $region15: #{_forward_jit.11} parent=1 // pred_check_branch
      %1154 = sbr.rel (0) target = $region17
    $region16: #{_forward_jit.11} parent=1 // pred_region
      %1155 = dma.done [#allocation4], 384
    $region17: #{_forward_jit.11} parent=1 // pred_fallthru
      _
    %1156 = vsyncpa [#allocation3], 1
    %1157 = vsyncpa [#allocation4], 1

// kernel: _forward_jit.13
$region0: #{_forward_jit.13}
  #allocation0 [shape = 'u32[]', space=smem, size = 0x4, offset = 0x4, fixed_abs, tag = 'smem constant byte address 0x4 - core index']
  #allocation1 [shape = 'u32[144,128]{1,0:T(1,128)}', space=vmem, size = 0x12000, scoped, tag = 'internal scratch']
  %s0 = inlined_call_operand.hbm [shape: f32[48,128], index: 0, kind: input, shape index: {}]
  %s1 = inlined_call_operand.hbm [shape: f32[2,128], index: 1, kind: input, shape index: {}]
  %s2 = inlined_call_operand.hbm [shape: bf16[128,256], index: 2, kind: input, shape index: {}]
  %s3 = inlined_call_operand.hbm [shape: f32[1,256], index: 3, kind: input, shape index: {}]
  %s4 = inlined_call_operand.hbm [shape: bf16[48,256], index: 4, kind: output, shape index: {}]
  %s5 = sld [smem:[#allocation0]]
  $region42: #{_forward_jit.13} parent=0
    _
  %s7 = ssub.s32 1, %s5
  %s8 = scalar_select 0, %s7, %s5
  $region1: #{_forward_jit.13} parent=0
    #allocation2 [shape = 'u8[24576]{0}', space=vmem, size = 0x6000, scoped, tag = 'input window, operand 0, single buffered']
    #allocation3 [shape = 's32[1]{0}', space=sflag, size = 0x4, scoped, tag = 'scoped memory for _forward_jit.13']
    #allocation4 [shape = 's32[1]{0}', space=sflag, size = 0x4, scoped, tag = 'scoped memory for _forward_jit.13']
    #allocation5 [shape = 'u8[1024]{0}', space=vmem, size = 0x400, scoped, tag = 'input window, operand 1, single buffered']
    #allocation6 [shape = 's32[1]{0}', space=sflag, size = 0x4, scoped, tag = 'scoped memory for _forward_jit.13']
    #allocation7 [shape = 'u8[65536]{0}', space=vmem, size = 0x10000, scoped, tag = 'input window, operand 2, single buffered']
    #allocation8 [shape = 'u8[1024]{0}', space=vmem, size = 0x400, scoped, tag = 'input window, operand 3, single buffered']
    #allocation9 [shape = 's32[1]{0}', space=sflag, size = 0x4, scoped, tag = 'scoped memory for _forward_jit.13']
    #allocation10 [shape = 'u8[24576]{0}', space=vmem, size = 0x6000, scoped, tag = 'output window, operand 0, single buffered']
    %9 = vsyncpa [#allocation3], 0
    %10 = vsyncpa [#allocation6], 0
    %11 = vsyncpa [#allocation9], 0
    %12 = vsyncpa [#allocation4], 0
    // Predicated region
    $region2: #{_forward_jit.13} parent=1 // pred_check
      _
    $region3: #{_forward_jit.13} parent=1 // pred_check_branch
      %14 = sbr.rel (0) target = $region5
    $region4: #{_forward_jit.13} parent=1 // pred_region
      %s16 = ssub.s32 768, 768
      %17 = vsyncadd [#allocation3], %s16
      %s18 = sshll.u32 [#allocation2], 4
      %s19 = int_to_ptr.vmem [resolvable:$true] %s18
      %24 = dma.hbm_to_vmem [thread:$0]  %s0, 768, %s19, [#allocation3], 128, 128, 8
    $region5: #{_forward_jit.13} parent=1 // pred_fallthru
      _
    // Predicated region
    $region6: #{_forward_jit.13} parent=1 // pred_check
      _
    $region7: #{_forward_jit.13} parent=1 // pred_check_branch
      %26 = sbr.rel (0) target = $region9
    $region8: #{_forward_jit.13} parent=1 // pred_region
      %s28 = ssub.s32 32, 32
      %29 = vsyncadd [#allocation6], %s28
      %s31 = sshll.u32 [#allocation5], 4
      %s32 = int_to_ptr.vmem [resolvable:$true] %s31
      %34 = dma.hbm_to_vmem [thread:$0]  %s1, 32, %s32, [#allocation6]
    $region9: #{_forward_jit.13} parent=1 // pred_fallthru
      _
    // Predicated region
    $region10: #{_forward_jit.13} parent=1 // pred_check
      _
    $region11: #{_forward_jit.13} parent=1 // pred_check_branch
      %36 = sbr.rel (0) target = $region13
    $region12: #{_forward_jit.13} parent=1 // pred_region
      %s38 = ssub.s32 2048, 2048
      %39 = vsyncadd [#allocation6], %s38
      %s40 = sshll.u32 [#allocation7], 4
      %s41 = int_to_ptr.vmem [resolvable:$true] %s40
      %46 = dma.hbm_to_vmem [thread:$0]  %s2, 2048, %s41, [#allocation6], 128, 128, 8
    $region13: #{_forward_jit.13} parent=1 // pred_fallthru
      _
    // Predicated region
    $region14: #{_forward_jit.13} parent=1 // pred_check
      _
    $region15: #{_forward_jit.13} parent=1 // pred_check_branch
      %48 = sbr.rel (0) target = $region17
    $region16: #{_forward_jit.13} parent=1 // pred_region
      %s50 = ssub.s32 32, 32
      %51 = vsyncadd [#allocation9], %s50
      %s53 = sshll.u32 [#allocation8], 4
      %s54 = int_to_ptr.vmem [resolvable:$true] %s53
      %56 = dma.hbm_to_vmem [thread:$0]  %s3, 32, %s54, [#allocation9]
    $region17: #{_forward_jit.13} parent=1 // pred_fallthru
      _
    // Predicated region
    $region18: #{_forward_jit.13} parent=1 // pred_check
      _
    $region19: #{_forward_jit.13} parent=1 // pred_check_branch
      %58 = sbr.rel (0) target = $region21
    $region20: #{_forward_jit.13} parent=1 // pred_region
      %59 = dma.done [#allocation3], 768
    $region21: #{_forward_jit.13} parent=1 // pred_fallthru
      _
    // Predicated region
    $region22: #{_forward_jit.13} parent=1 // pred_check
      _
    $region23: #{_forward_jit.13} parent=1 // pred_check_branch
      %61 = sbr.rel (0) target = $region25
    $region24: #{_forward_jit.13} parent=1 // pred_region
      %62 = dma.done [#allocation6], 32
    $region25: #{_forward_jit.13} parent=1 // pred_fallthru
      _
    // Predicated region
    $region26: #{_forward_jit.13} parent=1 // pred_check
      _
    $region27: #{_forward_jit.13} parent=1 // pred_check_branch
      %64 = sbr.rel (0) target = $region29
    $region28: #{_forward_jit.13} parent=1 // pred_region
      %65 = dma.done [#allocation6], 2048
    $region29: #{_forward_jit.13} parent=1 // pred_fallthru
      _
    // Predicated region
    $region30: #{_forward_jit.13} parent=1 // pred_check
      _
    $region31: #{_forward_jit.13} parent=1 // pred_check_branch
      %67 = sbr.rel (0) target = $region33
    $region32: #{_forward_jit.13} parent=1 // pred_region
      %68 = dma.done [#allocation9], 32
    $region33: #{_forward_jit.13} parent=1 // pred_fallthru
      _
    %v70 = vld [vmem:[#allocation2] sm:$0xff]
    %v71 = vld [vmem:[#allocation2 + $0x8] sm:$0xff]
    %v72 = vld [vmem:[#allocation2 + $0x10] sm:$0xff]
    %v73 = vld [vmem:[#allocation2 + $0x18] sm:$0xff]
    %v74 = vld [vmem:[#allocation2 + $0x20] sm:$0xff]
    %v75 = vld [vmem:[#allocation2 + $0x28] sm:$0xff]
    %76 = vadd.xlane.f32.xlu0 %v70
    %v77 = vpop.xlane.xlu0 %76
    %78 = vadd.xlane.f32.xlu0 %v71
    %v79 = vpop.xlane.xlu0 %78
    %80 = vadd.xlane.f32.xlu0 %v72
    %v81 = vpop.xlane.xlu0 %80
    %82 = vadd.xlane.f32.xlu0 %v73
    %v83 = vpop.xlane.xlu0 %82
    %84 = vadd.xlane.f32.xlu0 %v74
    %v85 = vpop.xlane.xlu0 %84
    %86 = vadd.xlane.f32.xlu0 %v75
    %v87 = vpop.xlane.xlu0 %86
    %v88 = vrcp.pop 128.0
    %v89 = vmul.f32 %v77, %v88
    %v90 = vmul.f32 %v79, %v88
    %v91 = vmul.f32 %v81, %v88
    %v92 = vmul.f32 %v83, %v88
    %v93 = vmul.f32 %v85, %v88
    %v94 = vmul.f32 %v87, %v88
    %v95 = vsub.f32 %v70, %v89
    %v96 = vsub.f32 %v71, %v90
    %v97 = vsub.f32 %v72, %v91
    %v98 = vsub.f32 %v73, %v92
    %v99 = vsub.f32 %v74, %v93
    %v100 = vsub.f32 %v75, %v94
    %v101 = vmul.f32 %v95, %v95
    %v102 = vmul.f32 %v96, %v96
    %v103 = vmul.f32 %v97, %v97
    %v104 = vmul.f32 %v98, %v98
    %v105 = vmul.f32 %v99, %v99
    %v106 = vmul.f32 %v100, %v100
    %107 = vadd.xlane.f32.xlu0 %v101
    %v108 = vpop.xlane.xlu0 %107
    %109 = vadd.xlane.f32.xlu0 %v102
    %v110 = vpop.xlane.xlu0 %109
    %111 = vadd.xlane.f32.xlu0 %v103
    %v112 = vpop.xlane.xlu0 %111
    %113 = vadd.xlane.f32.xlu0 %v104
    %v114 = vpop.xlane.xlu0 %113
    %115 = vadd.xlane.f32.xlu0 %v105
    %v116 = vpop.xlane.xlu0 %115
    %117 = vadd.xlane.f32.xlu0 %v106
    %v118 = vpop.xlane.xlu0 %117
    %v119 = vmul.f32 %v108, %v88
    %v120 = vmul.f32 %v110, %v88
    %v121 = vmul.f32 %v112, %v88
    %v122 = vmul.f32 %v114, %v88
    %v123 = vmul.f32 %v116, %v88
    %v124 = vmul.f32 %v118, %v88
    %v125 = vadd.f32 %v119, 1e-05
    %v126 = vadd.f32 %v120, 1e-05
    %v127 = vadd.f32 %v121, 1e-05
    %v128 = vadd.f32 %v122, 1e-05
    %v129 = vadd.f32 %v123, 1e-05
    %v130 = vadd.f32 %v124, 1e-05
    %v131 = vrsqrt.pop %v125
    %v132 = vrsqrt.pop %v126
    %v133 = vrsqrt.pop %v127
    %v134 = vrsqrt.pop %v128
    %v135 = vrsqrt.pop %v129
    %v136 = vrsqrt.pop %v130
    %v137 = vmul.f32 %v95, %v131
    %v138 = vmul.f32 %v96, %v132
    %v139 = vmul.f32 %v97, %v133
    %v140 = vmul.f32 %v98, %v134
    %v141 = vmul.f32 %v99, %v135
    %v142 = vmul.f32 %v100, %v136
    %v143 = vld [vmem:[#allocation5] sm:$0x3]
    %v144 = vlaneseq
    %v145 = vshrl.u32 %v144, 7
    %v146 = vsub.s32 0, %v145
    %v147 = vrot.slane %v143, %v146
    %v148 = vmul.f32 %v137, %v147
    %v149 = vmul.f32 %v138, %v147
    %v150 = vmul.f32 %v139, %v147
    %v151 = vmul.f32 %v140, %v147
    %v152 = vmul.f32 %v141, %v147
    %v153 = vmul.f32 %v142, %v147
    %v154 = vlaneseq
    %v155 = vshrl.u32 %v154, 7
    %v156 = vsub.s32 1, %v155
    %v157 = vrot.slane %v143, %v156
    %v158 = vadd.f32 %v148, %v157
    %v159 = vadd.f32 %v149, %v157
    %v160 = vadd.f32 %v150, %v157
    %v161 = vadd.f32 %v151, %v157
    %v162 = vadd.f32 %v152, %v157
    %v163 = vadd.f32 %v153, %v157
    %v164 = vpack.c.bf16 %v159, %v158
    %v165 = vpack.c.bf16 %v161, %v160
    %v166 = vpack.c.bf16 %v163, %v162
    %v167 = vld [vmem:[#allocation7] sm:$0xff]
    %v168 = vld [vmem:[#allocation7 + $0x8] sm:$0xff]
    %v169 = vld [vmem:[#allocation7 + $0x10] sm:$0xff]
    %v170 = vld [vmem:[#allocation7 + $0x18] sm:$0xff]
    %v171 = vld [vmem:[#allocation7 + $0x20] sm:$0xff]
    %v172 = vld [vmem:[#allocation7 + $0x28] sm:$0xff]
    %v173 = vld [vmem:[#allocation7 + $0x30] sm:$0xff]
    %v174 = vld [vmem:[#allocation7 + $0x38] sm:$0xff]
    %v175 = vld [vmem:[#allocation7 + $0x40] sm:$0xff]
    %v176 = vld [vmem:[#allocation7 + $0x48] sm:$0xff]
    %v177 = vld [vmem:[#allocation7 + $0x50] sm:$0xff]
    %v178 = vld [vmem:[#allocation7 + $0x58] sm:$0xff]
    %v179 = vld [vmem:[#allocation7 + $0x60] sm:$0xff]
    %v180 = vld [vmem:[#allocation7 + $0x68] sm:$0xff]
    %v181 = vld [vmem:[#allocation7 + $0x70] sm:$0xff]
    %v182 = vld [vmem:[#allocation7 + $0x78] sm:$0xff]
    %v183 = vld [vmem:[#allocation8] sm:$0x3]
    %v185 = vlaneseq
    %v186 = vshrl.u32 %v185, 7
    %v187 = vsub.s32 0, %v186
    %v188 = vrot.slane %v183, %v187
    %v189 = vlaneseq
    %v190 = vshrl.u32 %v189, 7
    %v191 = vsub.s32 1, %v190
    %v192 = vrot.slane %v183, %v191
    %v211 = vunpack.c.l.b16 %v167
    %v212 = vunpack.c.h.b16 %v167
    %v213 = vunpack.c.l.b16 %v168
    %v214 = vunpack.c.h.b16 %v168
    %v215 = vunpack.c.l.b16 %v169
    %v216 = vunpack.c.h.b16 %v169
    %v217 = vunpack.c.l.b16 %v170
    %v218 = vunpack.c.h.b16 %v170
    %v219 = vunpack.c.l.b16 %v171
    %v220 = vunpack.c.h.b16 %v171
    %v221 = vunpack.c.l.b16 %v172
    %v222 = vunpack.c.h.b16 %v172
    %v223 = vunpack.c.l.b16 %v173
    %v224 = vunpack.c.h.b16 %v173
    %v225 = vunpack.c.l.b16 %v174
    %v226 = vunpack.c.h.b16 %v174
    %v227 = vunpack.c.l.b16 %v175
    %v228 = vunpack.c.h.b16 %v175
    %v229 = vunpack.c.l.b16 %v176
    %v230 = vunpack.c.h.b16 %v176
    %v231 = vunpack.c.l.b16 %v177
    %v232 = vunpack.c.h.b16 %v177
    %v233 = vunpack.c.l.b16 %v178
    %v234 = vunpack.c.h.b16 %v178
    %v235 = vunpack.c.l.b16 %v179
    %v236 = vunpack.c.h.b16 %v179
    %v237 = vunpack.c.l.b16 %v180
    %v238 = vunpack.c.h.b16 %v180
    %v239 = vunpack.c.l.b16 %v181
    %v240 = vunpack.c.h.b16 %v181
    %v241 = vunpack.c.l.b16 %v182
    %v242 = vunpack.c.h.b16 %v182
    %v243 = vpack.c.b16 %v213, %v211
    %v244 = vpack.c.b16 %v214, %v212
    %v245 = vpack.c.b16 %v217, %v215
    %v246 = vpack.c.b16 %v218, %v216
    %v247 = vpack.c.b16 %v221, %v219
    %v248 = vpack.c.b16 %v222, %v220
    %v249 = vpack.c.b16 %v225, %v223
    %v250 = vpack.c.b16 %v226, %v224
    %v251 = vpack.c.b16 %v229, %v227
    %v252 = vpack.c.b16 %v230, %v228
    %v253 = vpack.c.b16 %v233, %v231
    %v254 = vpack.c.b16 %v234, %v232
    %v255 = vpack.c.b16 %v237, %v235
    %v256 = vpack.c.b16 %v238, %v236
    %v257 = vpack.c.b16 %v241, %v239
    %v258 = vpack.c.b16 %v242, %v240
    %275 = vmatprep.subr.bf16.mxu0 %v244
    %276 = vmatpush1.bf16.msra.mxu0 %v243
    %277 = vmatprep.subr.bf16.mxu0 %v246
    %278 = vmatpush1.bf16.msra.mxu0 %v245
    %279 = vmatprep.subr.bf16.mxu0 %v248
    %280 = vmatpush1.bf16.msra.mxu0 %v247
    %281 = vmatprep.subr.bf16.mxu0 %v250
    %282 = vmatpush1.bf16.msra.mxu0 %v249
    %283 = vmatprep.subr.bf16.mxu0 %v252
    %284 = vmatpush1.bf16.msra.mxu0 %v251
    %285 = vmatprep.subr.bf16.mxu0 %v254
    %286 = vmatpush1.bf16.msra.mxu0 %v253
    %287 = vmatprep.subr.bf16.mxu0 %v256
    %288 = vmatpush1.bf16.msra.mxu0 %v255
    %289 = vmatprep.subr.bf16.mxu0 %v258
    %290 = vmatpush1.bf16.msra.mxu0 %v257
    %291 = vmatprep.subr.bf16.mxu0 0
    %292 = vmatpush1.bf16.msra.mxu0 0
    %293 = vmatprep.subr.bf16.mxu0 0
    %294 = vmatpush1.bf16.msra.mxu0 0
    %295 = vmatprep.subr.bf16.mxu0 0
    %296 = vmatpush1.bf16.msra.mxu0 0
    %297 = vmatprep.subr.bf16.mxu0 0
    %298 = vmatpush1.bf16.msra.mxu0 0
    %299 = vmatprep.subr.bf16.mxu0 0
    %300 = vmatpush1.bf16.msra.mxu0 0
    %301 = vmatprep.subr.bf16.mxu0 0
    %302 = vmatpush1.bf16.msra.mxu0 0
    %303 = vmatprep.subr.bf16.mxu0 0
    %304 = vmatpush1.bf16.msra.mxu0 0
    %305 = vmatprep.subr.bf16.mxu0 0
    %306 = vmatpush1.bf16.msra.mxu0 0
    %307 = vmatprep.mubr.bf16.mxu0 0
    %308 = vmatmul.mubr.bf16.gmra.mrb[0].mxu0 %v164
    %v309 = vpop.f32.mrb[0].mxu0
    %v310 = vadd.f32 %v188, %v309
    %v311 = vpop.f32.mrb[0].mxu0
    %v312 = vadd.f32 %v192, %v311
    %v313 = vpop.f32.mrb[0].mxu0
    %v314 = vadd.f32 %v188, %v313
    %v315 = vpop.f32.mrb[0].mxu0
    %v316 = vadd.f32 %v192, %v315
    %317 = vmatprep.mubr.bf16.mxu0 0
    %318 = vmatmul.mubr.bf16.gmra.mrb[0].mxu0 %v165
    %v319 = vpop.f32.mrb[0].mxu0
    %v320 = vadd.f32 %v188, %v319
    %v321 = vpop.f32.mrb[0].mxu0
    %v322 = vadd.f32 %v192, %v321
    %v323 = vpop.f32.mrb[0].mxu0
    %v324 = vadd.f32 %v188, %v323
    %v325 = vpop.f32.mrb[0].mxu0
    %v326 = vadd.f32 %v192, %v325
    %327 = vmatprep.mubr.bf16.mxu0 0
    %328 = vmatmul.mubr.bf16.gmra.mrb[0].mxu0 %v166
    %v329 = vpop.f32.mrb[0].mxu0
    %v330 = vadd.f32 %v188, %v329
    %v331 = vpop.f32.mrb[0].mxu0
    %v332 = vadd.f32 %v192, %v331
    %v333 = vpop.f32.mrb[0].mxu0
    %v334 = vadd.f32 %v188, %v333
    %v335 = vpop.f32.mrb[0].mxu0
    %v336 = vadd.f32 %v192, %v335
    %337 = vdwg.mxu0
    %v338 = vmul.f32 %v310, %v310
    %v339 = vmul.f32 %v312, %v312
    %v340 = vmul.f32 %v314, %v314
    %v341 = vmul.f32 %v316, %v316
    %v342 = vmul.f32 %v320, %v320
    %v343 = vmul.f32 %v322, %v322
    %v344 = vmul.f32 %v324, %v324
    %v345 = vmul.f32 %v326, %v326
    %v346 = vmul.f32 %v330, %v330
    %v347 = vmul.f32 %v332, %v332
    %v348 = vmul.f32 %v334, %v334
    %v349 = vmul.f32 %v336, %v336
    %v350 = vmul.f32 %v310, %v338
    %v351 = vmul.f32 %v312, %v339
    %v352 = vmul.f32 %v314, %v340
    %v353 = vmul.f32 %v316, %v341
    %v354 = vmul.f32 %v320, %v342
    %v355 = vmul.f32 %v322, %v343
    %v356 = vmul.f32 %v324, %v344
    %v357 = vmul.f32 %v326, %v345
    %v358 = vmul.f32 %v330, %v346
    %v359 = vmul.f32 %v332, %v347
    %v360 = vmul.f32 %v334, %v348
    %v361 = vmul.f32 %v336, %v349
    %v362 = vmul.f32 %v350, 0.044715
    %v363 = vmul.f32 %v351, 0.044715
    %v364 = vmul.f32 %v352, 0.044715
    %v365 = vmul.f32 %v353, 0.044715
    %v366 = vmul.f32 %v354, 0.044715
    %v367 = vmul.f32 %v355, 0.044715
    %v368 = vmul.f32 %v356, 0.044715
    %v369 = vmul.f32 %v357, 0.044715
    %v370 = vmul.f32 %v358, 0.044715
    %v371 = vmul.f32 %v359, 0.044715
    %v372 = vmul.f32 %v360, 0.044715
    %v373 = vmul.f32 %v361, 0.044715
    %v374 = vadd.f32 %v310, %v362
    %v375 = vadd.f32 %v312, %v363
    %v376 = vadd.f32 %v314, %v364
    %v377 = vadd.f32 %v316, %v365
    %v378 = vadd.f32 %v320, %v366
    %v379 = vadd.f32 %v322, %v367
    %v380 = vadd.f32 %v324, %v368
    %v381 = vadd.f32 %v326, %v369
    %v382 = vadd.f32 %v330, %v370
    %v383 = vadd.f32 %v332, %v371
    %v384 = vadd.f32 %v334, %v372
    %v385 = vadd.f32 %v336, %v373
    %v386 = vmul.f32 %v374, 0.7978846
    %v387 = vmul.f32 %v375, 0.7978846
    %v388 = vmul.f32 %v376, 0.7978846
    %v389 = vmul.f32 %v377, 0.7978846
    %v390 = vmul.f32 %v378, 0.7978846
    %v391 = vmul.f32 %v379, 0.7978846
    %v392 = vmul.f32 %v380, 0.7978846
    %v393 = vmul.f32 %v381, 0.7978846
    %v394 = vmul.f32 %v382, 0.7978846
    %v395 = vmul.f32 %v383, 0.7978846
    %v396 = vmul.f32 %v384, 0.7978846
    %v397 = vmul.f32 %v385, 0.7978846
    %v398 = vtanh.pop %v386
    %v399 = vtanh.pop %v387
    %v400 = vtanh.pop %v388
    %v401 = vtanh.pop %v389
    %v402 = vtanh.pop %v390
    %v403 = vtanh.pop %v391
    %v404 = vtanh.pop %v392
    %v405 = vtanh.pop %v393
    %v406 = vtanh.pop %v394
    %v407 = vtanh.pop %v395
    %v408 = vtanh.pop %v396
    %v409 = vtanh.pop %v397
    %v410 = vadd.f32 %v398, 1.0
    %v411 = vadd.f32 %v399, 1.0
    %v412 = vadd.f32 %v400, 1.0
    %v413 = vadd.f32 %v401, 1.0
    %v414 = vadd.f32 %v402, 1.0
    %v415 = vadd.f32 %v403, 1.0
    %v416 = vadd.f32 %v404, 1.0
    %v417 = vadd.f32 %v405, 1.0
    %v418 = vadd.f32 %v406, 1.0
    %v419 = vadd.f32 %v407, 1.0
    %v420 = vadd.f32 %v408, 1.0
    %v421 = vadd.f32 %v409, 1.0
    %v422 = vmul.f32 %v410, 0.5
    %v423 = vmul.f32 %v411, 0.5
    %v424 = vmul.f32 %v412, 0.5
    %v425 = vmul.f32 %v413, 0.5
    %v426 = vmul.f32 %v414, 0.5
    %v427 = vmul.f32 %v415, 0.5
    %v428 = vmul.f32 %v416, 0.5
    %v429 = vmul.f32 %v417, 0.5
    %v430 = vmul.f32 %v418, 0.5
    %v431 = vmul.f32 %v419, 0.5
    %v432 = vmul.f32 %v420, 0.5
    %v433 = vmul.f32 %v421, 0.5
    %v434 = vmul.f32 %v310, %v422
    %v435 = vmul.f32 %v312, %v423
    %v436 = vmul.f32 %v314, %v424
    %v437 = vmul.f32 %v316, %v425
    %v438 = vmul.f32 %v320, %v426
    %v439 = vmul.f32 %v322, %v427
    %v440 = vmul.f32 %v324, %v428
    %v441 = vmul.f32 %v326, %v429
    %v442 = vmul.f32 %v330, %v430
    %v443 = vmul.f32 %v332, %v431
    %v444 = vmul.f32 %v334, %v432
    %v445 = vmul.f32 %v336, %v433
    %v446 = vpack.c.bf16 %v436, %v434
    %v447 = vpack.c.bf16 %v437, %v435
    %v448 = vpack.c.bf16 %v440, %v438
    %v449 = vpack.c.bf16 %v441, %v439
    %v450 = vpack.c.bf16 %v444, %v442
    %v451 = vpack.c.bf16 %v445, %v443
    %v458 = vunpack.c.l.b16 %v446
    %v459 = vunpack.c.l.b16 %v447
    %v460 = vunpack.c.h.b16 %v446
    %v461 = vunpack.c.h.b16 %v447
    %v462 = vunpack.c.l.b16 %v448
    %v463 = vunpack.c.l.b16 %v449
    %v464 = vunpack.c.h.b16 %v448
    %v465 = vunpack.c.h.b16 %v449
    %v466 = vunpack.c.l.b16 %v450
    %v467 = vunpack.c.l.b16 %v451
    %v468 = vunpack.c.h.b16 %v450
    %v469 = vunpack.c.h.b16 %v451
    %v470 = vpack.c.b16 %v459, %v458
    %v471 = vpack.c.b16 %v461, %v460
    %v472 = vpack.c.b16 %v463, %v462
    %v473 = vpack.c.b16 %v465, %v464
    %v474 = vpack.c.b16 %v467, %v466
    %v475 = vpack.c.b16 %v469, %v468
    %482 = vst [vmem:[#allocation10] sm:$0xff] %v470
    %483 = vst [vmem:[#allocation10 + $0x8] sm:$0xff] %v471
    %484 = vst [vmem:[#allocation10 + $0x10] sm:$0xff] %v472
    %485 = vst [vmem:[#allocation10 + $0x18] sm:$0xff] %v473
    %486 = vst [vmem:[#allocation10 + $0x20] sm:$0xff] %v474
    %487 = vst [vmem:[#allocation10 + $0x28] sm:$0xff] %v475
    // Predicated region
    $region34: #{_forward_jit.13} parent=1 // pred_check
      _
    $region35: #{_forward_jit.13} parent=1 // pred_check_branch
      %489 = sbr.rel (0) target = $region37
    $region36: #{_forward_jit.13} parent=1 // pred_region
      %s491 = ssub.s32 768, 768
      %492 = vsyncadd [#allocation4], %s491
      %s493 = sshll.u32 [#allocation10], 4
      %s494 = int_to_ptr.vmem [resolvable:$true] %s493
      %499 = dma.vmem_to_hbm [thread:$0]  %s494, 768, %s4, [#allocation4], 128, 128, 8
    $region37: #{_forward_jit.13} parent=1 // pred_fallthru
      _
    // Predicated region
    $region38: #{_forward_jit.13} parent=1 // pred_check
      _
    $region39: #{_forward_jit.13} parent=1 // pred_check_branch
      %501 = sbr.rel (0) target = $region41
    $region40: #{_forward_jit.13} parent=1 // pred_region
      %502 = dma.done [#allocation4], 768
    $region41: #{_forward_jit.13} parent=1 // pred_fallthru
      _
    %503 = vsyncpa [#allocation3], 1
    %504 = vsyncpa [#allocation6], 1
    %505 = vsyncpa [#allocation9], 1
    %506 = vsyncpa [#allocation4], 1

// kernel: _forward_jit.14
$region0: #{_forward_jit.14}
  #allocation0 [shape = 'u32[]', space=smem, size = 0x4, offset = 0x4, fixed_abs, tag = 'smem constant byte address 0x4 - core index']
  #allocation1 [shape = 'u32[144,128]{1,0:T(1,128)}', space=vmem, size = 0x12000, scoped, tag = 'internal scratch']
  %s0 = inlined_call_operand.hbm [shape: bf16[48,256], index: 0, kind: input, shape index: {}]
  %s1 = inlined_call_operand.hbm [shape: bf16[256,128], index: 1, kind: input, shape index: {}]
  %s2 = inlined_call_operand.hbm [shape: f32[1,128], index: 2, kind: input, shape index: {}]
  %s3 = inlined_call_operand.hbm [shape: f32[48,128], index: 3, kind: input, shape index: {}]
  %s4 = inlined_call_operand.hbm [shape: f32[48,128], index: 4, kind: output, shape index: {}]
  %s5 = sld [smem:[#allocation0]]
  $region42: #{_forward_jit.14} parent=0
    _
  %s7 = ssub.s32 1, %s5
  %s8 = scalar_select 0, %s7, %s5
  $region1: #{_forward_jit.14} parent=0
    #allocation2 [shape = 'u8[24576]{0}', space=vmem, size = 0x6000, scoped, tag = 'input window, operand 0, single buffered']
    #allocation3 [shape = 's32[1]{0}', space=sflag, size = 0x4, scoped, tag = 'scoped memory for _forward_jit.14']
    #allocation4 [shape = 's32[1]{0}', space=sflag, size = 0x4, scoped, tag = 'scoped memory for _forward_jit.14']
    #allocation5 [shape = 'u8[65536]{0}', space=vmem, size = 0x10000, scoped, tag = 'input window, operand 1, single buffered']
    #allocation6 [shape = 's32[1]{0}', space=sflag, size = 0x4, scoped, tag = 'scoped memory for _forward_jit.14']
    #allocation7 [shape = 'u8[512]{0}', space=vmem, size = 0x400, scoped, tag = 'input window, operand 2, single buffered']
    #allocation8 [shape = 'u8[24576]{0}', space=vmem, size = 0x6000, scoped, tag = 'input window, operand 3, single buffered']
    #allocation9 [shape = 's32[1]{0}', space=sflag, size = 0x4, scoped, tag = 'scoped memory for _forward_jit.14']
    #allocation10 [shape = 'u8[24576]{0}', space=vmem, size = 0x6000, scoped, tag = 'output window, operand 0, single buffered']
    %9 = vsyncpa [#allocation3], 0
    %10 = vsyncpa [#allocation6], 0
    %11 = vsyncpa [#allocation9], 0
    %12 = vsyncpa [#allocation4], 0
    // Predicated region
    $region2: #{_forward_jit.14} parent=1 // pred_check
      _
    $region3: #{_forward_jit.14} parent=1 // pred_check_branch
      %14 = sbr.rel (0) target = $region5
    $region4: #{_forward_jit.14} parent=1 // pred_region
      %s16 = ssub.s32 768, 768
      %17 = vsyncadd [#allocation3], %s16
      %s18 = sshll.u32 [#allocation2], 4
      %s19 = int_to_ptr.vmem [resolvable:$true] %s18
      %24 = dma.hbm_to_vmem [thread:$0]  %s0, 768, %s19, [#allocation3], 128, 128, 8
    $region5: #{_forward_jit.14} parent=1 // pred_fallthru
      _
    // Predicated region
    $region6: #{_forward_jit.14} parent=1 // pred_check
      _
    $region7: #{_forward_jit.14} parent=1 // pred_check_branch
      %26 = sbr.rel (0) target = $region9
    $region8: #{_forward_jit.14} parent=1 // pred_region
      %s28 = ssub.s32 2048, 2048
      %29 = vsyncadd [#allocation6], %s28
      %s30 = sshll.u32 [#allocation5], 4
      %s31 = int_to_ptr.vmem [resolvable:$true] %s30
      %36 = dma.hbm_to_vmem [thread:$0]  %s1, 2048, %s31, [#allocation6], 64, 64, 4
    $region9: #{_forward_jit.14} parent=1 // pred_fallthru
      _
    // Predicated region
    $region10: #{_forward_jit.14} parent=1 // pred_check
      _
    $region11: #{_forward_jit.14} parent=1 // pred_check_branch
      %38 = sbr.rel (0) target = $region13
    $region12: #{_forward_jit.14} parent=1 // pred_region
      %s40 = ssub.s32 16, 16
      %41 = vsyncadd [#allocation6], %s40
      %s43 = sshll.u32 [#allocation7], 4
      %s44 = int_to_ptr.vmem [resolvable:$true] %s43
      %46 = dma.hbm_to_vmem [thread:$0]  %s2, 16, %s44, [#allocation6]
    $region13: #{_forward_jit.14} parent=1 // pred_fallthru
      _
    // Predicated region
    $region14: #{_forward_jit.14} parent=1 // pred_check
      _
    $region15: #{_forward_jit.14} parent=1 // pred_check_branch
      %48 = sbr.rel (0) target = $region17
    $region16: #{_forward_jit.14} parent=1 // pred_region
      %s50 = ssub.s32 768, 768
      %51 = vsyncadd [#allocation9], %s50
      %s52 = sshll.u32 [#allocation8], 4
      %s53 = int_to_ptr.vmem [resolvable:$true] %s52
      %58 = dma.hbm_to_vmem [thread:$0]  %s3, 768, %s53, [#allocation9], 128, 128, 8
    $region17: #{_forward_jit.14} parent=1 // pred_fallthru
      _
    // Predicated region
    $region18: #{_forward_jit.14} parent=1 // pred_check
      _
    $region19: #{_forward_jit.14} parent=1 // pred_check_branch
      %60 = sbr.rel (0) target = $region21
    $region20: #{_forward_jit.14} parent=1 // pred_region
      %61 = dma.done [#allocation3], 768
    $region21: #{_forward_jit.14} parent=1 // pred_fallthru
      _
    // Predicated region
    $region22: #{_forward_jit.14} parent=1 // pred_check
      _
    $region23: #{_forward_jit.14} parent=1 // pred_check_branch
      %63 = sbr.rel (0) target = $region25
    $region24: #{_forward_jit.14} parent=1 // pred_region
      %64 = dma.done [#allocation6], 2048
    $region25: #{_forward_jit.14} parent=1 // pred_fallthru
      _
    // Predicated region
    $region26: #{_forward_jit.14} parent=1 // pred_check
      _
    $region27: #{_forward_jit.14} parent=1 // pred_check_branch
      %66 = sbr.rel (0) target = $region29
    $region28: #{_forward_jit.14} parent=1 // pred_region
      %67 = dma.done [#allocation6], 16
    $region29: #{_forward_jit.14} parent=1 // pred_fallthru
      _
    // Predicated region
    $region30: #{_forward_jit.14} parent=1 // pred_check
      _
    $region31: #{_forward_jit.14} parent=1 // pred_check_branch
      %69 = sbr.rel (0) target = $region33
    $region32: #{_forward_jit.14} parent=1 // pred_region
      %70 = dma.done [#allocation9], 768
    $region33: #{_forward_jit.14} parent=1 // pred_fallthru
      _
    %v72 = vld [vmem:[#allocation2] sm:$0xff]
    %v73 = vld [vmem:[#allocation2 + $0x8] sm:$0xff]
    %v74 = vld [vmem:[#allocation2 + $0x10] sm:$0xff]
    %v75 = vld [vmem:[#allocation2 + $0x18] sm:$0xff]
    %v76 = vld [vmem:[#allocation2 + $0x20] sm:$0xff]
    %v77 = vld [vmem:[#allocation2 + $0x28] sm:$0xff]
    %v78 = vld [vmem:[#allocation5] sm:$0xf]
    %v79 = vld [vmem:[#allocation5 + $0x4] sm:$0xf]
    %v80 = vld [vmem:[#allocation5 + $0x8] sm:$0xf]
    %v81 = vld [vmem:[#allocation5 + $0xc] sm:$0xf]
    %v82 = vld [vmem:[#allocation5 + $0x10] sm:$0xf]
    %v83 = vld [vmem:[#allocation5 + $0x14] sm:$0xf]
    %v84 = vld [vmem:[#allocation5 + $0x18] sm:$0xf]
    %v85 = vld [vmem:[#allocation5 + $0x1c] sm:$0xf]
    %v86 = vld [vmem:[#allocation5 + $0x20] sm:$0xf]
    %v87 = vld [vmem:[#allocation5 + $0x24] sm:$0xf]
    %v88 = vld [vmem:[#allocation5 + $0x28] sm:$0xf]
    %v89 = vld [vmem:[#allocation5 + $0x2c] sm:$0xf]
    %v90 = vld [vmem:[#allocation5 + $0x30] sm:$0xf]
    %v91 = vld [vmem:[#allocation5 + $0x34] sm:$0xf]
    %v92 = vld [vmem:[#allocation5 + $0x38] sm:$0xf]
    %v93 = vld [vmem:[#allocation5 + $0x3c] sm:$0xf]
    %v94 = vld [vmem:[#allocation5 + $0x40] sm:$0xf]
    %v95 = vld [vmem:[#allocation5 + $0x44] sm:$0xf]
    %v96 = vld [vmem:[#allocation5 + $0x48] sm:$0xf]
    %v97 = vld [vmem:[#allocation5 + $0x4c] sm:$0xf]
    %v98 = vld [vmem:[#allocation5 + $0x50] sm:$0xf]
    %v99 = vld [vmem:[#allocation5 + $0x54] sm:$0xf]
    %v100 = vld [vmem:[#allocation5 + $0x58] sm:$0xf]
    %v101 = vld [vmem:[#allocation5 + $0x5c] sm:$0xf]
    %v102 = vld [vmem:[#allocation5 + $0x60] sm:$0xf]
    %v103 = vld [vmem:[#allocation5 + $0x64] sm:$0xf]
    %v104 = vld [vmem:[#allocation5 + $0x68] sm:$0xf]
    %v105 = vld [vmem:[#allocation5 + $0x6c] sm:$0xf]
    %v106 = vld [vmem:[#allocation5 + $0x70] sm:$0xf]
    %v107 = vld [vmem:[#allocation5 + $0x74] sm:$0xf]
    %v108 = vld [vmem:[#allocation5 + $0x78] sm:$0xf]
    %v109 = vld [vmem:[#allocation5 + $0x7c] sm:$0xf]
    %v110 = vld [vmem:[#allocation7] sm:$0x1]
    %v112 = vlaneseq
    %v113 = vshrl.u32 %v112, 7
    %v114 = vsub.s32 0, %v113
    %v115 = vrot.slane %v110, %v114
    %v123 = vunpack.c.l.b16 %v72
    %v124 = vunpack.c.h.b16 %v72
    %v125 = vunpack.c.l.b16 %v73
    %v126 = vunpack.c.h.b16 %v73
    %v127 = vunpack.c.l.b16 %v74
    %v128 = vunpack.c.h.b16 %v74
    %v129 = vunpack.c.l.b16 %v75
    %v130 = vunpack.c.h.b16 %v75
    %v131 = vunpack.c.l.b16 %v76
    %v132 = vunpack.c.h.b16 %v76
    %v133 = vunpack.c.l.b16 %v77
    %v134 = vunpack.c.h.b16 %v77
    %v135 = vpack.c.b16 %v125, %v123
    %v136 = vpack.c.b16 %v126, %v124
    %v137 = vpack.c.b16 %v129, %v127
    %v138 = vpack.c.b16 %v130, %v128
    %v139 = vpack.c.b16 %v133, %v131
    %v140 = vpack.c.b16 %v134, %v132
    %v179 = vunpack.c.l.b16 %v78
    %v180 = vunpack.c.l.b16 %v79
    %v181 = vunpack.c.l.b16 %v80
    %v182 = vunpack.c.l.b16 %v81
    %v183 = vunpack.c.l.b16 %v82
    %v184 = vunpack.c.l.b16 %v83
    %v185 = vunpack.c.l.b16 %v84
    %v186 = vunpack.c.l.b16 %v85
    %v187 = vunpack.c.l.b16 %v86
    %v188 = vunpack.c.l.b16 %v87
    %v189 = vunpack.c.l.b16 %v88
    %v190 = vunpack.c.l.b16 %v89
    %v191 = vunpack.c.l.b16 %v90
    %v192 = vunpack.c.l.b16 %v91
    %v193 = vunpack.c.l.b16 %v92
    %v194 = vunpack.c.l.b16 %v93
    %v195 = vunpack.c.l.b16 %v94
    %v196 = vunpack.c.l.b16 %v95
    %v197 = vunpack.c.l.b16 %v96
    %v198 = vunpack.c.l.b16 %v97
    %v199 = vunpack.c.l.b16 %v98
    %v200 = vunpack.c.l.b16 %v99
    %v201 = vunpack.c.l.b16 %v100
    %v202 = vunpack.c.l.b16 %v101
    %v203 = vunpack.c.l.b16 %v102
    %v204 = vunpack.c.l.b16 %v103
    %v205 = vunpack.c.l.b16 %v104
    %v206 = vunpack.c.l.b16 %v105
    %v207 = vunpack.c.l.b16 %v106
    %v208 = vunpack.c.l.b16 %v107
    %v209 = vunpack.c.l.b16 %v108
    %v210 = vunpack.c.l.b16 %v109
    %v211 = vpack.c.b16 %v180, %v179
    %v212 = vpack.c.b16 %v182, %v181
    %v213 = vpack.c.b16 %v184, %v183
    %v214 = vpack.c.b16 %v186, %v185
    %v215 = vpack.c.b16 %v188, %v187
    %v216 = vpack.c.b16 %v190, %v189
    %v217 = vpack.c.b16 %v192, %v191
    %v218 = vpack.c.b16 %v194, %v193
    %v219 = vpack.c.b16 %v196, %v195
    %v220 = vpack.c.b16 %v198, %v197
    %v221 = vpack.c.b16 %v200, %v199
    %v222 = vpack.c.b16 %v202, %v201
    %v223 = vpack.c.b16 %v204, %v203
    %v224 = vpack.c.b16 %v206, %v205
    %v225 = vpack.c.b16 %v208, %v207
    %v226 = vpack.c.b16 %v210, %v209
    %243 = vmatprep.subr.bf16.mxu0 0
    %244 = vmatpush1.bf16.msra.mxu0 %v211
    %245 = vmatprep.subr.bf16.mxu0 0
    %246 = vmatpush1.bf16.msra.mxu0 %v212
    %247 = vmatprep.subr.bf16.mxu0 0
    %248 = vmatpush1.bf16.msra.mxu0 %v213
    %249 = vmatprep.subr.bf16.mxu0 0
    %250 = vmatpush1.bf16.msra.mxu0 %v214
    %251 = vmatprep.subr.bf16.mxu0 0
    %252 = vmatpush1.bf16.msra.mxu0 %v215
    %253 = vmatprep.subr.bf16.mxu0 0
    %254 = vmatpush1.bf16.msra.mxu0 %v216
    %255 = vmatprep.subr.bf16.mxu0 0
    %256 = vmatpush1.bf16.msra.mxu0 %v217
    %257 = vmatprep.subr.bf16.mxu0 0
    %258 = vmatpush1.bf16.msra.mxu0 %v218
    %259 = vmatprep.subr.bf16.mxu0 0
    %260 = vmatpush1.bf16.msra.mxu0 %v219
    %261 = vmatprep.subr.bf16.mxu0 0
    %262 = vmatpush1.bf16.msra.mxu0 %v220
    %263 = vmatprep.subr.bf16.mxu0 0
    %264 = vmatpush1.bf16.msra.mxu0 %v221
    %265 = vmatprep.subr.bf16.mxu0 0
    %266 = vmatpush1.bf16.msra.mxu0 %v222
    %267 = vmatprep.subr.bf16.mxu0 0
    %268 = vmatpush1.bf16.msra.mxu0 %v223
    %269 = vmatprep.subr.bf16.mxu0 0
    %270 = vmatpush1.bf16.msra.mxu0 %v224
    %271 = vmatprep.subr.bf16.mxu0 0
    %272 = vmatpush1.bf16.msra.mxu0 %v225
    %273 = vmatprep.subr.bf16.mxu0 0
    %274 = vmatpush1.bf16.msra.mxu0 %v226
    %275 = vmatprep.mubr.bf16.mxu0 %v136
    %276 = vmatmul.mubr.bf16.gmra.mrb[0].mxu0 %v135
    %v277 = vpop.f32.mrb[0].mxu0
    %v278 = vadd.f32 %v115, %v277
    %v279 = vpop.f32.mrb[0].mxu0
    %v280 = vpop.f32.mrb[0].mxu0
    %v281 = vadd.f32 %v115, %v280
    %v282 = vpop.f32.mrb[0].mxu0
    %283 = vmatprep.mubr.bf16.mxu0 %v138
    %284 = vmatmul.mubr.bf16.gmra.mrb[0].mxu0 %v137
    %v285 = vpop.f32.mrb[0].mxu0
    %v286 = vadd.f32 %v115, %v285
    %v287 = vpop.f32.mrb[0].mxu0
    %v288 = vpop.f32.mrb[0].mxu0
    %v289 = vadd.f32 %v115, %v288
    %v290 = vpop.f32.mrb[0].mxu0
    %291 = vmatprep.mubr.bf16.mxu0 %v140
    %292 = vmatmul.mubr.bf16.gmra.mrb[0].mxu0 %v139
    %v293 = vpop.f32.mrb[0].mxu0
    %v294 = vadd.f32 %v115, %v293
    %v295 = vpop.f32.mrb[0].mxu0
    %v296 = vpop.f32.mrb[0].mxu0
    %v297 = vadd.f32 %v115, %v296
    %v298 = vpop.f32.mrb[0].mxu0
    %299 = vdwg.mxu0
    %v300 = vld [vmem:[#allocation8] sm:$0xff]
    %v301 = vld [vmem:[#allocation8 + $0x8] sm:$0xff]
    %v302 = vld [vmem:[#allocation8 + $0x10] sm:$0xff]
    %v303 = vld [vmem:[#allocation8 + $0x18] sm:$0xff]
    %v304 = vld [vmem:[#allocation8 + $0x20] sm:$0xff]
    %v305 = vld [vmem:[#allocation8 + $0x28] sm:$0xff]
    %v306 = vadd.f32 %v278, %v300
    %v307 = vadd.f32 %v281, %v301
    %v308 = vadd.f32 %v286, %v302
    %v309 = vadd.f32 %v289, %v303
    %v310 = vadd.f32 %v294, %v304
    %v311 = vadd.f32 %v297, %v305
    %312 = vst [vmem:[#allocation10] sm:$0xff] %v306
    %313 = vst [vmem:[#allocation10 + $0x8] sm:$0xff] %v307
    %314 = vst [vmem:[#allocation10 + $0x10] sm:$0xff] %v308
    %315 = vst [vmem:[#allocation10 + $0x18] sm:$0xff] %v309
    %316 = vst [vmem:[#allocation10 + $0x20] sm:$0xff] %v310
    %317 = vst [vmem:[#allocation10 + $0x28] sm:$0xff] %v311
    // Predicated region
    $region34: #{_forward_jit.14} parent=1 // pred_check
      _
    $region35: #{_forward_jit.14} parent=1 // pred_check_branch
      %319 = sbr.rel (0) target = $region37
    $region36: #{_forward_jit.14} parent=1 // pred_region
      %s321 = ssub.s32 768, 768
      %322 = vsyncadd [#allocation4], %s321
      %s323 = sshll.u32 [#allocation10], 4
      %s324 = int_to_ptr.vmem [resolvable:$true] %s323
      %329 = dma.vmem_to_hbm [thread:$0]  %s324, 768, %s4, [#allocation4], 128, 128, 8
    $region37: #{_forward_jit.14} parent=1 // pred_fallthru
      _
    // Predicated region
    $region38: #{_forward_jit.14} parent=1 // pred_check
      _
    $region39: #{_forward_jit.14} parent=1 // pred_check_branch
      %331 = sbr.rel (0) target = $region41
    $region40: #{_forward_jit.14} parent=1 // pred_region
      %332 = dma.done [#allocation4], 768
    $region41: #{_forward_jit.14} parent=1 // pred_fallthru
      _
    %333 = vsyncpa [#allocation3], 1
    %334 = vsyncpa [#allocation6], 1
    %335 = vsyncpa [#allocation9], 1
    %336 = vsyncpa [#allocation4], 1

</llo_original>
